<compile_context>
chip_gen: v6e
topology: v6e:2x2x1
jax: 0.10.0
libtpu: 0.0.40
codegen_flags: <defaults>
</compile_context>

<pallas_src>
import functools

import jax
import jax.numpy as jnp
from jax.experimental import pallas as pl
from jax.experimental.pallas import tpu as pltpu

# ---- constants from the original `constant` module (synthetic, deterministic) ----
NUM_FOV_PREDICTION = 4                          # implied by the hard-coded expand(..., 4, ...)
PRED_TIME_WINDOW = [1.0, 2.0, 3.0, 4.0]         # length == NUM_FOV_PREDICTION
FOV_FINAL_EMBED = 784 * 2 + 128 + 1             # 1697
BN_EPS = 1e-5


# --------------------------- Pallas kernel ---------------------------

def _conv1x1_bn_relu_kernel(x_ref, w_ref, shift_ref, o_ref):
    # x_ref:     (ns, C_in, HW)  compute dtype (bf16) -- streamed activations
    # w_ref:     (C_out, C_in)   compute dtype, BN scale pre-folded -- resident
    # shift_ref: (C_out, 1)      f32 folded bias + BN shift -- resident
    # o_ref:     (ns, C_out, HW) f32
    w = w_ref[...]
    shift = shift_ref[...]
    for s in range(x_ref.shape[0]):            # small static unroll over samples
        y = jnp.dot(w, x_ref[s], preferred_element_type=jnp.float32)   # (C_out, HW)
        o_ref[s] = jnp.maximum(y + shift, 0.0).astype(o_ref.dtype)


def _choose_block_samples(n, cap=8):
    """Largest divisor of n <= cap, preferring an even number of grid steps
    (balanced split across the two v7x TensorCores under 'parallel')."""
    divs = [d for d in range(1, min(n, cap) + 1) if n % d == 0]
    even_steps = [d for d in divs if (n // d) % 2 == 0]
    return max(even_steps) if even_steps else max(divs)


def conv1x1_bn_relu(x, w_folded, shift, *, compute_dtype=jnp.bfloat16):
    """relu(W @ x + shift) per sample, NCHW-native.

    x: (N, C_in, HW), w_folded: (C_out, C_in) with BN scale folded in,
    shift: (C_out,).  Returns (N, C_out, HW) float32.
    """
    N, C_in, HW = x.shape
    C_out = w_folded.shape[0]
    ns = _choose_block_samples(N)
    assert N % ns == 0
    return pl.pallas_call(
        _conv1x1_bn_relu_kernel,
        out_shape=jax.ShapeDtypeStruct((N, C_out, HW), jnp.float32),
        grid_spec=pltpu.PrefetchScalarGridSpec(
            num_scalar_prefetch=0,
            grid=(N // ns,),
            in_specs=[
                pl.BlockSpec((ns, C_in, HW), lambda i: (i, 0, 0)),   # streamed x
                pl.BlockSpec((C_out, C_in), lambda i: (0, 0)),       # resident weight
                pl.BlockSpec((C_out, 1), lambda i: (0, 0)),          # resident shift
            ],
            out_specs=pl.BlockSpec((ns, C_out, HW), lambda i: (i, 0, 0)),
        ),
        compiler_params=pltpu.CompilerParams(dimension_semantics=("parallel",)),
    )(x.astype(compute_dtype),
      w_folded.astype(compute_dtype),
      shift.reshape(C_out, 1).astype(jnp.float32))


def _conv1x1_bn_relu_ref(x, w_folded, shift, *, compute_dtype=jnp.bfloat16):
    """Pure-JAX reference of the fused kernel (same dtype policy)."""
    y = jnp.einsum("nkp,ok->nop",
                   x.astype(compute_dtype), w_folded.astype(compute_dtype),
                   preferred_element_type=jnp.float32)
    return jnp.maximum(y + shift[None, :, None].astype(jnp.float32), 0.0)


# --------------------------- parameters ---------------------------

def init_params(key):
    keys = iter(jax.random.split(key, 18))

    def n(shape, s=0.05):
        return s * jax.random.normal(next(keys), shape, jnp.float32)

    p = {}
    # motion_embed = nn.Linear(90, 128)   (PyTorch weight is (out, in))
    p["motion_w"] = n((128, 90))
    p["motion_b"] = n((128,))
    # motion_norm = nn.BatchNorm1d(128)
    p["motion_gamma"] = 1.0 + n((128,), 0.1)
    p["motion_beta"] = n((128,), 0.1)
    p["motion_mean"] = n((128,), 0.05)
    p["motion_var"] = 1.0 + jnp.abs(n((128,), 0.1))
    # fov_embed = nn.Conv2d(528, 4, 1)    (weight (4, 528, 1, 1) -> (4, 528))
    p["fov_w"] = n((4, 528), 0.02)
    p["fov_b"] = n((4,), 0.02)
    p["fov_gamma"] = 1.0 + n((4,), 0.1)
    p["fov_beta"] = n((4,), 0.1)
    p["fov_mean"] = n((4,), 0.05)
    p["fov_var"] = 1.0 + jnp.abs(n((4,), 0.1))
    # video_embed = nn.Conv2d(528, 4, 1)
    p["video_w"] = n((4, 528), 0.02)
    p["video_b"] = n((4,), 0.02)
    p["video_gamma"] = 1.0 + n((4,), 0.1)
    p["video_beta"] = n((4,), 0.1)
    p["video_mean"] = n((4,), 0.05)
    p["video_var"] = 1.0 + jnp.abs(n((4,), 0.1))
    return p


def _fold_bn(bias, gamma, beta, mean, var):
    # BN(z + b) = (z + b - mean)/sqrt(var+eps)*gamma + beta = z*scale + shift
    scale = gamma / jnp.sqrt(var + BN_EPS)
    shift = (bias - mean) * scale + beta
    return scale, shift


def prepare_params(params):
    """Hoisted out of the forward pass: fold BN scale into the weights, fold
    bias+BN shift into a single shift vector, and pre-transpose the Linear."""
    prep = {}
    s, sh = _fold_bn(params["fov_b"], params["fov_gamma"], params["fov_beta"],
                     params["fov_mean"], params["fov_var"])
    prep["fov_w"] = params["fov_w"] * s[:, None]          # (4, 528)
    prep["fov_shift"] = sh                                # (4,)
    s, sh = _fold_bn(params["video_b"], params["video_gamma"], params["video_beta"],
                     params["video_mean"], params["video_var"])
    prep["video_w"] = params["video_w"] * s[:, None]      # (4, 528)
    prep["video_shift"] = sh                              # (4,)
    s, sh = _fold_bn(params["motion_b"], params["motion_gamma"], params["motion_beta"],
                     params["motion_mean"], params["motion_var"])
    prep["motion_w_t"] = params["motion_w"].T * s[None, :]  # (90, 128)
    prep["motion_shift"] = sh                                # (128,)
    return prep


# --------------------------- forward ---------------------------

def naive_fov_prediction_forward(prep, fov, motion, video, conv_fn=conv1x1_bn_relu):
    # fov:    (B, S, 528, 14, 14)   float32  (NCHW per (B, S))
    # motion: (B, S, 1, 90)
    # video:  (B, S, P, 528, 14, 14), P == NUM_FOV_PREDICTION
    B, S = fov.shape[0], fov.shape[1]
    P = NUM_FOV_PREDICTION
    n_bs = B * S
    tot = n_bs * P
    C_in = fov.shape[2]
    HW = fov.shape[-2] * fov.shape[-1]          # 196
    feat = 4 * HW                               # 784

    # ---------------- fov branch: run once per (b, s), replicate across P ----------------
    f = fov.reshape(n_bs, C_in, HW)                                # free NCHW view
    f_out = conv_fn(f, prep["fov_w"], prep["fov_shift"])           # (n_bs, 4, HW) f32
    f_out = f_out.reshape(n_bs, feat)                              # free view, PyTorch order
    f_out = jnp.broadcast_to(f_out[:, None, :], (n_bs, P, feat)).reshape(tot, feat)

    # ---------------- motion branch: tiny Linear(90,128), plain XLA ----------------
    m = motion.reshape(n_bs, 90)
    m_out = jnp.maximum(m @ prep["motion_w_t"] + prep["motion_shift"][None, :], 0.0)
    m_out = jnp.broadcast_to(m_out[:, None, :], (n_bs, P, 128)).reshape(tot, 128)

    # ---------------- video branch (already has the P axis) ----------------
    v = video.reshape(tot, C_in, HW)                               # free view
    v_out = conv_fn(v, prep["video_w"], prep["video_shift"]).reshape(tot, feat)

    # ---------------- time window + concat ----------------
    tw = jnp.asarray(PRED_TIME_WINDOW, jnp.float32)[None, :]       # (1, P)
    tw = jnp.broadcast_to(tw, (n_bs, P)).reshape(tot, 1)

    return jnp.concatenate([tw, f_out, m_out, v_out], axis=1)      # (tot, 1697)


# --------------------------- main ---------------------------

if __name__ == "__main__":
    key = jax.random.PRNGKey(0)
    kp, kf, km, kv = jax.random.split(key, 4)
    params = init_params(kp)
    prep = prepare_params(params)

    B, S, P = 2, 2, NUM_FOV_PREDICTION
    fov = jax.random.normal(kf, (B, S, 528, 14, 14), jnp.float32)
    motion = jax.random.normal(km, (B, S, 1, 90), jnp.float32)
    video = jax.random.normal(kv, (B, S, P, 528, 14, 14), jnp.float32)

    fwd = jax.jit(naive_fov_prediction_forward)
    out = jax.block_until_ready(fwd(prep, fov, motion, video))

    assert out.shape == (B * S * P, FOV_FINAL_EMBED), out.shape
    assert out.dtype == jnp.float32

    # 1) numerics-matched pure-JAX reference (same bf16 streaming, f32 accum)
    ref = naive_fov_prediction_forward(prep, fov, motion, video,
                                       conv_fn=_conv1x1_bn_relu_ref)
    ref = jax.block_until_ready(ref)
    err = float(jnp.max(jnp.abs(out - ref)))
    assert jnp.allclose(out, ref, rtol=1e-3, atol=1e-3), err

    # 2) full-f32 reference (eval-mode PyTorch semantics); looser tolerance
    #    accounts only for the intentional bf16 activation/weight streaming.
    ref32 = naive_fov_prediction_forward(
        prep, fov, motion, video,
        conv_fn=functools.partial(_conv1x1_bn_relu_ref, compute_dtype=jnp.float32))
    ref32 = jax.block_until_ready(ref32)
    err32 = float(jnp.max(jnp.abs(out - ref32)))
    assert jnp.allclose(out, ref32, rtol=5e-2, atol=5e-2), err32

    print("KERNEL_OK")
</pallas_src>

<mosaic_0001>
module attributes {stable_mosaic.version = 11 : i64} {
  func.func @_conv1x1_bn_relu_kernel(%arg0: i32, %arg1: memref<8x528x196xbf16, #tpu.memory_space<vmem>>, %arg2: memref<4x528xbf16, #tpu.memory_space<vmem>>, %arg3: memref<4x1xf32, #tpu.memory_space<vmem>>, %arg4: memref<8x4x196xf32, #tpu.memory_space<vmem>>) attributes {dimension_semantics = [#tpu.dimension_semantics<parallel>], iteration_bounds = array<i64: 2>, scalar_prefetch = 0 : i64, scratch_operands = 0 : i64, tpu.core_type = #tpu.core_type<tc>, window_params = [{transform_indices = @transform_0, window_bounds = array<i64: 8, 528, 196>}, {pipeline_mode = #tpu.pipeline_mode<synchronous>, transform_indices = @transform_1, window_bounds = array<i64: 4, 528>}, {pipeline_mode = #tpu.pipeline_mode<synchronous>, transform_indices = @transform_2, window_bounds = array<i64: 4, 1>}, {transform_indices = @transform_3, window_bounds = array<i64: 8, 4, 196>}]} {
    %c0 = arith.constant 0 : index
    %c0_0 = arith.constant 0 : index
    %0 = vector.load %arg2[%c0, %c0_0] : memref<4x528xbf16, #tpu.memory_space<vmem>>, vector<4x528xbf16>
    %c0_1 = arith.constant 0 : index
    %c0_2 = arith.constant 0 : index
    %1 = vector.load %arg3[%c0_1, %c0_2] : memref<4x1xf32, #tpu.memory_space<vmem>>, vector<4x1xf32>
    %c0_3 = arith.constant 0 : index
    %c0_4 = arith.constant 0 : index
    %c0_5 = arith.constant 0 : index
    %2 = vector.load %arg1[%c0_3, %c0_4, %c0_5] : memref<8x528x196xbf16, #tpu.memory_space<vmem>>, vector<1x528x196xbf16>
    %3 = vector.shape_cast %2 : vector<1x528x196xbf16> to vector<528x196xbf16>
    %cst = arith.constant dense<0.000000e+00> : vector<4x196xf32>
    %4 = tpu.matmul %0, %3, %cst {dimension_numbers = #tpu.dot_dimension_numbers<[1], [0], [0], [1], [0, 0, 1, 1], [], []>} : vector<4x528xbf16>, vector<528x196xbf16>, vector<4x196xf32> -> vector<4x196xf32>
    %5 = vector.broadcast %1 : vector<4x1xf32> to vector<4x196xf32>
    %6 = arith.addf %4, %5 : vector<4x196xf32>
    %cst_6 = arith.constant 0.000000e+00 : f32
    %7 = vector.broadcast %cst_6 : f32 to vector<4x196xf32>
    %8 = arith.maximumf %6, %7 : vector<4x196xf32>
    %c0_7 = arith.constant 0 : index
    %c0_8 = arith.constant 0 : index
    %c0_9 = arith.constant 0 : index
    %9 = vector.load %arg4[%c0_7, %c0_8, %c0_9] : memref<8x4x196xf32, #tpu.memory_space<vmem>>, vector<1x4x196xf32>
    %10 = vector.shape_cast %9 : vector<1x4x196xf32> to vector<4x196xf32>
    %11 = vector.shape_cast %8 : vector<4x196xf32> to vector<1x4x196xf32>
    tpu.vector_store %arg4[%c0_7, %c0_8, %c0_9], %11 {strides = array<i32>} : memref<8x4x196xf32, #tpu.memory_space<vmem>>, vector<1x4x196xf32>,
    %c1 = arith.constant 1 : index
    %c0_10 = arith.constant 0 : index
    %c0_11 = arith.constant 0 : index
    %12 = vector.load %arg1[%c1, %c0_10, %c0_11] : memref<8x528x196xbf16, #tpu.memory_space<vmem>>, vector<1x528x196xbf16>
    %13 = vector.shape_cast %12 : vector<1x528x196xbf16> to vector<528x196xbf16>
    %cst_12 = arith.constant dense<0.000000e+00> : vector<4x196xf32>
    %14 = tpu.matmul %0, %13, %cst_12 {dimension_numbers = #tpu.dot_dimension_numbers<[1], [0], [0], [1], [0, 0, 1, 1], [], []>} : vector<4x528xbf16>, vector<528x196xbf16>, vector<4x196xf32> -> vector<4x196xf32>
    %15 = vector.broadcast %1 : vector<4x1xf32> to vector<4x196xf32>
    %16 = arith.addf %14, %15 : vector<4x196xf32>
    %cst_13 = arith.constant 0.000000e+00 : f32
    %17 = vector.broadcast %cst_13 : f32 to vector<4x196xf32>
    %18 = arith.maximumf %16, %17 : vector<4x196xf32>
    %c1_14 = arith.constant 1 : index
    %c0_15 = arith.constant 0 : index
    %c0_16 = arith.constant 0 : index
    %19 = vector.load %arg4[%c1_14, %c0_15, %c0_16] : memref<8x4x196xf32, #tpu.memory_space<vmem>>, vector<1x4x196xf32>
    %20 = vector.shape_cast %19 : vector<1x4x196xf32> to vector<4x196xf32>
    %21 = vector.shape_cast %18 : vector<4x196xf32> to vector<1x4x196xf32>
    tpu.vector_store %arg4[%c1_14, %c0_15, %c0_16], %21 {strides = array<i32>} : memref<8x4x196xf32, #tpu.memory_space<vmem>>, vector<1x4x196xf32>,
    %c2 = arith.constant 2 : index
    %c0_17 = arith.constant 0 : index
    %c0_18 = arith.constant 0 : index
    %22 = vector.load %arg1[%c2, %c0_17, %c0_18] : memref<8x528x196xbf16, #tpu.memory_space<vmem>>, vector<1x528x196xbf16>
    %23 = vector.shape_cast %22 : vector<1x528x196xbf16> to vector<528x196xbf16>
    %cst_19 = arith.constant dense<0.000000e+00> : vector<4x196xf32>
    %24 = tpu.matmul %0, %23, %cst_19 {dimension_numbers = #tpu.dot_dimension_numbers<[1], [0], [0], [1], [0, 0, 1, 1], [], []>} : vector<4x528xbf16>, vector<528x196xbf16>, vector<4x196xf32> -> vector<4x196xf32>
    %25 = vector.broadcast %1 : vector<4x1xf32> to vector<4x196xf32>
    %26 = arith.addf %24, %25 : vector<4x196xf32>
    %cst_20 = arith.constant 0.000000e+00 : f32
    %27 = vector.broadcast %cst_20 : f32 to vector<4x196xf32>
    %28 = arith.maximumf %26, %27 : vector<4x196xf32>
    %c2_21 = arith.constant 2 : index
    %c0_22 = arith.constant 0 : index
    %c0_23 = arith.constant 0 : index
    %29 = vector.load %arg4[%c2_21, %c0_22, %c0_23] : memref<8x4x196xf32, #tpu.memory_space<vmem>>, vector<1x4x196xf32>
    %30 = vector.shape_cast %29 : vector<1x4x196xf32> to vector<4x196xf32>
    %31 = vector.shape_cast %28 : vector<4x196xf32> to vector<1x4x196xf32>
    tpu.vector_store %arg4[%c2_21, %c0_22, %c0_23], %31 {strides = array<i32>} : memref<8x4x196xf32, #tpu.memory_space<vmem>>, vector<1x4x196xf32>,
    %c3 = arith.constant 3 : index
    %c0_24 = arith.constant 0 : index
    %c0_25 = arith.constant 0 : index
    %32 = vector.load %arg1[%c3, %c0_24, %c0_25] : memref<8x528x196xbf16, #tpu.memory_space<vmem>>, vector<1x528x196xbf16>
    %33 = vector.shape_cast %32 : vector<1x528x196xbf16> to vector<528x196xbf16>
    %cst_26 = arith.constant dense<0.000000e+00> : vector<4x196xf32>
    %34 = tpu.matmul %0, %33, %cst_26 {dimension_numbers = #tpu.dot_dimension_numbers<[1], [0], [0], [1], [0, 0, 1, 1], [], []>} : vector<4x528xbf16>, vector<528x196xbf16>, vector<4x196xf32> -> vector<4x196xf32>
    %35 = vector.broadcast %1 : vector<4x1xf32> to vector<4x196xf32>
    %36 = arith.addf %34, %35 : vector<4x196xf32>
    %cst_27 = arith.constant 0.000000e+00 : f32
    %37 = vector.broadcast %cst_27 : f32 to vector<4x196xf32>
    %38 = arith.maximumf %36, %37 : vector<4x196xf32>
    %c3_28 = arith.constant 3 : index
    %c0_29 = arith.constant 0 : index
    %c0_30 = arith.constant 0 : index
    %39 = vector.load %arg4[%c3_28, %c0_29, %c0_30] : memref<8x4x196xf32, #tpu.memory_space<vmem>>, vector<1x4x196xf32>
    %40 = vector.shape_cast %39 : vector<1x4x196xf32> to vector<4x196xf32>
    %41 = vector.shape_cast %38 : vector<4x196xf32> to vector<1x4x196xf32>
    tpu.vector_store %arg4[%c3_28, %c0_29, %c0_30], %41 {strides = array<i32>} : memref<8x4x196xf32, #tpu.memory_space<vmem>>, vector<1x4x196xf32>,
    %c4 = arith.constant 4 : index
    %c0_31 = arith.constant 0 : index
    %c0_32 = arith.constant 0 : index
    %42 = vector.load %arg1[%c4, %c0_31, %c0_32] : memref<8x528x196xbf16, #tpu.memory_space<vmem>>, vector<1x528x196xbf16>
    %43 = vector.shape_cast %42 : vector<1x528x196xbf16> to vector<528x196xbf16>
    %cst_33 = arith.constant dense<0.000000e+00> : vector<4x196xf32>
    %44 = tpu.matmul %0, %43, %cst_33 {dimension_numbers = #tpu.dot_dimension_numbers<[1], [0], [0], [1], [0, 0, 1, 1], [], []>} : vector<4x528xbf16>, vector<528x196xbf16>, vector<4x196xf32> -> vector<4x196xf32>
    %45 = vector.broadcast %1 : vector<4x1xf32> to vector<4x196xf32>
    %46 = arith.addf %44, %45 : vector<4x196xf32>
    %cst_34 = arith.constant 0.000000e+00 : f32
    %47 = vector.broadcast %cst_34 : f32 to vector<4x196xf32>
    %48 = arith.maximumf %46, %47 : vector<4x196xf32>
    %c4_35 = arith.constant 4 : index
    %c0_36 = arith.constant 0 : index
    %c0_37 = arith.constant 0 : index
    %49 = vector.load %arg4[%c4_35, %c0_36, %c0_37] : memref<8x4x196xf32, #tpu.memory_space<vmem>>, vector<1x4x196xf32>
    %50 = vector.shape_cast %49 : vector<1x4x196xf32> to vector<4x196xf32>
    %51 = vector.shape_cast %48 : vector<4x196xf32> to vector<1x4x196xf32>
    tpu.vector_store %arg4[%c4_35, %c0_36, %c0_37], %51 {strides = array<i32>} : memref<8x4x196xf32, #tpu.memory_space<vmem>>, vector<1x4x196xf32>,
    %c5 = arith.constant 5 : index
    %c0_38 = arith.constant 0 : index
    %c0_39 = arith.constant 0 : index
    %52 = vector.load %arg1[%c5, %c0_38, %c0_39] : memref<8x528x196xbf16, #tpu.memory_space<vmem>>, vector<1x528x196xbf16>
    %53 = vector.shape_cast %52 : vector<1x528x196xbf16> to vector<528x196xbf16>
    %cst_40 = arith.constant dense<0.000000e+00> : vector<4x196xf32>
    %54 = tpu.matmul %0, %53, %cst_40 {dimension_numbers = #tpu.dot_dimension_numbers<[1], [0], [0], [1], [0, 0, 1, 1], [], []>} : vector<4x528xbf16>, vector<528x196xbf16>, vector<4x196xf32> -> vector<4x196xf32>
    %55 = vector.broadcast %1 : vector<4x1xf32> to vector<4x196xf32>
    %56 = arith.addf %54, %55 : vector<4x196xf32>
    %cst_41 = arith.constant 0.000000e+00 : f32
    %57 = vector.broadcast %cst_41 : f32 to vector<4x196xf32>
    %58 = arith.maximumf %56, %57 : vector<4x196xf32>
    %c5_42 = arith.constant 5 : index
    %c0_43 = arith.constant 0 : index
    %c0_44 = arith.constant 0 : index
    %59 = vector.load %arg4[%c5_42, %c0_43, %c0_44] : memref<8x4x196xf32, #tpu.memory_space<vmem>>, vector<1x4x196xf32>
    %60 = vector.shape_cast %59 : vector<1x4x196xf32> to vector<4x196xf32>
    %61 = vector.shape_cast %58 : vector<4x196xf32> to vector<1x4x196xf32>
    tpu.vector_store %arg4[%c5_42, %c0_43, %c0_44], %61 {strides = array<i32>} : memref<8x4x196xf32, #tpu.memory_space<vmem>>, vector<1x4x196xf32>,
    %c6 = arith.constant 6 : index
    %c0_45 = arith.constant 0 : index
    %c0_46 = arith.constant 0 : index
    %62 = vector.load %arg1[%c6, %c0_45, %c0_46] : memref<8x528x196xbf16, #tpu.memory_space<vmem>>, vector<1x528x196xbf16>
    %63 = vector.shape_cast %62 : vector<1x528x196xbf16> to vector<528x196xbf16>
    %cst_47 = arith.constant dense<0.000000e+00> : vector<4x196xf32>
    %64 = tpu.matmul %0, %63, %cst_47 {dimension_numbers = #tpu.dot_dimension_numbers<[1], [0], [0], [1], [0, 0, 1, 1], [], []>} : vector<4x528xbf16>, vector<528x196xbf16>, vector<4x196xf32> -> vector<4x196xf32>
    %65 = vector.broadcast %1 : vector<4x1xf32> to vector<4x196xf32>
    %66 = arith.addf %64, %65 : vector<4x196xf32>
    %cst_48 = arith.constant 0.000000e+00 : f32
    %67 = vector.broadcast %cst_48 : f32 to vector<4x196xf32>
    %68 = arith.maximumf %66, %67 : vector<4x196xf32>
    %c6_49 = arith.constant 6 : index
    %c0_50 = arith.constant 0 : index
    %c0_51 = arith.constant 0 : index
    %69 = vector.load %arg4[%c6_49, %c0_50, %c0_51] : memref<8x4x196xf32, #tpu.memory_space<vmem>>, vector<1x4x196xf32>
    %70 = vector.shape_cast %69 : vector<1x4x196xf32> to vector<4x196xf32>
    %71 = vector.shape_cast %68 : vector<4x196xf32> to vector<1x4x196xf32>
    tpu.vector_store %arg4[%c6_49, %c0_50, %c0_51], %71 {strides = array<i32>} : memref<8x4x196xf32, #tpu.memory_space<vmem>>, vector<1x4x196xf32>,
    %c7 = arith.constant 7 : index
    %c0_52 = arith.constant 0 : index
    %c0_53 = arith.constant 0 : index
    %72 = vector.load %arg1[%c7, %c0_52, %c0_53] : memref<8x528x196xbf16, #tpu.memory_space<vmem>>, vector<1x528x196xbf16>
    %73 = vector.shape_cast %72 : vector<1x528x196xbf16> to vector<528x196xbf16>
    %cst_54 = arith.constant dense<0.000000e+00> : vector<4x196xf32>
    %74 = tpu.matmul %0, %73, %cst_54 {dimension_numbers = #tpu.dot_dimension_numbers<[1], [0], [0], [1], [0, 0, 1, 1], [], []>} : vector<4x528xbf16>, vector<528x196xbf16>, vector<4x196xf32> -> vector<4x196xf32>
    %75 = vector.broadcast %1 : vector<4x1xf32> to vector<4x196xf32>
    %76 = arith.addf %74, %75 : vector<4x196xf32>
    %cst_55 = arith.constant 0.000000e+00 : f32
    %77 = vector.broadcast %cst_55 : f32 to vector<4x196xf32>
    %78 = arith.maximumf %76, %77 : vector<4x196xf32>
    %c7_56 = arith.constant 7 : index
    %c0_57 = arith.constant 0 : index
    %c0_58 = arith.constant 0 : index
    %79 = vector.load %arg4[%c7_56, %c0_57, %c0_58] : memref<8x4x196xf32, #tpu.memory_space<vmem>>, vector<1x4x196xf32>
    %80 = vector.shape_cast %79 : vector<1x4x196xf32> to vector<4x196xf32>
    %81 = vector.shape_cast %78 : vector<4x196xf32> to vector<1x4x196xf32>
    tpu.vector_store %arg4[%c7_56, %c0_57, %c0_58], %81 {strides = array<i32>} : memref<8x4x196xf32, #tpu.memory_space<vmem>>, vector<1x4x196xf32>,
    return
  }
  func.func @transform_0(%arg0: i32) -> (i32, i32, i32) {
    %c0_i32 = arith.constant 0 : i32
    %c0_i32_0 = arith.constant 0 : i32
    %c0_i32_1 = arith.constant 0 : i32
    return %arg0, %c0_i32, %c0_i32_0 : i32, i32, i32
  }
  func.func @transform_1(%arg0: i32) -> (i32, i32) {
    %c0_i32 = arith.constant 0 : i32
    %c0_i32_0 = arith.constant 0 : i32
    %c0_i32_1 = arith.constant 0 : i32
    return %c0_i32, %c0_i32_0 : i32, i32
  }
  func.func @transform_2(%arg0: i32) -> (i32, i32) {
    %c0_i32 = arith.constant 0 : i32
    %c0_i32_0 = arith.constant 0 : i32
    %c0_i32_1 = arith.constant 0 : i32
    return %c0_i32, %c0_i32_0 : i32, i32
  }
  func.func @transform_3(%arg0: i32) -> (i32, i32, i32) {
    %c0_i32 = arith.constant 0 : i32
    %c0_i32_0 = arith.constant 0 : i32
    %c0_i32_1 = arith.constant 0 : i32
    return %arg0, %c0_i32, %c0_i32_0 : i32, i32, i32
  }
}

module attributes {stable_mosaic.version = 11 : i64} {
  func.func @_conv1x1_bn_relu_kernel(%arg0: i32, %arg1: memref<2x528x196xbf16, #tpu.memory_space<vmem>>, %arg2: memref<4x528xbf16, #tpu.memory_space<vmem>>, %arg3: memref<4x1xf32, #tpu.memory_space<vmem>>, %arg4: memref<2x4x196xf32, #tpu.memory_space<vmem>>) attributes {dimension_semantics = [#tpu.dimension_semantics<parallel>], iteration_bounds = array<i64: 2>, scalar_prefetch = 0 : i64, scratch_operands = 0 : i64, tpu.core_type = #tpu.core_type<tc>, window_params = [{transform_indices = @transform_0, window_bounds = array<i64: 2, 528, 196>}, {pipeline_mode = #tpu.pipeline_mode<synchronous>, transform_indices = @transform_1, window_bounds = array<i64: 4, 528>}, {pipeline_mode = #tpu.pipeline_mode<synchronous>, transform_indices = @transform_2, window_bounds = array<i64: 4, 1>}, {transform_indices = @transform_3, window_bounds = array<i64: 2, 4, 196>}]} {
    %c0 = arith.constant 0 : index
    %c0_0 = arith.constant 0 : index
    %0 = vector.load %arg2[%c0, %c0_0] : memref<4x528xbf16, #tpu.memory_space<vmem>>, vector<4x528xbf16>
    %c0_1 = arith.constant 0 : index
    %c0_2 = arith.constant 0 : index
    %1 = vector.load %arg3[%c0_1, %c0_2] : memref<4x1xf32, #tpu.memory_space<vmem>>, vector<4x1xf32>
    %c0_3 = arith.constant 0 : index
    %c0_4 = arith.constant 0 : index
    %c0_5 = arith.constant 0 : index
    %2 = vector.load %arg1[%c0_3, %c0_4, %c0_5] : memref<2x528x196xbf16, #tpu.memory_space<vmem>>, vector<1x528x196xbf16>
    %3 = vector.shape_cast %2 : vector<1x528x196xbf16> to vector<528x196xbf16>
    %cst = arith.constant dense<0.000000e+00> : vector<4x196xf32>
    %4 = tpu.matmul %0, %3, %cst {dimension_numbers = #tpu.dot_dimension_numbers<[1], [0], [0], [1], [0, 0, 1, 1], [], []>} : vector<4x528xbf16>, vector<528x196xbf16>, vector<4x196xf32> -> vector<4x196xf32>
    %5 = vector.broadcast %1 : vector<4x1xf32> to vector<4x196xf32>
    %6 = arith.addf %4, %5 : vector<4x196xf32>
    %cst_6 = arith.constant 0.000000e+00 : f32
    %7 = vector.broadcast %cst_6 : f32 to vector<4x196xf32>
    %8 = arith.maximumf %6, %7 : vector<4x196xf32>
    %c0_7 = arith.constant 0 : index
    %c0_8 = arith.constant 0 : index
    %c0_9 = arith.constant 0 : index
    %9 = vector.load %arg4[%c0_7, %c0_8, %c0_9] : memref<2x4x196xf32, #tpu.memory_space<vmem>>, vector<1x4x196xf32>
    %10 = vector.shape_cast %9 : vector<1x4x196xf32> to vector<4x196xf32>
    %11 = vector.shape_cast %8 : vector<4x196xf32> to vector<1x4x196xf32>
    tpu.vector_store %arg4[%c0_7, %c0_8, %c0_9], %11 {strides = array<i32>} : memref<2x4x196xf32, #tpu.memory_space<vmem>>, vector<1x4x196xf32>,
    %c1 = arith.constant 1 : index
    %c0_10 = arith.constant 0 : index
    %c0_11 = arith.constant 0 : index
    %12 = vector.load %arg1[%c1, %c0_10, %c0_11] : memref<2x528x196xbf16, #tpu.memory_space<vmem>>, vector<1x528x196xbf16>
    %13 = vector.shape_cast %12 : vector<1x528x196xbf16> to vector<528x196xbf16>
    %cst_12 = arith.constant dense<0.000000e+00> : vector<4x196xf32>
    %14 = tpu.matmul %0, %13, %cst_12 {dimension_numbers = #tpu.dot_dimension_numbers<[1], [0], [0], [1], [0, 0, 1, 1], [], []>} : vector<4x528xbf16>, vector<528x196xbf16>, vector<4x196xf32> -> vector<4x196xf32>
    %15 = vector.broadcast %1 : vector<4x1xf32> to vector<4x196xf32>
    %16 = arith.addf %14, %15 : vector<4x196xf32>
    %cst_13 = arith.constant 0.000000e+00 : f32
    %17 = vector.broadcast %cst_13 : f32 to vector<4x196xf32>
    %18 = arith.maximumf %16, %17 : vector<4x196xf32>
    %c1_14 = arith.constant 1 : index
    %c0_15 = arith.constant 0 : index
    %c0_16 = arith.constant 0 : index
    %19 = vector.load %arg4[%c1_14, %c0_15, %c0_16] : memref<2x4x196xf32, #tpu.memory_space<vmem>>, vector<1x4x196xf32>
    %20 = vector.shape_cast %19 : vector<1x4x196xf32> to vector<4x196xf32>
    %21 = vector.shape_cast %18 : vector<4x196xf32> to vector<1x4x196xf32>
    tpu.vector_store %arg4[%c1_14, %c0_15, %c0_16], %21 {strides = array<i32>} : memref<2x4x196xf32, #tpu.memory_space<vmem>>, vector<1x4x196xf32>,
    return
  }
  func.func @transform_0(%arg0: i32) -> (i32, i32, i32) {
    %c0_i32 = arith.constant 0 : i32
    %c0_i32_0 = arith.constant 0 : i32
    %c0_i32_1 = arith.constant 0 : i32
    return %arg0, %c0_i32, %c0_i32_0 : i32, i32, i32
  }
  func.func @transform_1(%arg0: i32) -> (i32, i32) {
    %c0_i32 = arith.constant 0 : i32
    %c0_i32_0 = arith.constant 0 : i32
    %c0_i32_1 = arith.constant 0 : i32
    return %c0_i32, %c0_i32_0 : i32, i32
  }
  func.func @transform_2(%arg0: i32) -> (i32, i32) {
    %c0_i32 = arith.constant 0 : i32
    %c0_i32_0 = arith.constant 0 : i32
    %c0_i32_1 = arith.constant 0 : i32
    return %c0_i32, %c0_i32_0 : i32, i32
  }
  func.func @transform_3(%arg0: i32) -> (i32, i32, i32) {
    %c0_i32 = arith.constant 0 : i32
    %c0_i32_0 = arith.constant 0 : i32
    %c0_i32_1 = arith.constant 0 : i32
    return %arg0, %c0_i32, %c0_i32_0 : i32, i32, i32
  }
}

</mosaic_0001>

<llo_original>
// kernel: naive_fov_prediction_forward.3
$region0: #{naive_fov_prediction_forward.3}
  #allocation0 [shape = 'u32[]', space=smem, size = 0x4, offset = 0x4, fixed_abs, tag = 'smem constant byte address 0x4 - core index']
  #allocation1 [shape = 'u32[144,128]{1,0:T(1,128)}', space=vmem, size = 0x12000, scoped, tag = 'internal scratch']
  %s0 = inlined_call_operand.vmem [shape: bf16[16,528,196], index: 0, kind: input, shape index: {}]
  %s1 = inlined_call_operand.vmem [shape: bf16[4,528], index: 1, kind: input, shape index: {}]
  %s2 = inlined_call_operand.vmem [shape: f32[4,1], index: 2, kind: input, shape index: {}]
  %s3 = inlined_call_operand.vmem [shape: f32[16,4,196], index: 3, kind: output, shape index: {}]
  %s4 = sld [smem:[#allocation0]]
  $region45: #{naive_fov_prediction_forward.3} parent=0
    _
  %s6 = ssub.s32 1, %s4
  %s7 = scalar_select 0, %s6, %s4
  loop: start=0, step=1, limit=4
  $region2: #{naive_fov_prediction_forward.3} parent=0 // loop_pre_header
    _
  $region3: #{naive_fov_prediction_forward.3} parent=0 // loop_header
    %s9 = sphi 0, %s13
    %p10 = scmp.ge.s32.totalorder %s9, 4
    %s19 = sphi 0, %s21
    %s22 = sphi 0, %s19
    %s23 = sphi 0, %s22
    %s39 = sphi 0, %s23
    %s43 = sphi 0, %s43
    %s45 = sphi 0, %s43
    %s46 = sphi 0, %s45
    %s60 = sphi 0, %s46
    %s64 = sphi 0, %s64
    %s66 = sphi 0, %s64
    %s67 = sphi 0, %s66
    %s81 = sphi 0, %s67
    %s87 = sphi 0, %s89
    %s90 = sphi 0, %s87
    %s91 = sphi 0, %s90
    %s107 = sphi 0, %s91
  $region4: #{naive_fov_prediction_forward.3} parent=0 // loop_header_branch
    %12 = sbr.rel (%p10) target = $region8
  $region5: #{naive_fov_prediction_forward.3} parent=0 // loop_body
    %s14 = ssub.s32 %s9, 1
    %s15 = ssub.s32 %s9, 2
    %s16 = sadd.s32 %s9, 1
    %s17 = ssub.s32 %s9, %s16
    %p18 = scmp.eq.s32.totalorder %s17, 0
    %s20 = sadd.s32 %s19, 1
    %s21 = scalar_select %p18, %s19, %s20
    %p24 = pneg %p18
    %p25 = scmp.eq.s32.totalorder %s9, 1
    %p26 = por %p24, %p25
    %p27 = scmp.ne.s32.totalorder %s19, %s22
    %p28 = scmp.eq.s32.totalorder %s9, 0
    %p29 = por %p27, %p28
    %p30 = scmp.ne.s32.totalorder %s19, %s22
    %p31 = scmp.eq.s32.totalorder %s14, 1
    %p32 = por %p30, %p31
    %p33 = scmp.ne.s32.totalorder %s22, %s23
    %p34 = scmp.eq.s32.totalorder %s14, 0
    %p35 = por %p33, %p34
    %p36 = scmp.ne.s32.totalorder %s22, %s23
    %p37 = scmp.eq.s32.totalorder %s15, 1
    %p38 = por %p36, %p37
    %p40 = scmp.ne.s32.totalorder %s23, %s39
    %p41 = scmp.eq.s32.totalorder %s15, 0
    %p42 = por %p40, %p41
    %s44 = sadd.s32 %s43, 1
    %p47 = scmp.eq.s32.totalorder %s9, 1
    %p48 = scmp.ne.s32.totalorder %s43, %s45
    %p49 = scmp.eq.s32.totalorder %s9, 0
    %p50 = por %p48, %p49
    %p51 = scmp.ne.s32.totalorder %s43, %s45
    %p52 = scmp.eq.s32.totalorder %s14, 1
    %p53 = por %p51, %p52
    %p54 = scmp.ne.s32.totalorder %s45, %s46
    %p55 = scmp.eq.s32.totalorder %s14, 0
    %p56 = por %p54, %p55
    %p57 = scmp.ne.s32.totalorder %s45, %s46
    %p58 = scmp.eq.s32.totalorder %s15, 1
    %p59 = por %p57, %p58
    %p61 = scmp.ne.s32.totalorder %s46, %s60
    %p62 = scmp.eq.s32.totalorder %s15, 0
    %p63 = por %p61, %p62
    %s65 = sadd.s32 %s64, 1
    %p68 = scmp.eq.s32.totalorder %s9, 1
    %p69 = scmp.ne.s32.totalorder %s64, %s66
    %p70 = scmp.eq.s32.totalorder %s9, 0
    %p71 = por %p69, %p70
    %p72 = scmp.ne.s32.totalorder %s64, %s66
    %p73 = scmp.eq.s32.totalorder %s14, 1
    %p74 = por %p72, %p73
    %p75 = scmp.ne.s32.totalorder %s66, %s67
    %p76 = scmp.eq.s32.totalorder %s14, 0
    %p77 = por %p75, %p76
    %p78 = scmp.ne.s32.totalorder %s66, %s67
    %p79 = scmp.eq.s32.totalorder %s15, 1
    %p80 = por %p78, %p79
    %p82 = scmp.ne.s32.totalorder %s67, %s81
    %p83 = scmp.eq.s32.totalorder %s15, 0
    %p84 = por %p82, %p83
    %s85 = ssub.s32 %s9, %s16
    %p86 = scmp.eq.s32.totalorder %s85, 0
    %s88 = sadd.s32 %s87, 1
    %s89 = scalar_select %p86, %s87, %s88
    %p92 = pneg %p86
    %p93 = scmp.eq.s32.totalorder %s9, 1
    %p94 = por %p92, %p93
    %p95 = scmp.ne.s32.totalorder %s87, %s90
    %p96 = scmp.eq.s32.totalorder %s9, 0
    %p97 = por %p95, %p96
    %p98 = scmp.ne.s32.totalorder %s87, %s90
    %p99 = scmp.eq.s32.totalorder %s14, 1
    %p100 = por %p98, %p99
    %p101 = scmp.ne.s32.totalorder %s90, %s91
    %p102 = scmp.eq.s32.totalorder %s14, 0
    %p103 = por %p101, %p102
    %p104 = scmp.ne.s32.totalorder %s90, %s91
    %p105 = scmp.eq.s32.totalorder %s15, 1
    %p106 = por %p104, %p105
    %p108 = scmp.ne.s32.totalorder %s91, %s107
    %p109 = scmp.eq.s32.totalorder %s15, 0
    %p110 = por %p108, %p109
    %p111 = scmp.le.s32.totalorder 1, %s9
    %p112 = scmp.lt.s32.totalorder %s9, 3
    %p113 = pnand %p111, %p112
    %p114 = pneg %p113
    // Predicated region
    $region9: #{naive_fov_prediction_forward.3} parent=5 // pred_check
      _
    $region10: #{naive_fov_prediction_forward.3} parent=5 // pred_check_branch
      %116 = sbr.rel (%p113) target = $region12
    $region11: #{naive_fov_prediction_forward.3} parent=5 // pred_region
      %s117 = ssub.s32 %s9, 1
      // Predicated region
      $region13: #{naive_fov_prediction_forward.3} parent=11 // pred_check
        %p118 = pneg %p56
      $region14: #{naive_fov_prediction_forward.3} parent=11 // pred_check_branch
        %120 = sbr.rel (%p118) target = $region16
      $region15: #{naive_fov_prediction_forward.3} parent=11 // pred_region
        _
      $region16: #{naive_fov_prediction_forward.3} parent=11 // pred_fallthru
        _
      // Predicated region
      $region17: #{naive_fov_prediction_forward.3} parent=11 // pred_check
        %p121 = pneg %p77
      $region18: #{naive_fov_prediction_forward.3} parent=11 // pred_check_branch
        %123 = sbr.rel (%p121) target = $region20
      $region19: #{naive_fov_prediction_forward.3} parent=11 // pred_region
        _
      $region20: #{naive_fov_prediction_forward.3} parent=11 // pred_fallthru
        _
    $region12: #{naive_fov_prediction_forward.3} parent=5 // pred_fallthru
      _
    %p124 = scmp.lt.s32.totalorder %s9, 2
    // Predicated region
    $region21: #{naive_fov_prediction_forward.3} parent=5 // pred_check
      %p125 = pneg %p124
    $region22: #{naive_fov_prediction_forward.3} parent=5 // pred_check_branch
      %127 = sbr.rel (%p125) target = $region24
    $region23: #{naive_fov_prediction_forward.3} parent=5 // pred_region
      // Predicated region
      $region25: #{naive_fov_prediction_forward.3} parent=23 // pred_check
        %p128 = pneg %p29
      $region26: #{naive_fov_prediction_forward.3} parent=23 // pred_check_branch
        %130 = sbr.rel (%p128) target = $region28
      $region27: #{naive_fov_prediction_forward.3} parent=23 // pred_region
        %s131 = smul.u32 8, %s9
        %p132 = scmp.lt.s32.totalorder %s131, 15
        %s133 = scalar_select %p132, %s131, 15
        %s134 = smul.addr %s133, 132
        %s135 = smul.addr %s134, 4
        %s136 = scalar_lea.vmem %s0, %s135
        %s137 = smul.u32 8, %s9
      $region28: #{naive_fov_prediction_forward.3} parent=23 // pred_fallthru
        _
    $region24: #{naive_fov_prediction_forward.3} parent=5 // pred_fallthru
      _
    %p138 = scmp.le.s32.totalorder 1, %s9
    %p139 = scmp.lt.s32.totalorder %s9, 3
    %p140 = pnand %p138, %p139
    %p141 = pneg %p140
    // Predicated region
    $region29: #{naive_fov_prediction_forward.3} parent=5 // pred_check
      _
    $region30: #{naive_fov_prediction_forward.3} parent=5 // pred_check_branch
      %143 = sbr.rel (%p140) target = $region32
    $region31: #{naive_fov_prediction_forward.3} parent=5 // pred_region
      %s144 = ssub.s32 %s9, 1
      %s145 = smul.u32 8, %s14
      %p146 = scmp.lt.s32.totalorder %s145, 15
      %s147 = scalar_select %p146, %s145, 15
      %s148 = smul.addr %s147, 132
      %s149 = smul.addr %s148, 4
      %s150 = scalar_lea.vmem %s0, %s149
      %p151 = pneg %p35
      %p152 = pneg %p32
      %p153 = pneg %p56
      %p154 = pneg %p53
      %p155 = pneg %p77
      %p156 = pneg %p74
      %p157 = pneg %p103
      %p158 = pneg %p100
      %s159 = smul.u32 8, %s14
      %p160 = scmp.lt.s32.totalorder %s159, 15
      %s161 = scalar_select %p160, %s159, 15
      %s162 = smul.addr %s161, 2
      %s163 = smul.addr %s162, 4
      %s164 = scalar_lea.vmem %s3, %s163
      %s165 = smul.u32 8, %s14
      %p166 = scmp.lt.s32.totalorder %s165, 15
      %s167 = scalar_select %p166, %s165, 15
      %s168 = smul.addr %s167, 132
      %s169 = smul.addr %s168, 4
      %s170 = scalar_lea.vmem %s0, %s169
      %s171 = smul.u32 8, %s14
      %s172 = smul.u32 8, %s14
      %p173 = scmp.lt.s32.totalorder %s172, 15
      %s174 = scalar_select %p173, %s172, 15
      %s175 = smul.addr %s174, 2
      %s176 = smul.addr %s175, 4
      %s177 = scalar_lea.vmem %s3, %s176
      %s178 = smul.u32 8, %s14
      %v180 = vld [vmem:[%s1] sm:$0xff]
      %v181 = vld [vmem:[%s1 + $0x8] sm:$0x3]
      %v182 = vld [vmem:[%s2] sm:$0xf]
      %v183 = vld [vmem:[%s170] sm:$0xff]
      %v184 = vld [vmem:[%s170 + $0x8] sm:$0xff]
      %v185 = vld [vmem:[%s170 + $0x10] sm:$0xff]
      %v186 = vld [vmem:[%s170 + $0x18] sm:$0xff]
      %v187 = vld [vmem:[%s170 + $0x20] sm:$0xff]
      %v188 = vld [vmem:[%s170 + $0x28] sm:$0xff]
      %v189 = vld [vmem:[%s170 + $0x30] sm:$0xff]
      %v190 = vld [vmem:[%s170 + $0x38] sm:$0xff]
      %v191 = vld [vmem:[%s170 + $0x40] sm:$0xff]
      %v192 = vld [vmem:[%s170 + $0x48] sm:$0xff]
      %v193 = vld [vmem:[%s170 + $0x50] sm:$0xff]
      %v194 = vld [vmem:[%s170 + $0x58] sm:$0xff]
      %v195 = vld [vmem:[%s170 + $0x60] sm:$0xff]
      %v196 = vld [vmem:[%s170 + $0x68] sm:$0xff]
      %v197 = vld [vmem:[%s170 + $0x70] sm:$0xff]
      %v198 = vld [vmem:[%s170 + $0x78] sm:$0xff]
      %v199 = vld [vmem:[%s170 + $0x80] sm:$0xff]
      %v200 = vld [vmem:[%s170 + $0x88] sm:$0xff]
      %v201 = vld [vmem:[%s170 + $0x90] sm:$0xff]
      %v202 = vld [vmem:[%s170 + $0x98] sm:$0xff]
      %v203 = vld [vmem:[%s170 + $0xa0] sm:$0xff]
      %v204 = vld [vmem:[%s170 + $0xa8] sm:$0xff]
      %v205 = vld [vmem:[%s170 + $0xb0] sm:$0xff]
      %v206 = vld [vmem:[%s170 + $0xb8] sm:$0xff]
      %v207 = vld [vmem:[%s170 + $0xc0] sm:$0xff]
      %v208 = vld [vmem:[%s170 + $0xc8] sm:$0xff]
      %v209 = vld [vmem:[%s170 + $0xd0] sm:$0xff]
      %v210 = vld [vmem:[%s170 + $0xd8] sm:$0xff]
      %v211 = vld [vmem:[%s170 + $0xe0] sm:$0xff]
      %v212 = vld [vmem:[%s170 + $0xe8] sm:$0xff]
      %v213 = vld [vmem:[%s170 + $0xf0] sm:$0xff]
      %v214 = vld [vmem:[%s170 + $0xf8] sm:$0xff]
      %v215 = vld [vmem:[%s170 + $0x100] sm:$0xff]
      %v216 = vld [vmem:[%s170 + $0x108] sm:$0xff]
      %v217 = vld [vmem:[%s170 + $0x110] sm:$0xff]
      %v218 = vld [vmem:[%s170 + $0x118] sm:$0xff]
      %v219 = vld [vmem:[%s170 + $0x120] sm:$0xff]
      %v220 = vld [vmem:[%s170 + $0x128] sm:$0xff]
      %v221 = vld [vmem:[%s170 + $0x130] sm:$0xff]
      %v222 = vld [vmem:[%s170 + $0x138] sm:$0xff]
      %v223 = vld [vmem:[%s170 + $0x140] sm:$0xff]
      %v224 = vld [vmem:[%s170 + $0x148] sm:$0xff]
      %v225 = vld [vmem:[%s170 + $0x150] sm:$0xff]
      %v226 = vld [vmem:[%s170 + $0x158] sm:$0xff]
      %v227 = vld [vmem:[%s170 + $0x160] sm:$0xff]
      %v228 = vld [vmem:[%s170 + $0x168] sm:$0xff]
      %v229 = vld [vmem:[%s170 + $0x170] sm:$0xff]
      %v230 = vld [vmem:[%s170 + $0x178] sm:$0xff]
      %v231 = vld [vmem:[%s170 + $0x180] sm:$0xff]
      %v232 = vld [vmem:[%s170 + $0x188] sm:$0xff]
      %v233 = vld [vmem:[%s170 + $0x190] sm:$0xff]
      %v234 = vld [vmem:[%s170 + $0x198] sm:$0xff]
      %v235 = vld [vmem:[%s170 + $0x1a0] sm:$0xff]
      %v236 = vld [vmem:[%s170 + $0x1a8] sm:$0xff]
      %v237 = vld [vmem:[%s170 + $0x1b0] sm:$0xff]
      %v238 = vld [vmem:[%s170 + $0x1b8] sm:$0xff]
      %v239 = vld [vmem:[%s170 + $0x1c0] sm:$0xff]
      %v240 = vld [vmem:[%s170 + $0x1c8] sm:$0xff]
      %v241 = vld [vmem:[%s170 + $0x1d0] sm:$0xff]
      %v242 = vld [vmem:[%s170 + $0x1d8] sm:$0xff]
      %v243 = vld [vmem:[%s170 + $0x1e0] sm:$0xff]
      %v244 = vld [vmem:[%s170 + $0x1e8] sm:$0xff]
      %v245 = vld [vmem:[%s170 + $0x1f0] sm:$0xff]
      %v246 = vld [vmem:[%s170 + $0x1f8] sm:$0xff]
      %v247 = vld [vmem:[%s170 + $0x200] sm:$0xff]
      %v248 = vld [vmem:[%s170 + $0x208] sm:$0xff]
      %250 = vset.pattern.permute.xlu0 0
      %251 = vperm.xlu0 %250, %v182
      %v252 = vpop.permute.xlu0 %251
      %v256 = vcombine.high %v180, %v180
      %v258 = vunpack.c.l.s4 1983009808
      %v259 = vunpack.c.0.s8 %v258
      %v260 = vlaneseq
      %v261 = vshrl.u32 %v260, 7
      %v262 = vsub.s32 %v259, %v261
      %v263 = vrot.slane %v180, %v262
      %v265 = vunpack.c.l.s4 1983009808
      %v266 = vunpack.c.0.s8 %v265
      %v267 = vlaneseq
      %v268 = vshrl.u32 %v267, 7
      %v269 = vsub.s32 %v266, %v268
      %v270 = vrot.slane %v256, %v269
      %v271 = vcombine.high %v263, %v263
      %v272 = vcombine.high %v270, %v270
      %v274 = vunpack.c.l.s4 1983009808
      %v275 = vunpack.c.0.s8 %v274
      %v276 = vlaneseq
      %v277 = vshrl.u32 %v276, 7
      %v278 = vsub.s32 %v275, %v277
      %v279 = vrot.slane %v181, %v278
      %v350 = vunpack.c.l.b16 %v183
      %v351 = vunpack.c.h.b16 %v183
      %v352 = vunpack.c.l.b16 %v184
      %v353 = vunpack.c.h.b16 %v184
      %v354 = vunpack.c.l.b16 %v185
      %v355 = vunpack.c.h.b16 %v185
      %v356 = vunpack.c.l.b16 %v186
      %v357 = vunpack.c.h.b16 %v186
      %v358 = vunpack.c.l.b16 %v187
      %v359 = vunpack.c.h.b16 %v187
      %v360 = vunpack.c.l.b16 %v188
      %v361 = vunpack.c.h.b16 %v188
      %v362 = vunpack.c.l.b16 %v189
      %v363 = vunpack.c.h.b16 %v189
      %v364 = vunpack.c.l.b16 %v190
      %v365 = vunpack.c.h.b16 %v190
      %v366 = vunpack.c.l.b16 %v191
      %v367 = vunpack.c.h.b16 %v191
      %v368 = vunpack.c.l.b16 %v192
      %v369 = vunpack.c.h.b16 %v192
      %v370 = vunpack.c.l.b16 %v193
      %v371 = vunpack.c.h.b16 %v193
      %v372 = vunpack.c.l.b16 %v194
      %v373 = vunpack.c.h.b16 %v194
      %v374 = vunpack.c.l.b16 %v195
      %v375 = vunpack.c.h.b16 %v195
      %v376 = vunpack.c.l.b16 %v196
      %v377 = vunpack.c.h.b16 %v196
      %v378 = vunpack.c.l.b16 %v197
      %v379 = vunpack.c.h.b16 %v197
      %v380 = vunpack.c.l.b16 %v198
      %v381 = vunpack.c.h.b16 %v198
      %v382 = vunpack.c.l.b16 %v199
      %v383 = vunpack.c.h.b16 %v199
      %v384 = vunpack.c.l.b16 %v200
      %v385 = vunpack.c.h.b16 %v200
      %v386 = vunpack.c.l.b16 %v201
      %v387 = vunpack.c.h.b16 %v201
      %v388 = vunpack.c.l.b16 %v202
      %v389 = vunpack.c.h.b16 %v202
      %v390 = vunpack.c.l.b16 %v203
      %v391 = vunpack.c.h.b16 %v203
      %v392 = vunpack.c.l.b16 %v204
      %v393 = vunpack.c.h.b16 %v204
      %v394 = vunpack.c.l.b16 %v205
      %v395 = vunpack.c.h.b16 %v205
      %v396 = vunpack.c.l.b16 %v206
      %v397 = vunpack.c.h.b16 %v206
      %v398 = vunpack.c.l.b16 %v207
      %v399 = vunpack.c.h.b16 %v207
      %v400 = vunpack.c.l.b16 %v208
      %v401 = vunpack.c.h.b16 %v208
      %v402 = vunpack.c.l.b16 %v209
      %v403 = vunpack.c.h.b16 %v209
      %v404 = vunpack.c.l.b16 %v210
      %v405 = vunpack.c.h.b16 %v210
      %v406 = vunpack.c.l.b16 %v211
      %v407 = vunpack.c.h.b16 %v211
      %v408 = vunpack.c.l.b16 %v212
      %v409 = vunpack.c.h.b16 %v212
      %v410 = vunpack.c.l.b16 %v213
      %v411 = vunpack.c.h.b16 %v213
      %v412 = vunpack.c.l.b16 %v214
      %v413 = vunpack.c.h.b16 %v214
      %v414 = vunpack.c.l.b16 %v215
      %v415 = vunpack.c.h.b16 %v215
      %v416 = vunpack.c.l.b16 %v216
      %v417 = vunpack.c.h.b16 %v216
      %v418 = vunpack.c.l.b16 %v217
      %v419 = vunpack.c.h.b16 %v217
      %v420 = vunpack.c.l.b16 %v218
      %v421 = vunpack.c.h.b16 %v218
      %v422 = vunpack.c.l.b16 %v219
      %v423 = vunpack.c.h.b16 %v219
      %v424 = vunpack.c.l.b16 %v220
      %v425 = vunpack.c.h.b16 %v220
      %v426 = vunpack.c.l.b16 %v221
      %v427 = vunpack.c.h.b16 %v221
      %v428 = vunpack.c.l.b16 %v222
      %v429 = vunpack.c.h.b16 %v222
      %v430 = vunpack.c.l.b16 %v223
      %v431 = vunpack.c.h.b16 %v223
      %v432 = vunpack.c.l.b16 %v224
      %v433 = vunpack.c.h.b16 %v224
      %v434 = vunpack.c.l.b16 %v225
      %v435 = vunpack.c.h.b16 %v225
      %v436 = vunpack.c.l.b16 %v226
      %v437 = vunpack.c.h.b16 %v226
      %v438 = vunpack.c.l.b16 %v227
      %v439 = vunpack.c.h.b16 %v227
      %v440 = vunpack.c.l.b16 %v228
      %v441 = vunpack.c.h.b16 %v228
      %v442 = vunpack.c.l.b16 %v229
      %v443 = vunpack.c.h.b16 %v229
      %v444 = vunpack.c.l.b16 %v230
      %v445 = vunpack.c.h.b16 %v230
      %v446 = vunpack.c.l.b16 %v231
      %v447 = vunpack.c.h.b16 %v231
      %v448 = vunpack.c.l.b16 %v232
      %v449 = vunpack.c.h.b16 %v232
      %v450 = vunpack.c.l.b16 %v233
      %v451 = vunpack.c.h.b16 %v233
      %v452 = vunpack.c.l.b16 %v234
      %v453 = vunpack.c.h.b16 %v234
      %v454 = vunpack.c.l.b16 %v235
      %v455 = vunpack.c.h.b16 %v235
      %v456 = vunpack.c.l.b16 %v236
      %v457 = vunpack.c.h.b16 %v236
      %v458 = vunpack.c.l.b16 %v237
      %v459 = vunpack.c.h.b16 %v237
      %v460 = vunpack.c.l.b16 %v238
      %v461 = vunpack.c.h.b16 %v238
      %v462 = vunpack.c.l.b16 %v239
      %v463 = vunpack.c.h.b16 %v239
      %v464 = vunpack.c.l.b16 %v240
      %v465 = vunpack.c.h.b16 %v240
      %v466 = vunpack.c.l.b16 %v241
      %v467 = vunpack.c.h.b16 %v241
      %v468 = vunpack.c.l.b16 %v242
      %v469 = vunpack.c.h.b16 %v242
      %v470 = vunpack.c.l.b16 %v243
      %v471 = vunpack.c.h.b16 %v243
      %v472 = vunpack.c.l.b16 %v244
      %v473 = vunpack.c.h.b16 %v244
      %v474 = vunpack.c.l.b16 %v245
      %v475 = vunpack.c.h.b16 %v245
      %v476 = vunpack.c.l.b16 %v246
      %v477 = vunpack.c.h.b16 %v246
      %v478 = vunpack.c.l.b16 %v247
      %v479 = vunpack.c.h.b16 %v247
      %v480 = vunpack.c.l.b16 %v248
      %v481 = vunpack.c.h.b16 %v248
      %v482 = vpack.c.b16 %v352, %v350
      %v483 = vpack.c.b16 %v353, %v351
      %v484 = vpack.c.b16 %v356, %v354
      %v485 = vpack.c.b16 %v357, %v355
      %v486 = vpack.c.b16 %v360, %v358
      %v487 = vpack.c.b16 %v361, %v359
      %v488 = vpack.c.b16 %v364, %v362
      %v489 = vpack.c.b16 %v365, %v363
      %v490 = vpack.c.b16 %v368, %v366
      %v491 = vpack.c.b16 %v369, %v367
      %v492 = vpack.c.b16 %v372, %v370
      %v493 = vpack.c.b16 %v373, %v371
      %v494 = vpack.c.b16 %v376, %v374
      %v495 = vpack.c.b16 %v377, %v375
      %v496 = vpack.c.b16 %v380, %v378
      %v497 = vpack.c.b16 %v381, %v379
      %v498 = vpack.c.b16 %v384, %v382
      %v499 = vpack.c.b16 %v385, %v383
      %v500 = vpack.c.b16 %v388, %v386
      %v501 = vpack.c.b16 %v389, %v387
      %v502 = vpack.c.b16 %v392, %v390
      %v503 = vpack.c.b16 %v393, %v391
      %v504 = vpack.c.b16 %v396, %v394
      %v505 = vpack.c.b16 %v397, %v395
      %v506 = vpack.c.b16 %v400, %v398
      %v507 = vpack.c.b16 %v401, %v399
      %v508 = vpack.c.b16 %v404, %v402
      %v509 = vpack.c.b16 %v405, %v403
      %v510 = vpack.c.b16 %v408, %v406
      %v511 = vpack.c.b16 %v409, %v407
      %v512 = vpack.c.b16 %v412, %v410
      %v513 = vpack.c.b16 %v413, %v411
      %v514 = vpack.c.b16 %v416, %v414
      %v515 = vpack.c.b16 %v417, %v415
      %v516 = vpack.c.b16 %v420, %v418
      %v517 = vpack.c.b16 %v421, %v419
      %v518 = vpack.c.b16 %v424, %v422
      %v519 = vpack.c.b16 %v425, %v423
      %v520 = vpack.c.b16 %v428, %v426
      %v521 = vpack.c.b16 %v429, %v427
      %v522 = vpack.c.b16 %v432, %v430
      %v523 = vpack.c.b16 %v433, %v431
      %v524 = vpack.c.b16 %v436, %v434
      %v525 = vpack.c.b16 %v437, %v435
      %v526 = vpack.c.b16 %v440, %v438
      %v527 = vpack.c.b16 %v441, %v439
      %v528 = vpack.c.b16 %v444, %v442
      %v529 = vpack.c.b16 %v445, %v443
      %v530 = vpack.c.b16 %v448, %v446
      %v531 = vpack.c.b16 %v449, %v447
      %v532 = vpack.c.b16 %v452, %v450
      %v533 = vpack.c.b16 %v453, %v451
      %v534 = vpack.c.b16 %v456, %v454
      %v535 = vpack.c.b16 %v457, %v455
      %v536 = vpack.c.b16 %v460, %v458
      %v537 = vpack.c.b16 %v461, %v459
      %v538 = vpack.c.b16 %v464, %v462
      %v539 = vpack.c.b16 %v465, %v463
      %v540 = vpack.c.b16 %v468, %v466
      %v541 = vpack.c.b16 %v469, %v467
      %v542 = vpack.c.b16 %v472, %v470
      %v543 = vpack.c.b16 %v473, %v471
      %v544 = vpack.c.b16 %v476, %v474
      %v545 = vpack.c.b16 %v477, %v475
      %v546 = vpack.c.b16 %v480, %v478
      %v547 = vpack.c.b16 %v481, %v479
      %vm614 = vcmask 130048
      %v616 = vsel %vm614, %v279, 0
      %618 = vmatprep.subr.bf16.mxu0 %v497
      %619 = vmatpush1.bf16.msra.mxu0 %v496
      %620 = vmatprep.subr.bf16.mxu0 %v495
      %621 = vmatpush1.bf16.msra.mxu0 %v494
      %622 = vmatprep.subr.bf16.mxu0 %v493
      %623 = vmatpush1.bf16.msra.mxu0 %v492
      %624 = vmatprep.subr.bf16.mxu0 %v491
      %625 = vmatpush1.bf16.msra.mxu0 %v490
      %626 = vmatprep.subr.bf16.mxu0 %v489
      %627 = vmatpush1.bf16.msra.mxu0 %v488
      %628 = vmatprep.subr.bf16.mxu0 %v487
      %629 = vmatpush1.bf16.msra.mxu0 %v486
      %630 = vmatprep.subr.bf16.mxu0 %v485
      %631 = vmatpush1.bf16.msra.mxu0 %v484
      %632 = vmatprep.subr.bf16.mxu0 %v483
      %633 = vmatpush1.bf16.msra.mxu0 %v482
      %634 = vmatprep.subr.bf16.mxu0 %v513
      %635 = vmatpush2.bf16.msra.mxu0 %v512
      %636 = vmatprep.subr.bf16.mxu0 %v511
      %637 = vmatpush2.bf16.msra.mxu0 %v510
      %638 = vmatprep.subr.bf16.mxu0 %v509
      %639 = vmatpush2.bf16.msra.mxu0 %v508
      %640 = vmatprep.subr.bf16.mxu0 %v507
      %641 = vmatpush2.bf16.msra.mxu0 %v506
      %642 = vmatprep.subr.bf16.mxu0 %v505
      %643 = vmatpush2.bf16.msra.mxu0 %v504
      %644 = vmatprep.subr.bf16.mxu0 %v503
      %645 = vmatpush2.bf16.msra.mxu0 %v502
      %646 = vmatprep.subr.bf16.mxu0 %v501
      %647 = vmatpush2.bf16.msra.mxu0 %v500
      %648 = vmatprep.subr.bf16.mxu0 %v499
      %649 = vmatpush2.bf16.msra.mxu0 %v498
      %650 = vmatprep.mubr.bf16.mxu0 %v271
      %651 = vmatmul.mubr.bf16.gmra.mxu0 %v263
      %v652 = vpop.f32.mrf.mxu0
      %v653 = vadd.f32 %v252, %v652
      %v654 = vpop.f32.mrf.mxu0
      %v655 = vadd.f32 %v252, %v654
      %v656 = vpop.f32.mrf.mxu0
      %v657 = vpop.f32.mrf.mxu0
      %658 = vdwg.mxu0
      %659 = vmatprep.subr.bf16.mxu0 %v529
      %660 = vmatpush1.bf16.msra.mxu0 %v528
      %661 = vmatprep.subr.bf16.mxu0 %v527
      %662 = vmatpush1.bf16.msra.mxu0 %v526
      %663 = vmatprep.subr.bf16.mxu0 %v525
      %664 = vmatpush1.bf16.msra.mxu0 %v524
      %665 = vmatprep.subr.bf16.mxu0 %v523
      %666 = vmatpush1.bf16.msra.mxu0 %v522
      %667 = vmatprep.subr.bf16.mxu0 %v521
      %668 = vmatpush1.bf16.msra.mxu0 %v520
      %669 = vmatprep.subr.bf16.mxu0 %v519
      %670 = vmatpush1.bf16.msra.mxu0 %v518
      %671 = vmatprep.subr.bf16.mxu0 %v517
      %672 = vmatpush1.bf16.msra.mxu0 %v516
      %673 = vmatprep.subr.bf16.mxu0 %v515
      %674 = vmatpush1.bf16.msra.mxu0 %v514
      %675 = vmatprep.subr.bf16.mxu0 %v545
      %676 = vmatpush2.bf16.msra.mxu0 %v544
      %677 = vmatprep.subr.bf16.mxu0 %v543
      %678 = vmatpush2.bf16.msra.mxu0 %v542
      %679 = vmatprep.subr.bf16.mxu0 %v541
      %680 = vmatpush2.bf16.msra.mxu0 %v540
      %681 = vmatprep.subr.bf16.mxu0 %v539
      %682 = vmatpush2.bf16.msra.mxu0 %v538
      %683 = vmatprep.subr.bf16.mxu0 %v537
      %684 = vmatpush2.bf16.msra.mxu0 %v536
      %685 = vmatprep.subr.bf16.mxu0 %v535
      %686 = vmatpush2.bf16.msra.mxu0 %v534
      %687 = vmatprep.subr.bf16.mxu0 %v533
      %688 = vmatpush2.bf16.msra.mxu0 %v532
      %689 = vmatprep.subr.bf16.mxu0 %v531
      %690 = vmatpush2.bf16.msra.mxu0 %v530
      %691 = vmatprep.mubr.bf16.mxu0 %v272
      %692 = vmatmul.mubr.bf16.gmra.mxu0 %v270
      %v693 = vpop.f32.mrf.mxu0
      %v694 = vadd.f32 %v653, %v693
      %v695 = vpop.f32.mrf.mxu0
      %v696 = vadd.f32 %v655, %v695
      %v697 = vpop.f32.mrf.mxu0
      %v698 = vpop.f32.mrf.mxu0
      %699 = vdwg.mxu0
      %700 = vmatprep.subr.bf16.mxu0 0
      %701 = vmatpush1.bf16.msra.mxu0 0
      %702 = vmatprep.subr.bf16.mxu0 0
      %703 = vmatpush1.bf16.msra.mxu0 0
      %704 = vmatprep.subr.bf16.mxu0 0
      %705 = vmatpush1.bf16.msra.mxu0 0
      %706 = vmatprep.subr.bf16.mxu0 0
      %707 = vmatpush1.bf16.msra.mxu0 0
      %708 = vmatprep.subr.bf16.mxu0 0
      %709 = vmatpush1.bf16.msra.mxu0 0
      %710 = vmatprep.subr.bf16.mxu0 0
      %711 = vmatpush1.bf16.msra.mxu0 0
      %712 = vmatprep.subr.bf16.mxu0 0
      %713 = vmatpush1.bf16.msra.mxu0 0
      %714 = vmatprep.subr.bf16.mxu0 %v547
      %715 = vmatpush1.bf16.msra.mxu0 %v546
      %716 = vmatprep.subr.bf16.mxu0 0
      %717 = vmatpush2.bf16.msra.mxu0 0
      %718 = vmatprep.subr.bf16.mxu0 0
      %719 = vmatpush2.bf16.msra.mxu0 0
      %720 = vmatprep.subr.bf16.mxu0 0
      %721 = vmatpush2.bf16.msra.mxu0 0
      %722 = vmatprep.subr.bf16.mxu0 0
      %723 = vmatpush2.bf16.msra.mxu0 0
      %724 = vmatprep.subr.bf16.mxu0 0
      %725 = vmatpush2.bf16.msra.mxu0 0
      %726 = vmatprep.subr.bf16.mxu0 0
      %727 = vmatpush2.bf16.msra.mxu0 0
      %728 = vmatprep.subr.bf16.mxu0 0
      %729 = vmatpush2.bf16.msra.mxu0 0
      %730 = vmatprep.subr.bf16.mxu0 0
      %731 = vmatpush2.bf16.msra.mxu0 0
      %732 = vmatprep.mubr.bf16.mxu0 0
      %733 = vmatmul.mubr.bf16.gmra.mxu0 %v616
      %v734 = vpop.f32.mrf.mxu0
      %v735 = vadd.f32 %v694, %v734
      %v736 = vpop.f32.mrf.mxu0
      %v737 = vadd.f32 %v696, %v736
      %v738 = vpop.f32.mrf.mxu0
      %v739 = vpop.f32.mrf.mxu0
      %740 = vdwg.mxu0
      %v741 = vmax.f32 %v735, 0.0
      %v742 = vmax.f32 %v737, 0.0
      %v745 = vcombine.low %v741, %v742
      %vm747 = vcmask 1043456
      %vm748 = vcmask 556036
      %vm749 = vmor %vm748, %vm747
      %750 = vst.msk [vmem:[%s177] sm:$0xff] %vm749, %v745
      %s751 = scalar_lea.vmem %s170, 528
      %v752 = vld [vmem:[%s751] sm:$0xff]
      %v753 = vld [vmem:[%s751 + $0x8] sm:$0xff]
      %v754 = vld [vmem:[%s751 + $0x10] sm:$0xff]
      %v755 = vld [vmem:[%s751 + $0x18] sm:$0xff]
      %v756 = vld [vmem:[%s751 + $0x20] sm:$0xff]
      %v757 = vld [vmem:[%s751 + $0x28] sm:$0xff]
      %v758 = vld [vmem:[%s751 + $0x30] sm:$0xff]
      %v759 = vld [vmem:[%s751 + $0x38] sm:$0xff]
      %v760 = vld [vmem:[%s751 + $0x40] sm:$0xff]
      %v761 = vld [vmem:[%s751 + $0x48] sm:$0xff]
      %v762 = vld [vmem:[%s751 + $0x50] sm:$0xff]
      %v763 = vld [vmem:[%s751 + $0x58] sm:$0xff]
      %v764 = vld [vmem:[%s751 + $0x60] sm:$0xff]
      %v765 = vld [vmem:[%s751 + $0x68] sm:$0xff]
      %v766 = vld [vmem:[%s751 + $0x70] sm:$0xff]
      %v767 = vld [vmem:[%s751 + $0x78] sm:$0xff]
      %v768 = vld [vmem:[%s751 + $0x80] sm:$0xff]
      %v769 = vld [vmem:[%s751 + $0x88] sm:$0xff]
      %v770 = vld [vmem:[%s751 + $0x90] sm:$0xff]
      %v771 = vld [vmem:[%s751 + $0x98] sm:$0xff]
      %v772 = vld [vmem:[%s751 + $0xa0] sm:$0xff]
      %v773 = vld [vmem:[%s751 + $0xa8] sm:$0xff]
      %v774 = vld [vmem:[%s751 + $0xb0] sm:$0xff]
      %v775 = vld [vmem:[%s751 + $0xb8] sm:$0xff]
      %v776 = vld [vmem:[%s751 + $0xc0] sm:$0xff]
      %v777 = vld [vmem:[%s751 + $0xc8] sm:$0xff]
      %v778 = vld [vmem:[%s751 + $0xd0] sm:$0xff]
      %v779 = vld [vmem:[%s751 + $0xd8] sm:$0xff]
      %v780 = vld [vmem:[%s751 + $0xe0] sm:$0xff]
      %v781 = vld [vmem:[%s751 + $0xe8] sm:$0xff]
      %v782 = vld [vmem:[%s751 + $0xf0] sm:$0xff]
      %v783 = vld [vmem:[%s751 + $0xf8] sm:$0xff]
      %v784 = vld [vmem:[%s751 + $0x100] sm:$0xff]
      %v785 = vld [vmem:[%s751 + $0x108] sm:$0xff]
      %v786 = vld [vmem:[%s751 + $0x110] sm:$0xff]
      %v787 = vld [vmem:[%s751 + $0x118] sm:$0xff]
      %v788 = vld [vmem:[%s751 + $0x120] sm:$0xff]
      %v789 = vld [vmem:[%s751 + $0x128] sm:$0xff]
      %v790 = vld [vmem:[%s751 + $0x130] sm:$0xff]
      %v791 = vld [vmem:[%s751 + $0x138] sm:$0xff]
      %v792 = vld [vmem:[%s751 + $0x140] sm:$0xff]
      %v793 = vld [vmem:[%s751 + $0x148] sm:$0xff]
      %v794 = vld [vmem:[%s751 + $0x150] sm:$0xff]
      %v795 = vld [vmem:[%s751 + $0x158] sm:$0xff]
      %v796 = vld [vmem:[%s751 + $0x160] sm:$0xff]
      %v797 = vld [vmem:[%s751 + $0x168] sm:$0xff]
      %v798 = vld [vmem:[%s751 + $0x170] sm:$0xff]
      %v799 = vld [vmem:[%s751 + $0x178] sm:$0xff]
      %v800 = vld [vmem:[%s751 + $0x180] sm:$0xff]
      %v801 = vld [vmem:[%s751 + $0x188] sm:$0xff]
      %v802 = vld [vmem:[%s751 + $0x190] sm:$0xff]
      %v803 = vld [vmem:[%s751 + $0x198] sm:$0xff]
      %v804 = vld [vmem:[%s751 + $0x1a0] sm:$0xff]
      %v805 = vld [vmem:[%s751 + $0x1a8] sm:$0xff]
      %v806 = vld [vmem:[%s751 + $0x1b0] sm:$0xff]
      %v807 = vld [vmem:[%s751 + $0x1b8] sm:$0xff]
      %v808 = vld [vmem:[%s751 + $0x1c0] sm:$0xff]
      %v809 = vld [vmem:[%s751 + $0x1c8] sm:$0xff]
      %v810 = vld [vmem:[%s751 + $0x1d0] sm:$0xff]
      %v811 = vld [vmem:[%s751 + $0x1d8] sm:$0xff]
      %v812 = vld [vmem:[%s751 + $0x1e0] sm:$0xff]
      %v813 = vld [vmem:[%s751 + $0x1e8] sm:$0xff]
      %v814 = vld [vmem:[%s751 + $0x1f0] sm:$0xff]
      %v815 = vld [vmem:[%s751 + $0x1f8] sm:$0xff]
      %v816 = vld [vmem:[%s751 + $0x200] sm:$0xff]
      %v817 = vld [vmem:[%s751 + $0x208] sm:$0xff]
      %v884 = vunpack.c.l.b16 %v752
      %v885 = vunpack.c.h.b16 %v752
      %v886 = vunpack.c.l.b16 %v753
      %v887 = vunpack.c.h.b16 %v753
      %v888 = vunpack.c.l.b16 %v754
      %v889 = vunpack.c.h.b16 %v754
      %v890 = vunpack.c.l.b16 %v755
      %v891 = vunpack.c.h.b16 %v755
      %v892 = vunpack.c.l.b16 %v756
      %v893 = vunpack.c.h.b16 %v756
      %v894 = vunpack.c.l.b16 %v757
      %v895 = vunpack.c.h.b16 %v757
      %v896 = vunpack.c.l.b16 %v758
      %v897 = vunpack.c.h.b16 %v758
      %v898 = vunpack.c.l.b16 %v759
      %v899 = vunpack.c.h.b16 %v759
      %v900 = vunpack.c.l.b16 %v760
      %v901 = vunpack.c.h.b16 %v760
      %v902 = vunpack.c.l.b16 %v761
      %v903 = vunpack.c.h.b16 %v761
      %v904 = vunpack.c.l.b16 %v762
      %v905 = vunpack.c.h.b16 %v762
      %v906 = vunpack.c.l.b16 %v763
      %v907 = vunpack.c.h.b16 %v763
      %v908 = vunpack.c.l.b16 %v764
      %v909 = vunpack.c.h.b16 %v764
      %v910 = vunpack.c.l.b16 %v765
      %v911 = vunpack.c.h.b16 %v765
      %v912 = vunpack.c.l.b16 %v766
      %v913 = vunpack.c.h.b16 %v766
      %v914 = vunpack.c.l.b16 %v767
      %v915 = vunpack.c.h.b16 %v767
      %v916 = vunpack.c.l.b16 %v768
      %v917 = vunpack.c.h.b16 %v768
      %v918 = vunpack.c.l.b16 %v769
      %v919 = vunpack.c.h.b16 %v769
      %v920 = vunpack.c.l.b16 %v770
      %v921 = vunpack.c.h.b16 %v770
      %v922 = vunpack.c.l.b16 %v771
      %v923 = vunpack.c.h.b16 %v771
      %v924 = vunpack.c.l.b16 %v772
      %v925 = vunpack.c.h.b16 %v772
      %v926 = vunpack.c.l.b16 %v773
      %v927 = vunpack.c.h.b16 %v773
      %v928 = vunpack.c.l.b16 %v774
      %v929 = vunpack.c.h.b16 %v774
      %v930 = vunpack.c.l.b16 %v775
      %v931 = vunpack.c.h.b16 %v775
      %v932 = vunpack.c.l.b16 %v776
      %v933 = vunpack.c.h.b16 %v776
      %v934 = vunpack.c.l.b16 %v777
      %v935 = vunpack.c.h.b16 %v777
      %v936 = vunpack.c.l.b16 %v778
      %v937 = vunpack.c.h.b16 %v778
      %v938 = vunpack.c.l.b16 %v779
      %v939 = vunpack.c.h.b16 %v779
      %v940 = vunpack.c.l.b16 %v780
      %v941 = vunpack.c.h.b16 %v780
      %v942 = vunpack.c.l.b16 %v781
      %v943 = vunpack.c.h.b16 %v781
      %v944 = vunpack.c.l.b16 %v782
      %v945 = vunpack.c.h.b16 %v782
      %v946 = vunpack.c.l.b16 %v783
      %v947 = vunpack.c.h.b16 %v783
      %v948 = vunpack.c.l.b16 %v784
      %v949 = vunpack.c.h.b16 %v784
      %v950 = vunpack.c.l.b16 %v785
      %v951 = vunpack.c.h.b16 %v785
      %v952 = vunpack.c.l.b16 %v786
      %v953 = vunpack.c.h.b16 %v786
      %v954 = vunpack.c.l.b16 %v787
      %v955 = vunpack.c.h.b16 %v787
      %v956 = vunpack.c.l.b16 %v788
      %v957 = vunpack.c.h.b16 %v788
      %v958 = vunpack.c.l.b16 %v789
      %v959 = vunpack.c.h.b16 %v789
      %v960 = vunpack.c.l.b16 %v790
      %v961 = vunpack.c.h.b16 %v790
      %v962 = vunpack.c.l.b16 %v791
      %v963 = vunpack.c.h.b16 %v791
      %v964 = vunpack.c.l.b16 %v792
      %v965 = vunpack.c.h.b16 %v792
      %v966 = vunpack.c.l.b16 %v793
      %v967 = vunpack.c.h.b16 %v793
      %v968 = vunpack.c.l.b16 %v794
      %v969 = vunpack.c.h.b16 %v794
      %v970 = vunpack.c.l.b16 %v795
      %v971 = vunpack.c.h.b16 %v795
      %v972 = vunpack.c.l.b16 %v796
      %v973 = vunpack.c.h.b16 %v796
      %v974 = vunpack.c.l.b16 %v797
      %v975 = vunpack.c.h.b16 %v797
      %v976 = vunpack.c.l.b16 %v798
      %v977 = vunpack.c.h.b16 %v798
      %v978 = vunpack.c.l.b16 %v799
      %v979 = vunpack.c.h.b16 %v799
      %v980 = vunpack.c.l.b16 %v800
      %v981 = vunpack.c.h.b16 %v800
      %v982 = vunpack.c.l.b16 %v801
      %v983 = vunpack.c.h.b16 %v801
      %v984 = vunpack.c.l.b16 %v802
      %v985 = vunpack.c.h.b16 %v802
      %v986 = vunpack.c.l.b16 %v803
      %v987 = vunpack.c.h.b16 %v803
      %v988 = vunpack.c.l.b16 %v804
      %v989 = vunpack.c.h.b16 %v804
      %v990 = vunpack.c.l.b16 %v805
      %v991 = vunpack.c.h.b16 %v805
      %v992 = vunpack.c.l.b16 %v806
      %v993 = vunpack.c.h.b16 %v806
      %v994 = vunpack.c.l.b16 %v807
      %v995 = vunpack.c.h.b16 %v807
      %v996 = vunpack.c.l.b16 %v808
      %v997 = vunpack.c.h.b16 %v808
      %v998 = vunpack.c.l.b16 %v809
      %v999 = vunpack.c.h.b16 %v809
      %v1000 = vunpack.c.l.b16 %v810
      %v1001 = vunpack.c.h.b16 %v810
      %v1002 = vunpack.c.l.b16 %v811
      %v1003 = vunpack.c.h.b16 %v811
      %v1004 = vunpack.c.l.b16 %v812
      %v1005 = vunpack.c.h.b16 %v812
      %v1006 = vunpack.c.l.b16 %v813
      %v1007 = vunpack.c.h.b16 %v813
      %v1008 = vunpack.c.l.b16 %v814
      %v1009 = vunpack.c.h.b16 %v814
      %v1010 = vunpack.c.l.b16 %v815
      %v1011 = vunpack.c.h.b16 %v815
      %v1012 = vunpack.c.l.b16 %v816
      %v1013 = vunpack.c.h.b16 %v816
      %v1014 = vunpack.c.l.b16 %v817
      %v1015 = vunpack.c.h.b16 %v817
      %v1016 = vpack.c.b16 %v886, %v884
      %v1017 = vpack.c.b16 %v887, %v885
      %v1018 = vpack.c.b16 %v890, %v888
      %v1019 = vpack.c.b16 %v891, %v889
      %v1020 = vpack.c.b16 %v894, %v892
      %v1021 = vpack.c.b16 %v895, %v893
      %v1022 = vpack.c.b16 %v898, %v896
      %v1023 = vpack.c.b16 %v899, %v897
      %v1024 = vpack.c.b16 %v902, %v900
      %v1025 = vpack.c.b16 %v903, %v901
      %v1026 = vpack.c.b16 %v906, %v904
      %v1027 = vpack.c.b16 %v907, %v905
      %v1028 = vpack.c.b16 %v910, %v908
      %v1029 = vpack.c.b16 %v911, %v909
      %v1030 = vpack.c.b16 %v914, %v912
      %v1031 = vpack.c.b16 %v915, %v913
      %v1032 = vpack.c.b16 %v918, %v916
      %v1033 = vpack.c.b16 %v919, %v917
      %v1034 = vpack.c.b16 %v922, %v920
      %v1035 = vpack.c.b16 %v923, %v921
      %v1036 = vpack.c.b16 %v926, %v924
      %v1037 = vpack.c.b16 %v927, %v925
      %v1038 = vpack.c.b16 %v930, %v928
      %v1039 = vpack.c.b16 %v931, %v929
      %v1040 = vpack.c.b16 %v934, %v932
      %v1041 = vpack.c.b16 %v935, %v933
      %v1042 = vpack.c.b16 %v938, %v936
      %v1043 = vpack.c.b16 %v939, %v937
      %v1044 = vpack.c.b16 %v942, %v940
      %v1045 = vpack.c.b16 %v943, %v941
      %v1046 = vpack.c.b16 %v946, %v944
      %v1047 = vpack.c.b16 %v947, %v945
      %v1048 = vpack.c.b16 %v950, %v948
      %v1049 = vpack.c.b16 %v951, %v949
      %v1050 = vpack.c.b16 %v954, %v952
      %v1051 = vpack.c.b16 %v955, %v953
      %v1052 = vpack.c.b16 %v958, %v956
      %v1053 = vpack.c.b16 %v959, %v957
      %v1054 = vpack.c.b16 %v962, %v960
      %v1055 = vpack.c.b16 %v963, %v961
      %v1056 = vpack.c.b16 %v966, %v964
      %v1057 = vpack.c.b16 %v967, %v965
      %v1058 = vpack.c.b16 %v970, %v968
      %v1059 = vpack.c.b16 %v971, %v969
      %v1060 = vpack.c.b16 %v974, %v972
      %v1061 = vpack.c.b16 %v975, %v973
      %v1062 = vpack.c.b16 %v978, %v976
      %v1063 = vpack.c.b16 %v979, %v977
      %v1064 = vpack.c.b16 %v982, %v980
      %v1065 = vpack.c.b16 %v983, %v981
      %v1066 = vpack.c.b16 %v986, %v984
      %v1067 = vpack.c.b16 %v987, %v985
      %v1068 = vpack.c.b16 %v990, %v988
      %v1069 = vpack.c.b16 %v991, %v989
      %v1070 = vpack.c.b16 %v994, %v992
      %v1071 = vpack.c.b16 %v995, %v993
      %v1072 = vpack.c.b16 %v998, %v996
      %v1073 = vpack.c.b16 %v999, %v997
      %v1074 = vpack.c.b16 %v1002, %v1000
      %v1075 = vpack.c.b16 %v1003, %v1001
      %v1076 = vpack.c.b16 %v1006, %v1004
      %v1077 = vpack.c.b16 %v1007, %v1005
      %v1078 = vpack.c.b16 %v1010, %v1008
      %v1079 = vpack.c.b16 %v1011, %v1009
      %v1080 = vpack.c.b16 %v1014, %v1012
      %v1081 = vpack.c.b16 %v1015, %v1013
      %1148 = vmatprep.subr.bf16.mxu0 %v1031
      %1149 = vmatpush1.bf16.msra.mxu0 %v1030
      %1150 = vmatprep.subr.bf16.mxu0 %v1029
      %1151 = vmatpush1.bf16.msra.mxu0 %v1028
      %1152 = vmatprep.subr.bf16.mxu0 %v1027
      %1153 = vmatpush1.bf16.msra.mxu0 %v1026
      %1154 = vmatprep.subr.bf16.mxu0 %v1025
      %1155 = vmatpush1.bf16.msra.mxu0 %v1024
      %1156 = vmatprep.subr.bf16.mxu0 %v1023
      %1157 = vmatpush1.bf16.msra.mxu0 %v1022
      %1158 = vmatprep.subr.bf16.mxu0 %v1021
      %1159 = vmatpush1.bf16.msra.mxu0 %v1020
      %1160 = vmatprep.subr.bf16.mxu0 %v1019
      %1161 = vmatpush1.bf16.msra.mxu0 %v1018
      %1162 = vmatprep.subr.bf16.mxu0 %v1017
      %1163 = vmatpush1.bf16.msra.mxu0 %v1016
      %1164 = vmatprep.subr.bf16.mxu0 %v1047
      %1165 = vmatpush2.bf16.msra.mxu0 %v1046
      %1166 = vmatprep.subr.bf16.mxu0 %v1045
      %1167 = vmatpush2.bf16.msra.mxu0 %v1044
      %1168 = vmatprep.subr.bf16.mxu0 %v1043
      %1169 = vmatpush2.bf16.msra.mxu0 %v1042
      %1170 = vmatprep.subr.bf16.mxu0 %v1041
      %1171 = vmatpush2.bf16.msra.mxu0 %v1040
      %1172 = vmatprep.subr.bf16.mxu0 %v1039
      %1173 = vmatpush2.bf16.msra.mxu0 %v1038
      %1174 = vmatprep.subr.bf16.mxu0 %v1037
      %1175 = vmatpush2.bf16.msra.mxu0 %v1036
      %1176 = vmatprep.subr.bf16.mxu0 %v1035
      %1177 = vmatpush2.bf16.msra.mxu0 %v1034
      %1178 = vmatprep.subr.bf16.mxu0 %v1033
      %1179 = vmatpush2.bf16.msra.mxu0 %v1032
      %1180 = vmatprep.mubr.bf16.mxu0 %v271
      %1181 = vmatmul.mubr.bf16.gmra.mxu0 %v263
      %v1182 = vpop.f32.mrf.mxu0
      %v1183 = vadd.f32 %v252, %v1182
      %v1184 = vpop.f32.mrf.mxu0
      %v1185 = vadd.f32 %v252, %v1184
      %v1186 = vpop.f32.mrf.mxu0
      %v1187 = vpop.f32.mrf.mxu0
      %1188 = vdwg.mxu0
      %1189 = vmatprep.subr.bf16.mxu0 %v1063
      %1190 = vmatpush1.bf16.msra.mxu0 %v1062
      %1191 = vmatprep.subr.bf16.mxu0 %v1061
      %1192 = vmatpush1.bf16.msra.mxu0 %v1060
      %1193 = vmatprep.subr.bf16.mxu0 %v1059
      %1194 = vmatpush1.bf16.msra.mxu0 %v1058
      %1195 = vmatprep.subr.bf16.mxu0 %v1057
      %1196 = vmatpush1.bf16.msra.mxu0 %v1056
      %1197 = vmatprep.subr.bf16.mxu0 %v1055
      %1198 = vmatpush1.bf16.msra.mxu0 %v1054
      %1199 = vmatprep.subr.bf16.mxu0 %v1053
      %1200 = vmatpush1.bf16.msra.mxu0 %v1052
      %1201 = vmatprep.subr.bf16.mxu0 %v1051
      %1202 = vmatpush1.bf16.msra.mxu0 %v1050
      %1203 = vmatprep.subr.bf16.mxu0 %v1049
      %1204 = vmatpush1.bf16.msra.mxu0 %v1048
      %1205 = vmatprep.subr.bf16.mxu0 %v1079
      %1206 = vmatpush2.bf16.msra.mxu0 %v1078
      %1207 = vmatprep.subr.bf16.mxu0 %v1077
      %1208 = vmatpush2.bf16.msra.mxu0 %v1076
      %1209 = vmatprep.subr.bf16.mxu0 %v1075
      %1210 = vmatpush2.bf16.msra.mxu0 %v1074
      %1211 = vmatprep.subr.bf16.mxu0 %v1073
      %1212 = vmatpush2.bf16.msra.mxu0 %v1072
      %1213 = vmatprep.subr.bf16.mxu0 %v1071
      %1214 = vmatpush2.bf16.msra.mxu0 %v1070
      %1215 = vmatprep.subr.bf16.mxu0 %v1069
      %1216 = vmatpush2.bf16.msra.mxu0 %v1068
      %1217 = vmatprep.subr.bf16.mxu0 %v1067
      %1218 = vmatpush2.bf16.msra.mxu0 %v1066
      %1219 = vmatprep.subr.bf16.mxu0 %v1065
      %1220 = vmatpush2.bf16.msra.mxu0 %v1064
      %1221 = vmatprep.mubr.bf16.mxu0 %v272
      %1222 = vmatmul.mubr.bf16.gmra.mxu0 %v270
      %v1223 = vpop.f32.mrf.mxu0
      %v1224 = vadd.f32 %v1183, %v1223
      %v1225 = vpop.f32.mrf.mxu0
      %v1226 = vadd.f32 %v1185, %v1225
      %v1227 = vpop.f32.mrf.mxu0
      %v1228 = vpop.f32.mrf.mxu0
      %1229 = vdwg.mxu0
      %1230 = vmatprep.subr.bf16.mxu0 0
      %1231 = vmatpush1.bf16.msra.mxu0 0
      %1232 = vmatprep.subr.bf16.mxu0 0
      %1233 = vmatpush1.bf16.msra.mxu0 0
      %1234 = vmatprep.subr.bf16.mxu0 0
      %1235 = vmatpush1.bf16.msra.mxu0 0
      %1236 = vmatprep.subr.bf16.mxu0 0
      %1237 = vmatpush1.bf16.msra.mxu0 0
      %1238 = vmatprep.subr.bf16.mxu0 0
      %1239 = vmatpush1.bf16.msra.mxu0 0
      %1240 = vmatprep.subr.bf16.mxu0 0
      %1241 = vmatpush1.bf16.msra.mxu0 0
      %1242 = vmatprep.subr.bf16.mxu0 0
      %1243 = vmatpush1.bf16.msra.mxu0 0
      %1244 = vmatprep.subr.bf16.mxu0 %v1081
      %1245 = vmatpush1.bf16.msra.mxu0 %v1080
      %1246 = vmatprep.subr.bf16.mxu0 0
      %1247 = vmatpush2.bf16.msra.mxu0 0
      %1248 = vmatprep.subr.bf16.mxu0 0
      %1249 = vmatpush2.bf16.msra.mxu0 0
      %1250 = vmatprep.subr.bf16.mxu0 0
      %1251 = vmatpush2.bf16.msra.mxu0 0
      %1252 = vmatprep.subr.bf16.mxu0 0
      %1253 = vmatpush2.bf16.msra.mxu0 0
      %1254 = vmatprep.subr.bf16.mxu0 0
      %1255 = vmatpush2.bf16.msra.mxu0 0
      %1256 = vmatprep.subr.bf16.mxu0 0
      %1257 = vmatpush2.bf16.msra.mxu0 0
      %1258 = vmatprep.subr.bf16.mxu0 0
      %1259 = vmatpush2.bf16.msra.mxu0 0
      %1260 = vmatprep.subr.bf16.mxu0 0
      %1261 = vmatpush2.bf16.msra.mxu0 0
      %1262 = vmatprep.mubr.bf16.mxu0 0
      %1263 = vmatmul.mubr.bf16.gmra.mxu0 %v616
      %v1264 = vpop.f32.mrf.mxu0
      %v1265 = vadd.f32 %v1224, %v1264
      %v1266 = vpop.f32.mrf.mxu0
      %v1267 = vadd.f32 %v1226, %v1266
      %v1268 = vpop.f32.mrf.mxu0
      %v1269 = vpop.f32.mrf.mxu0
      %1270 = vdwg.mxu0
      %v1271 = vmax.f32 %v1265, 0.0
      %v1272 = vmax.f32 %v1267, 0.0
      %v1275 = vcombine.low %v1271, %v1272
      %s1277 = scalar_lea.vmem %s177, 8
      %1278 = vst.msk [vmem:[%s1277] sm:$0xff] %vm749, %v1275
      %s1279 = scalar_lea.vmem %s170, 1056
      %v1280 = vld [vmem:[%s1279] sm:$0xff]
      %v1281 = vld [vmem:[%s1279 + $0x8] sm:$0xff]
      %v1282 = vld [vmem:[%s1279 + $0x10] sm:$0xff]
      %v1283 = vld [vmem:[%s1279 + $0x18] sm:$0xff]
      %v1284 = vld [vmem:[%s1279 + $0x20] sm:$0xff]
      %v1285 = vld [vmem:[%s1279 + $0x28] sm:$0xff]
      %v1286 = vld [vmem:[%s1279 + $0x30] sm:$0xff]
      %v1287 = vld [vmem:[%s1279 + $0x38] sm:$0xff]
      %v1288 = vld [vmem:[%s1279 + $0x40] sm:$0xff]
      %v1289 = vld [vmem:[%s1279 + $0x48] sm:$0xff]
      %v1290 = vld [vmem:[%s1279 + $0x50] sm:$0xff]
      %v1291 = vld [vmem:[%s1279 + $0x58] sm:$0xff]
      %v1292 = vld [vmem:[%s1279 + $0x60] sm:$0xff]
      %v1293 = vld [vmem:[%s1279 + $0x68] sm:$0xff]
      %v1294 = vld [vmem:[%s1279 + $0x70] sm:$0xff]
      %v1295 = vld [vmem:[%s1279 + $0x78] sm:$0xff]
      %v1296 = vld [vmem:[%s1279 + $0x80] sm:$0xff]
      %v1297 = vld [vmem:[%s1279 + $0x88] sm:$0xff]
      %v1298 = vld [vmem:[%s1279 + $0x90] sm:$0xff]
      %v1299 = vld [vmem:[%s1279 + $0x98] sm:$0xff]
      %v1300 = vld [vmem:[%s1279 + $0xa0] sm:$0xff]
      %v1301 = vld [vmem:[%s1279 + $0xa8] sm:$0xff]
      %v1302 = vld [vmem:[%s1279 + $0xb0] sm:$0xff]
      %v1303 = vld [vmem:[%s1279 + $0xb8] sm:$0xff]
      %v1304 = vld [vmem:[%s1279 + $0xc0] sm:$0xff]
      %v1305 = vld [vmem:[%s1279 + $0xc8] sm:$0xff]
      %v1306 = vld [vmem:[%s1279 + $0xd0] sm:$0xff]
      %v1307 = vld [vmem:[%s1279 + $0xd8] sm:$0xff]
      %v1308 = vld [vmem:[%s1279 + $0xe0] sm:$0xff]
      %v1309 = vld [vmem:[%s1279 + $0xe8] sm:$0xff]
      %v1310 = vld [vmem:[%s1279 + $0xf0] sm:$0xff]
      %v1311 = vld [vmem:[%s1279 + $0xf8] sm:$0xff]
      %v1312 = vld [vmem:[%s1279 + $0x100] sm:$0xff]
      %v1313 = vld [vmem:[%s1279 + $0x108] sm:$0xff]
      %v1314 = vld [vmem:[%s1279 + $0x110] sm:$0xff]
      %v1315 = vld [vmem:[%s1279 + $0x118] sm:$0xff]
      %v1316 = vld [vmem:[%s1279 + $0x120] sm:$0xff]
      %v1317 = vld [vmem:[%s1279 + $0x128] sm:$0xff]
      %v1318 = vld [vmem:[%s1279 + $0x130] sm:$0xff]
      %v1319 = vld [vmem:[%s1279 + $0x138] sm:$0xff]
      %v1320 = vld [vmem:[%s1279 + $0x140] sm:$0xff]
      %v1321 = vld [vmem:[%s1279 + $0x148] sm:$0xff]
      %v1322 = vld [vmem:[%s1279 + $0x150] sm:$0xff]
      %v1323 = vld [vmem:[%s1279 + $0x158] sm:$0xff]
      %v1324 = vld [vmem:[%s1279 + $0x160] sm:$0xff]
      %v1325 = vld [vmem:[%s1279 + $0x168] sm:$0xff]
      %v1326 = vld [vmem:[%s1279 + $0x170] sm:$0xff]
      %v1327 = vld [vmem:[%s1279 + $0x178] sm:$0xff]
      %v1328 = vld [vmem:[%s1279 + $0x180] sm:$0xff]
      %v1329 = vld [vmem:[%s1279 + $0x188] sm:$0xff]
      %v1330 = vld [vmem:[%s1279 + $0x190] sm:$0xff]
      %v1331 = vld [vmem:[%s1279 + $0x198] sm:$0xff]
      %v1332 = vld [vmem:[%s1279 + $0x1a0] sm:$0xff]
      %v1333 = vld [vmem:[%s1279 + $0x1a8] sm:$0xff]
      %v1334 = vld [vmem:[%s1279 + $0x1b0] sm:$0xff]
      %v1335 = vld [vmem:[%s1279 + $0x1b8] sm:$0xff]
      %v1336 = vld [vmem:[%s1279 + $0x1c0] sm:$0xff]
      %v1337 = vld [vmem:[%s1279 + $0x1c8] sm:$0xff]
      %v1338 = vld [vmem:[%s1279 + $0x1d0] sm:$0xff]
      %v1339 = vld [vmem:[%s1279 + $0x1d8] sm:$0xff]
      %v1340 = vld [vmem:[%s1279 + $0x1e0] sm:$0xff]
      %v1341 = vld [vmem:[%s1279 + $0x1e8] sm:$0xff]
      %v1342 = vld [vmem:[%s1279 + $0x1f0] sm:$0xff]
      %v1343 = vld [vmem:[%s1279 + $0x1f8] sm:$0xff]
      %v1344 = vld [vmem:[%s1279 + $0x200] sm:$0xff]
      %v1345 = vld [vmem:[%s1279 + $0x208] sm:$0xff]
      %v1412 = vunpack.c.l.b16 %v1280
      %v1413 = vunpack.c.h.b16 %v1280
      %v1414 = vunpack.c.l.b16 %v1281
      %v1415 = vunpack.c.h.b16 %v1281
      %v1416 = vunpack.c.l.b16 %v1282
      %v1417 = vunpack.c.h.b16 %v1282
      %v1418 = vunpack.c.l.b16 %v1283
      %v1419 = vunpack.c.h.b16 %v1283
      %v1420 = vunpack.c.l.b16 %v1284
      %v1421 = vunpack.c.h.b16 %v1284
      %v1422 = vunpack.c.l.b16 %v1285
      %v1423 = vunpack.c.h.b16 %v1285
      %v1424 = vunpack.c.l.b16 %v1286
      %v1425 = vunpack.c.h.b16 %v1286
      %v1426 = vunpack.c.l.b16 %v1287
      %v1427 = vunpack.c.h.b16 %v1287
      %v1428 = vunpack.c.l.b16 %v1288
      %v1429 = vunpack.c.h.b16 %v1288
      %v1430 = vunpack.c.l.b16 %v1289
      %v1431 = vunpack.c.h.b16 %v1289
      %v1432 = vunpack.c.l.b16 %v1290
      %v1433 = vunpack.c.h.b16 %v1290
      %v1434 = vunpack.c.l.b16 %v1291
      %v1435 = vunpack.c.h.b16 %v1291
      %v1436 = vunpack.c.l.b16 %v1292
      %v1437 = vunpack.c.h.b16 %v1292
      %v1438 = vunpack.c.l.b16 %v1293
      %v1439 = vunpack.c.h.b16 %v1293
      %v1440 = vunpack.c.l.b16 %v1294
      %v1441 = vunpack.c.h.b16 %v1294
      %v1442 = vunpack.c.l.b16 %v1295
      %v1443 = vunpack.c.h.b16 %v1295
      %v1444 = vunpack.c.l.b16 %v1296
      %v1445 = vunpack.c.h.b16 %v1296
      %v1446 = vunpack.c.l.b16 %v1297
      %v1447 = vunpack.c.h.b16 %v1297
      %v1448 = vunpack.c.l.b16 %v1298
      %v1449 = vunpack.c.h.b16 %v1298
      %v1450 = vunpack.c.l.b16 %v1299
      %v1451 = vunpack.c.h.b16 %v1299
      %v1452 = vunpack.c.l.b16 %v1300
      %v1453 = vunpack.c.h.b16 %v1300
      %v1454 = vunpack.c.l.b16 %v1301
      %v1455 = vunpack.c.h.b16 %v1301
      %v1456 = vunpack.c.l.b16 %v1302
      %v1457 = vunpack.c.h.b16 %v1302
      %v1458 = vunpack.c.l.b16 %v1303
      %v1459 = vunpack.c.h.b16 %v1303
      %v1460 = vunpack.c.l.b16 %v1304
      %v1461 = vunpack.c.h.b16 %v1304
      %v1462 = vunpack.c.l.b16 %v1305
      %v1463 = vunpack.c.h.b16 %v1305
      %v1464 = vunpack.c.l.b16 %v1306
      %v1465 = vunpack.c.h.b16 %v1306
      %v1466 = vunpack.c.l.b16 %v1307
      %v1467 = vunpack.c.h.b16 %v1307
      %v1468 = vunpack.c.l.b16 %v1308
      %v1469 = vunpack.c.h.b16 %v1308
      %v1470 = vunpack.c.l.b16 %v1309
      %v1471 = vunpack.c.h.b16 %v1309
      %v1472 = vunpack.c.l.b16 %v1310
      %v1473 = vunpack.c.h.b16 %v1310
      %v1474 = vunpack.c.l.b16 %v1311
      %v1475 = vunpack.c.h.b16 %v1311
      %v1476 = vunpack.c.l.b16 %v1312
      %v1477 = vunpack.c.h.b16 %v1312
      %v1478 = vunpack.c.l.b16 %v1313
      %v1479 = vunpack.c.h.b16 %v1313
      %v1480 = vunpack.c.l.b16 %v1314
      %v1481 = vunpack.c.h.b16 %v1314
      %v1482 = vunpack.c.l.b16 %v1315
      %v1483 = vunpack.c.h.b16 %v1315
      %v1484 = vunpack.c.l.b16 %v1316
      %v1485 = vunpack.c.h.b16 %v1316
      %v1486 = vunpack.c.l.b16 %v1317
      %v1487 = vunpack.c.h.b16 %v1317
      %v1488 = vunpack.c.l.b16 %v1318
      %v1489 = vunpack.c.h.b16 %v1318
      %v1490 = vunpack.c.l.b16 %v1319
      %v1491 = vunpack.c.h.b16 %v1319
      %v1492 = vunpack.c.l.b16 %v1320
      %v1493 = vunpack.c.h.b16 %v1320
      %v1494 = vunpack.c.l.b16 %v1321
      %v1495 = vunpack.c.h.b16 %v1321
      %v1496 = vunpack.c.l.b16 %v1322
      %v1497 = vunpack.c.h.b16 %v1322
      %v1498 = vunpack.c.l.b16 %v1323
      %v1499 = vunpack.c.h.b16 %v1323
      %v1500 = vunpack.c.l.b16 %v1324
      %v1501 = vunpack.c.h.b16 %v1324
      %v1502 = vunpack.c.l.b16 %v1325
      %v1503 = vunpack.c.h.b16 %v1325
      %v1504 = vunpack.c.l.b16 %v1326
      %v1505 = vunpack.c.h.b16 %v1326
      %v1506 = vunpack.c.l.b16 %v1327
      %v1507 = vunpack.c.h.b16 %v1327
      %v1508 = vunpack.c.l.b16 %v1328
      %v1509 = vunpack.c.h.b16 %v1328
      %v1510 = vunpack.c.l.b16 %v1329
      %v1511 = vunpack.c.h.b16 %v1329
      %v1512 = vunpack.c.l.b16 %v1330
      %v1513 = vunpack.c.h.b16 %v1330
      %v1514 = vunpack.c.l.b16 %v1331
      %v1515 = vunpack.c.h.b16 %v1331
      %v1516 = vunpack.c.l.b16 %v1332
      %v1517 = vunpack.c.h.b16 %v1332
      %v1518 = vunpack.c.l.b16 %v1333
      %v1519 = vunpack.c.h.b16 %v1333
      %v1520 = vunpack.c.l.b16 %v1334
      %v1521 = vunpack.c.h.b16 %v1334
      %v1522 = vunpack.c.l.b16 %v1335
      %v1523 = vunpack.c.h.b16 %v1335
      %v1524 = vunpack.c.l.b16 %v1336
      %v1525 = vunpack.c.h.b16 %v1336
      %v1526 = vunpack.c.l.b16 %v1337
      %v1527 = vunpack.c.h.b16 %v1337
      %v1528 = vunpack.c.l.b16 %v1338
      %v1529 = vunpack.c.h.b16 %v1338
      %v1530 = vunpack.c.l.b16 %v1339
      %v1531 = vunpack.c.h.b16 %v1339
      %v1532 = vunpack.c.l.b16 %v1340
      %v1533 = vunpack.c.h.b16 %v1340
      %v1534 = vunpack.c.l.b16 %v1341
      %v1535 = vunpack.c.h.b16 %v1341
      %v1536 = vunpack.c.l.b16 %v1342
      %v1537 = vunpack.c.h.b16 %v1342
      %v1538 = vunpack.c.l.b16 %v1343
      %v1539 = vunpack.c.h.b16 %v1343
      %v1540 = vunpack.c.l.b16 %v1344
      %v1541 = vunpack.c.h.b16 %v1344
      %v1542 = vunpack.c.l.b16 %v1345
      %v1543 = vunpack.c.h.b16 %v1345
      %v1544 = vpack.c.b16 %v1414, %v1412
      %v1545 = vpack.c.b16 %v1415, %v1413
      %v1546 = vpack.c.b16 %v1418, %v1416
      %v1547 = vpack.c.b16 %v1419, %v1417
      %v1548 = vpack.c.b16 %v1422, %v1420
      %v1549 = vpack.c.b16 %v1423, %v1421
      %v1550 = vpack.c.b16 %v1426, %v1424
      %v1551 = vpack.c.b16 %v1427, %v1425
      %v1552 = vpack.c.b16 %v1430, %v1428
      %v1553 = vpack.c.b16 %v1431, %v1429
      %v1554 = vpack.c.b16 %v1434, %v1432
      %v1555 = vpack.c.b16 %v1435, %v1433
      %v1556 = vpack.c.b16 %v1438, %v1436
      %v1557 = vpack.c.b16 %v1439, %v1437
      %v1558 = vpack.c.b16 %v1442, %v1440
      %v1559 = vpack.c.b16 %v1443, %v1441
      %v1560 = vpack.c.b16 %v1446, %v1444
      %v1561 = vpack.c.b16 %v1447, %v1445
      %v1562 = vpack.c.b16 %v1450, %v1448
      %v1563 = vpack.c.b16 %v1451, %v1449
      %v1564 = vpack.c.b16 %v1454, %v1452
      %v1565 = vpack.c.b16 %v1455, %v1453
      %v1566 = vpack.c.b16 %v1458, %v1456
      %v1567 = vpack.c.b16 %v1459, %v1457
      %v1568 = vpack.c.b16 %v1462, %v1460
      %v1569 = vpack.c.b16 %v1463, %v1461
      %v1570 = vpack.c.b16 %v1466, %v1464
      %v1571 = vpack.c.b16 %v1467, %v1465
      %v1572 = vpack.c.b16 %v1470, %v1468
      %v1573 = vpack.c.b16 %v1471, %v1469
      %v1574 = vpack.c.b16 %v1474, %v1472
      %v1575 = vpack.c.b16 %v1475, %v1473
      %v1576 = vpack.c.b16 %v1478, %v1476
      %v1577 = vpack.c.b16 %v1479, %v1477
      %v1578 = vpack.c.b16 %v1482, %v1480
      %v1579 = vpack.c.b16 %v1483, %v1481
      %v1580 = vpack.c.b16 %v1486, %v1484
      %v1581 = vpack.c.b16 %v1487, %v1485
      %v1582 = vpack.c.b16 %v1490, %v1488
      %v1583 = vpack.c.b16 %v1491, %v1489
      %v1584 = vpack.c.b16 %v1494, %v1492
      %v1585 = vpack.c.b16 %v1495, %v1493
      %v1586 = vpack.c.b16 %v1498, %v1496
      %v1587 = vpack.c.b16 %v1499, %v1497
      %v1588 = vpack.c.b16 %v1502, %v1500
      %v1589 = vpack.c.b16 %v1503, %v1501
      %v1590 = vpack.c.b16 %v1506, %v1504
      %v1591 = vpack.c.b16 %v1507, %v1505
      %v1592 = vpack.c.b16 %v1510, %v1508
      %v1593 = vpack.c.b16 %v1511, %v1509
      %v1594 = vpack.c.b16 %v1514, %v1512
      %v1595 = vpack.c.b16 %v1515, %v1513
      %v1596 = vpack.c.b16 %v1518, %v1516
      %v1597 = vpack.c.b16 %v1519, %v1517
      %v1598 = vpack.c.b16 %v1522, %v1520
      %v1599 = vpack.c.b16 %v1523, %v1521
      %v1600 = vpack.c.b16 %v1526, %v1524
      %v1601 = vpack.c.b16 %v1527, %v1525
      %v1602 = vpack.c.b16 %v1530, %v1528
      %v1603 = vpack.c.b16 %v1531, %v1529
      %v1604 = vpack.c.b16 %v1534, %v1532
      %v1605 = vpack.c.b16 %v1535, %v1533
      %v1606 = vpack.c.b16 %v1538, %v1536
      %v1607 = vpack.c.b16 %v1539, %v1537
      %v1608 = vpack.c.b16 %v1542, %v1540
      %v1609 = vpack.c.b16 %v1543, %v1541
      %1676 = vmatprep.subr.bf16.mxu0 %v1559
      %1677 = vmatpush1.bf16.msra.mxu0 %v1558
      %1678 = vmatprep.subr.bf16.mxu0 %v1557
      %1679 = vmatpush1.bf16.msra.mxu0 %v1556
      %1680 = vmatprep.subr.bf16.mxu0 %v1555
      %1681 = vmatpush1.bf16.msra.mxu0 %v1554
      %1682 = vmatprep.subr.bf16.mxu0 %v1553
      %1683 = vmatpush1.bf16.msra.mxu0 %v1552
      %1684 = vmatprep.subr.bf16.mxu0 %v1551
      %1685 = vmatpush1.bf16.msra.mxu0 %v1550
      %1686 = vmatprep.subr.bf16.mxu0 %v1549
      %1687 = vmatpush1.bf16.msra.mxu0 %v1548
      %1688 = vmatprep.subr.bf16.mxu0 %v1547
      %1689 = vmatpush1.bf16.msra.mxu0 %v1546
      %1690 = vmatprep.subr.bf16.mxu0 %v1545
      %1691 = vmatpush1.bf16.msra.mxu0 %v1544
      %1692 = vmatprep.subr.bf16.mxu0 %v1575
      %1693 = vmatpush2.bf16.msra.mxu0 %v1574
      %1694 = vmatprep.subr.bf16.mxu0 %v1573
      %1695 = vmatpush2.bf16.msra.mxu0 %v1572
      %1696 = vmatprep.subr.bf16.mxu0 %v1571
      %1697 = vmatpush2.bf16.msra.mxu0 %v1570
      %1698 = vmatprep.subr.bf16.mxu0 %v1569
      %1699 = vmatpush2.bf16.msra.mxu0 %v1568
      %1700 = vmatprep.subr.bf16.mxu0 %v1567
      %1701 = vmatpush2.bf16.msra.mxu0 %v1566
      %1702 = vmatprep.subr.bf16.mxu0 %v1565
      %1703 = vmatpush2.bf16.msra.mxu0 %v1564
      %1704 = vmatprep.subr.bf16.mxu0 %v1563
      %1705 = vmatpush2.bf16.msra.mxu0 %v1562
      %1706 = vmatprep.subr.bf16.mxu0 %v1561
      %1707 = vmatpush2.bf16.msra.mxu0 %v1560
      %1708 = vmatprep.mubr.bf16.mxu0 %v271
      %1709 = vmatmul.mubr.bf16.gmra.mxu0 %v263
      %v1710 = vpop.f32.mrf.mxu0
      %v1711 = vadd.f32 %v252, %v1710
      %v1712 = vpop.f32.mrf.mxu0
      %v1713 = vadd.f32 %v252, %v1712
      %v1714 = vpop.f32.mrf.mxu0
      %v1715 = vpop.f32.mrf.mxu0
      %1716 = vdwg.mxu0
      %1717 = vmatprep.subr.bf16.mxu0 %v1591
      %1718 = vmatpush1.bf16.msra.mxu0 %v1590
      %1719 = vmatprep.subr.bf16.mxu0 %v1589
      %1720 = vmatpush1.bf16.msra.mxu0 %v1588
      %1721 = vmatprep.subr.bf16.mxu0 %v1587
      %1722 = vmatpush1.bf16.msra.mxu0 %v1586
      %1723 = vmatprep.subr.bf16.mxu0 %v1585
      %1724 = vmatpush1.bf16.msra.mxu0 %v1584
      %1725 = vmatprep.subr.bf16.mxu0 %v1583
      %1726 = vmatpush1.bf16.msra.mxu0 %v1582
      %1727 = vmatprep.subr.bf16.mxu0 %v1581
      %1728 = vmatpush1.bf16.msra.mxu0 %v1580
      %1729 = vmatprep.subr.bf16.mxu0 %v1579
      %1730 = vmatpush1.bf16.msra.mxu0 %v1578
      %1731 = vmatprep.subr.bf16.mxu0 %v1577
      %1732 = vmatpush1.bf16.msra.mxu0 %v1576
      %1733 = vmatprep.subr.bf16.mxu0 %v1607
      %1734 = vmatpush2.bf16.msra.mxu0 %v1606
      %1735 = vmatprep.subr.bf16.mxu0 %v1605
      %1736 = vmatpush2.bf16.msra.mxu0 %v1604
      %1737 = vmatprep.subr.bf16.mxu0 %v1603
      %1738 = vmatpush2.bf16.msra.mxu0 %v1602
      %1739 = vmatprep.subr.bf16.mxu0 %v1601
      %1740 = vmatpush2.bf16.msra.mxu0 %v1600
      %1741 = vmatprep.subr.bf16.mxu0 %v1599
      %1742 = vmatpush2.bf16.msra.mxu0 %v1598
      %1743 = vmatprep.subr.bf16.mxu0 %v1597
      %1744 = vmatpush2.bf16.msra.mxu0 %v1596
      %1745 = vmatprep.subr.bf16.mxu0 %v1595
      %1746 = vmatpush2.bf16.msra.mxu0 %v1594
      %1747 = vmatprep.subr.bf16.mxu0 %v1593
      %1748 = vmatpush2.bf16.msra.mxu0 %v1592
      %1749 = vmatprep.mubr.bf16.mxu0 %v272
      %1750 = vmatmul.mubr.bf16.gmra.mxu0 %v270
      %v1751 = vpop.f32.mrf.mxu0
      %v1752 = vadd.f32 %v1711, %v1751
      %v1753 = vpop.f32.mrf.mxu0
      %v1754 = vadd.f32 %v1713, %v1753
      %v1755 = vpop.f32.mrf.mxu0
      %v1756 = vpop.f32.mrf.mxu0
      %1757 = vdwg.mxu0
      %1758 = vmatprep.subr.bf16.mxu0 0
      %1759 = vmatpush1.bf16.msra.mxu0 0
      %1760 = vmatprep.subr.bf16.mxu0 0
      %1761 = vmatpush1.bf16.msra.mxu0 0
      %1762 = vmatprep.subr.bf16.mxu0 0
      %1763 = vmatpush1.bf16.msra.mxu0 0
      %1764 = vmatprep.subr.bf16.mxu0 0
      %1765 = vmatpush1.bf16.msra.mxu0 0
      %1766 = vmatprep.subr.bf16.mxu0 0
      %1767 = vmatpush1.bf16.msra.mxu0 0
      %1768 = vmatprep.subr.bf16.mxu0 0
      %1769 = vmatpush1.bf16.msra.mxu0 0
      %1770 = vmatprep.subr.bf16.mxu0 0
      %1771 = vmatpush1.bf16.msra.mxu0 0
      %1772 = vmatprep.subr.bf16.mxu0 %v1609
      %1773 = vmatpush1.bf16.msra.mxu0 %v1608
      %1774 = vmatprep.subr.bf16.mxu0 0
      %1775 = vmatpush2.bf16.msra.mxu0 0
      %1776 = vmatprep.subr.bf16.mxu0 0
      %1777 = vmatpush2.bf16.msra.mxu0 0
      %1778 = vmatprep.subr.bf16.mxu0 0
      %1779 = vmatpush2.bf16.msra.mxu0 0
      %1780 = vmatprep.subr.bf16.mxu0 0
      %1781 = vmatpush2.bf16.msra.mxu0 0
      %1782 = vmatprep.subr.bf16.mxu0 0
      %1783 = vmatpush2.bf16.msra.mxu0 0
      %1784 = vmatprep.subr.bf16.mxu0 0
      %1785 = vmatpush2.bf16.msra.mxu0 0
      %1786 = vmatprep.subr.bf16.mxu0 0
      %1787 = vmatpush2.bf16.msra.mxu0 0
      %1788 = vmatprep.subr.bf16.mxu0 0
      %1789 = vmatpush2.bf16.msra.mxu0 0
      %1790 = vmatprep.mubr.bf16.mxu0 0
      %1791 = vmatmul.mubr.bf16.gmra.mxu0 %v616
      %v1792 = vpop.f32.mrf.mxu0
      %v1793 = vadd.f32 %v1752, %v1792
      %v1794 = vpop.f32.mrf.mxu0
      %v1795 = vadd.f32 %v1754, %v1794
      %v1796 = vpop.f32.mrf.mxu0
      %v1797 = vpop.f32.mrf.mxu0
      %1798 = vdwg.mxu0
      %v1799 = vmax.f32 %v1793, 0.0
      %v1800 = vmax.f32 %v1795, 0.0
      %v1803 = vcombine.low %v1799, %v1800
      %s1805 = scalar_lea.vmem %s177, 16
      %1806 = vst.msk [vmem:[%s1805] sm:$0xff] %vm749, %v1803
      %s1807 = scalar_lea.vmem %s170, 1584
      %v1808 = vld [vmem:[%s1807] sm:$0xff]
      %v1809 = vld [vmem:[%s1807 + $0x8] sm:$0xff]
      %v1810 = vld [vmem:[%s1807 + $0x10] sm:$0xff]
      %v1811 = vld [vmem:[%s1807 + $0x18] sm:$0xff]
      %v1812 = vld [vmem:[%s1807 + $0x20] sm:$0xff]
      %v1813 = vld [vmem:[%s1807 + $0x28] sm:$0xff]
      %v1814 = vld [vmem:[%s1807 + $0x30] sm:$0xff]
      %v1815 = vld [vmem:[%s1807 + $0x38] sm:$0xff]
      %v1816 = vld [vmem:[%s1807 + $0x40] sm:$0xff]
      %v1817 = vld [vmem:[%s1807 + $0x48] sm:$0xff]
      %v1818 = vld [vmem:[%s1807 + $0x50] sm:$0xff]
      %v1819 = vld [vmem:[%s1807 + $0x58] sm:$0xff]
      %v1820 = vld [vmem:[%s1807 + $0x60] sm:$0xff]
      %v1821 = vld [vmem:[%s1807 + $0x68] sm:$0xff]
      %v1822 = vld [vmem:[%s1807 + $0x70] sm:$0xff]
      %v1823 = vld [vmem:[%s1807 + $0x78] sm:$0xff]
      %v1824 = vld [vmem:[%s1807 + $0x80] sm:$0xff]
      %v1825 = vld [vmem:[%s1807 + $0x88] sm:$0xff]
      %v1826 = vld [vmem:[%s1807 + $0x90] sm:$0xff]
      %v1827 = vld [vmem:[%s1807 + $0x98] sm:$0xff]
      %v1828 = vld [vmem:[%s1807 + $0xa0] sm:$0xff]
      %v1829 = vld [vmem:[%s1807 + $0xa8] sm:$0xff]
      %v1830 = vld [vmem:[%s1807 + $0xb0] sm:$0xff]
      %v1831 = vld [vmem:[%s1807 + $0xb8] sm:$0xff]
      %v1832 = vld [vmem:[%s1807 + $0xc0] sm:$0xff]
      %v1833 = vld [vmem:[%s1807 + $0xc8] sm:$0xff]
      %v1834 = vld [vmem:[%s1807 + $0xd0] sm:$0xff]
      %v1835 = vld [vmem:[%s1807 + $0xd8] sm:$0xff]
      %v1836 = vld [vmem:[%s1807 + $0xe0] sm:$0xff]
      %v1837 = vld [vmem:[%s1807 + $0xe8] sm:$0xff]
      %v1838 = vld [vmem:[%s1807 + $0xf0] sm:$0xff]
      %v1839 = vld [vmem:[%s1807 + $0xf8] sm:$0xff]
      %v1840 = vld [vmem:[%s1807 + $0x100] sm:$0xff]
      %v1841 = vld [vmem:[%s1807 + $0x108] sm:$0xff]
      %v1842 = vld [vmem:[%s1807 + $0x110] sm:$0xff]
      %v1843 = vld [vmem:[%s1807 + $0x118] sm:$0xff]
      %v1844 = vld [vmem:[%s1807 + $0x120] sm:$0xff]
      %v1845 = vld [vmem:[%s1807 + $0x128] sm:$0xff]
      %v1846 = vld [vmem:[%s1807 + $0x130] sm:$0xff]
      %v1847 = vld [vmem:[%s1807 + $0x138] sm:$0xff]
      %v1848 = vld [vmem:[%s1807 + $0x140] sm:$0xff]
      %v1849 = vld [vmem:[%s1807 + $0x148] sm:$0xff]
      %v1850 = vld [vmem:[%s1807 + $0x150] sm:$0xff]
      %v1851 = vld [vmem:[%s1807 + $0x158] sm:$0xff]
      %v1852 = vld [vmem:[%s1807 + $0x160] sm:$0xff]
      %v1853 = vld [vmem:[%s1807 + $0x168] sm:$0xff]
      %v1854 = vld [vmem:[%s1807 + $0x170] sm:$0xff]
      %v1855 = vld [vmem:[%s1807 + $0x178] sm:$0xff]
      %v1856 = vld [vmem:[%s1807 + $0x180] sm:$0xff]
      %v1857 = vld [vmem:[%s1807 + $0x188] sm:$0xff]
      %v1858 = vld [vmem:[%s1807 + $0x190] sm:$0xff]
      %v1859 = vld [vmem:[%s1807 + $0x198] sm:$0xff]
      %v1860 = vld [vmem:[%s1807 + $0x1a0] sm:$0xff]
      %v1861 = vld [vmem:[%s1807 + $0x1a8] sm:$0xff]
      %v1862 = vld [vmem:[%s1807 + $0x1b0] sm:$0xff]
      %v1863 = vld [vmem:[%s1807 + $0x1b8] sm:$0xff]
      %v1864 = vld [vmem:[%s1807 + $0x1c0] sm:$0xff]
      %v1865 = vld [vmem:[%s1807 + $0x1c8] sm:$0xff]
      %v1866 = vld [vmem:[%s1807 + $0x1d0] sm:$0xff]
      %v1867 = vld [vmem:[%s1807 + $0x1d8] sm:$0xff]
      %v1868 = vld [vmem:[%s1807 + $0x1e0] sm:$0xff]
      %v1869 = vld [vmem:[%s1807 + $0x1e8] sm:$0xff]
      %v1870 = vld [vmem:[%s1807 + $0x1f0] sm:$0xff]
      %v1871 = vld [vmem:[%s1807 + $0x1f8] sm:$0xff]
      %v1872 = vld [vmem:[%s1807 + $0x200] sm:$0xff]
      %v1873 = vld [vmem:[%s1807 + $0x208] sm:$0xff]
      %v1940 = vunpack.c.l.b16 %v1808
      %v1941 = vunpack.c.h.b16 %v1808
      %v1942 = vunpack.c.l.b16 %v1809
      %v1943 = vunpack.c.h.b16 %v1809
      %v1944 = vunpack.c.l.b16 %v1810
      %v1945 = vunpack.c.h.b16 %v1810
      %v1946 = vunpack.c.l.b16 %v1811
      %v1947 = vunpack.c.h.b16 %v1811
      %v1948 = vunpack.c.l.b16 %v1812
      %v1949 = vunpack.c.h.b16 %v1812
      %v1950 = vunpack.c.l.b16 %v1813
      %v1951 = vunpack.c.h.b16 %v1813
      %v1952 = vunpack.c.l.b16 %v1814
      %v1953 = vunpack.c.h.b16 %v1814
      %v1954 = vunpack.c.l.b16 %v1815
      %v1955 = vunpack.c.h.b16 %v1815
      %v1956 = vunpack.c.l.b16 %v1816
      %v1957 = vunpack.c.h.b16 %v1816
      %v1958 = vunpack.c.l.b16 %v1817
      %v1959 = vunpack.c.h.b16 %v1817
      %v1960 = vunpack.c.l.b16 %v1818
      %v1961 = vunpack.c.h.b16 %v1818
      %v1962 = vunpack.c.l.b16 %v1819
      %v1963 = vunpack.c.h.b16 %v1819
      %v1964 = vunpack.c.l.b16 %v1820
      %v1965 = vunpack.c.h.b16 %v1820
      %v1966 = vunpack.c.l.b16 %v1821
      %v1967 = vunpack.c.h.b16 %v1821
      %v1968 = vunpack.c.l.b16 %v1822
      %v1969 = vunpack.c.h.b16 %v1822
      %v1970 = vunpack.c.l.b16 %v1823
      %v1971 = vunpack.c.h.b16 %v1823
      %v1972 = vunpack.c.l.b16 %v1824
      %v1973 = vunpack.c.h.b16 %v1824
      %v1974 = vunpack.c.l.b16 %v1825
      %v1975 = vunpack.c.h.b16 %v1825
      %v1976 = vunpack.c.l.b16 %v1826
      %v1977 = vunpack.c.h.b16 %v1826
      %v1978 = vunpack.c.l.b16 %v1827
      %v1979 = vunpack.c.h.b16 %v1827
      %v1980 = vunpack.c.l.b16 %v1828
      %v1981 = vunpack.c.h.b16 %v1828
      %v1982 = vunpack.c.l.b16 %v1829
      %v1983 = vunpack.c.h.b16 %v1829
      %v1984 = vunpack.c.l.b16 %v1830
      %v1985 = vunpack.c.h.b16 %v1830
      %v1986 = vunpack.c.l.b16 %v1831
      %v1987 = vunpack.c.h.b16 %v1831
      %v1988 = vunpack.c.l.b16 %v1832
      %v1989 = vunpack.c.h.b16 %v1832
      %v1990 = vunpack.c.l.b16 %v1833
      %v1991 = vunpack.c.h.b16 %v1833
      %v1992 = vunpack.c.l.b16 %v1834
      %v1993 = vunpack.c.h.b16 %v1834
      %v1994 = vunpack.c.l.b16 %v1835
      %v1995 = vunpack.c.h.b16 %v1835
      %v1996 = vunpack.c.l.b16 %v1836
      %v1997 = vunpack.c.h.b16 %v1836
      %v1998 = vunpack.c.l.b16 %v1837
      %v1999 = vunpack.c.h.b16 %v1837
      %v2000 = vunpack.c.l.b16 %v1838
      %v2001 = vunpack.c.h.b16 %v1838
      %v2002 = vunpack.c.l.b16 %v1839
      %v2003 = vunpack.c.h.b16 %v1839
      %v2004 = vunpack.c.l.b16 %v1840
      %v2005 = vunpack.c.h.b16 %v1840
      %v2006 = vunpack.c.l.b16 %v1841
      %v2007 = vunpack.c.h.b16 %v1841
      %v2008 = vunpack.c.l.b16 %v1842
      %v2009 = vunpack.c.h.b16 %v1842
      %v2010 = vunpack.c.l.b16 %v1843
      %v2011 = vunpack.c.h.b16 %v1843
      %v2012 = vunpack.c.l.b16 %v1844
      %v2013 = vunpack.c.h.b16 %v1844
      %v2014 = vunpack.c.l.b16 %v1845
      %v2015 = vunpack.c.h.b16 %v1845
      %v2016 = vunpack.c.l.b16 %v1846
      %v2017 = vunpack.c.h.b16 %v1846
      %v2018 = vunpack.c.l.b16 %v1847
      %v2019 = vunpack.c.h.b16 %v1847
      %v2020 = vunpack.c.l.b16 %v1848
      %v2021 = vunpack.c.h.b16 %v1848
      %v2022 = vunpack.c.l.b16 %v1849
      %v2023 = vunpack.c.h.b16 %v1849
      %v2024 = vunpack.c.l.b16 %v1850
      %v2025 = vunpack.c.h.b16 %v1850
      %v2026 = vunpack.c.l.b16 %v1851
      %v2027 = vunpack.c.h.b16 %v1851
      %v2028 = vunpack.c.l.b16 %v1852
      %v2029 = vunpack.c.h.b16 %v1852
      %v2030 = vunpack.c.l.b16 %v1853
      %v2031 = vunpack.c.h.b16 %v1853
      %v2032 = vunpack.c.l.b16 %v1854
      %v2033 = vunpack.c.h.b16 %v1854
      %v2034 = vunpack.c.l.b16 %v1855
      %v2035 = vunpack.c.h.b16 %v1855
      %v2036 = vunpack.c.l.b16 %v1856
      %v2037 = vunpack.c.h.b16 %v1856
      %v2038 = vunpack.c.l.b16 %v1857
      %v2039 = vunpack.c.h.b16 %v1857
      %v2040 = vunpack.c.l.b16 %v1858
      %v2041 = vunpack.c.h.b16 %v1858
      %v2042 = vunpack.c.l.b16 %v1859
      %v2043 = vunpack.c.h.b16 %v1859
      %v2044 = vunpack.c.l.b16 %v1860
      %v2045 = vunpack.c.h.b16 %v1860
      %v2046 = vunpack.c.l.b16 %v1861
      %v2047 = vunpack.c.h.b16 %v1861
      %v2048 = vunpack.c.l.b16 %v1862
      %v2049 = vunpack.c.h.b16 %v1862
      %v2050 = vunpack.c.l.b16 %v1863
      %v2051 = vunpack.c.h.b16 %v1863
      %v2052 = vunpack.c.l.b16 %v1864
      %v2053 = vunpack.c.h.b16 %v1864
      %v2054 = vunpack.c.l.b16 %v1865
      %v2055 = vunpack.c.h.b16 %v1865
      %v2056 = vunpack.c.l.b16 %v1866
      %v2057 = vunpack.c.h.b16 %v1866
      %v2058 = vunpack.c.l.b16 %v1867
      %v2059 = vunpack.c.h.b16 %v1867
      %v2060 = vunpack.c.l.b16 %v1868
      %v2061 = vunpack.c.h.b16 %v1868
      %v2062 = vunpack.c.l.b16 %v1869
      %v2063 = vunpack.c.h.b16 %v1869
      %v2064 = vunpack.c.l.b16 %v1870
      %v2065 = vunpack.c.h.b16 %v1870
      %v2066 = vunpack.c.l.b16 %v1871
      %v2067 = vunpack.c.h.b16 %v1871
      %v2068 = vunpack.c.l.b16 %v1872
      %v2069 = vunpack.c.h.b16 %v1872
      %v2070 = vunpack.c.l.b16 %v1873
      %v2071 = vunpack.c.h.b16 %v1873
      %v2072 = vpack.c.b16 %v1942, %v1940
      %v2073 = vpack.c.b16 %v1943, %v1941
      %v2074 = vpack.c.b16 %v1946, %v1944
      %v2075 = vpack.c.b16 %v1947, %v1945
      %v2076 = vpack.c.b16 %v1950, %v1948
      %v2077 = vpack.c.b16 %v1951, %v1949
      %v2078 = vpack.c.b16 %v1954, %v1952
      %v2079 = vpack.c.b16 %v1955, %v1953
      %v2080 = vpack.c.b16 %v1958, %v1956
      %v2081 = vpack.c.b16 %v1959, %v1957
      %v2082 = vpack.c.b16 %v1962, %v1960
      %v2083 = vpack.c.b16 %v1963, %v1961
      %v2084 = vpack.c.b16 %v1966, %v1964
      %v2085 = vpack.c.b16 %v1967, %v1965
      %v2086 = vpack.c.b16 %v1970, %v1968
      %v2087 = vpack.c.b16 %v1971, %v1969
      %v2088 = vpack.c.b16 %v1974, %v1972
      %v2089 = vpack.c.b16 %v1975, %v1973
      %v2090 = vpack.c.b16 %v1978, %v1976
      %v2091 = vpack.c.b16 %v1979, %v1977
      %v2092 = vpack.c.b16 %v1982, %v1980
      %v2093 = vpack.c.b16 %v1983, %v1981
      %v2094 = vpack.c.b16 %v1986, %v1984
      %v2095 = vpack.c.b16 %v1987, %v1985
      %v2096 = vpack.c.b16 %v1990, %v1988
      %v2097 = vpack.c.b16 %v1991, %v1989
      %v2098 = vpack.c.b16 %v1994, %v1992
      %v2099 = vpack.c.b16 %v1995, %v1993
      %v2100 = vpack.c.b16 %v1998, %v1996
      %v2101 = vpack.c.b16 %v1999, %v1997
      %v2102 = vpack.c.b16 %v2002, %v2000
      %v2103 = vpack.c.b16 %v2003, %v2001
      %v2104 = vpack.c.b16 %v2006, %v2004
      %v2105 = vpack.c.b16 %v2007, %v2005
      %v2106 = vpack.c.b16 %v2010, %v2008
      %v2107 = vpack.c.b16 %v2011, %v2009
      %v2108 = vpack.c.b16 %v2014, %v2012
      %v2109 = vpack.c.b16 %v2015, %v2013
      %v2110 = vpack.c.b16 %v2018, %v2016
      %v2111 = vpack.c.b16 %v2019, %v2017
      %v2112 = vpack.c.b16 %v2022, %v2020
      %v2113 = vpack.c.b16 %v2023, %v2021
      %v2114 = vpack.c.b16 %v2026, %v2024
      %v2115 = vpack.c.b16 %v2027, %v2025
      %v2116 = vpack.c.b16 %v2030, %v2028
      %v2117 = vpack.c.b16 %v2031, %v2029
      %v2118 = vpack.c.b16 %v2034, %v2032
      %v2119 = vpack.c.b16 %v2035, %v2033
      %v2120 = vpack.c.b16 %v2038, %v2036
      %v2121 = vpack.c.b16 %v2039, %v2037
      %v2122 = vpack.c.b16 %v2042, %v2040
      %v2123 = vpack.c.b16 %v2043, %v2041
      %v2124 = vpack.c.b16 %v2046, %v2044
      %v2125 = vpack.c.b16 %v2047, %v2045
      %v2126 = vpack.c.b16 %v2050, %v2048
      %v2127 = vpack.c.b16 %v2051, %v2049
      %v2128 = vpack.c.b16 %v2054, %v2052
      %v2129 = vpack.c.b16 %v2055, %v2053
      %v2130 = vpack.c.b16 %v2058, %v2056
      %v2131 = vpack.c.b16 %v2059, %v2057
      %v2132 = vpack.c.b16 %v2062, %v2060
      %v2133 = vpack.c.b16 %v2063, %v2061
      %v2134 = vpack.c.b16 %v2066, %v2064
      %v2135 = vpack.c.b16 %v2067, %v2065
      %v2136 = vpack.c.b16 %v2070, %v2068
      %v2137 = vpack.c.b16 %v2071, %v2069
      %2204 = vmatprep.subr.bf16.mxu0 %v2087
      %2205 = vmatpush1.bf16.msra.mxu0 %v2086
      %2206 = vmatprep.subr.bf16.mxu0 %v2085
      %2207 = vmatpush1.bf16.msra.mxu0 %v2084
      %2208 = vmatprep.subr.bf16.mxu0 %v2083
      %2209 = vmatpush1.bf16.msra.mxu0 %v2082
      %2210 = vmatprep.subr.bf16.mxu0 %v2081
      %2211 = vmatpush1.bf16.msra.mxu0 %v2080
      %2212 = vmatprep.subr.bf16.mxu0 %v2079
      %2213 = vmatpush1.bf16.msra.mxu0 %v2078
      %2214 = vmatprep.subr.bf16.mxu0 %v2077
      %2215 = vmatpush1.bf16.msra.mxu0 %v2076
      %2216 = vmatprep.subr.bf16.mxu0 %v2075
      %2217 = vmatpush1.bf16.msra.mxu0 %v2074
      %2218 = vmatprep.subr.bf16.mxu0 %v2073
      %2219 = vmatpush1.bf16.msra.mxu0 %v2072
      %2220 = vmatprep.subr.bf16.mxu0 %v2103
      %2221 = vmatpush2.bf16.msra.mxu0 %v2102
      %2222 = vmatprep.subr.bf16.mxu0 %v2101
      %2223 = vmatpush2.bf16.msra.mxu0 %v2100
      %2224 = vmatprep.subr.bf16.mxu0 %v2099
      %2225 = vmatpush2.bf16.msra.mxu0 %v2098
      %2226 = vmatprep.subr.bf16.mxu0 %v2097
      %2227 = vmatpush2.bf16.msra.mxu0 %v2096
      %2228 = vmatprep.subr.bf16.mxu0 %v2095
      %2229 = vmatpush2.bf16.msra.mxu0 %v2094
      %2230 = vmatprep.subr.bf16.mxu0 %v2093
      %2231 = vmatpush2.bf16.msra.mxu0 %v2092
      %2232 = vmatprep.subr.bf16.mxu0 %v2091
      %2233 = vmatpush2.bf16.msra.mxu0 %v2090
      %2234 = vmatprep.subr.bf16.mxu0 %v2089
      %2235 = vmatpush2.bf16.msra.mxu0 %v2088
      %2236 = vmatprep.mubr.bf16.mxu0 %v271
      %2237 = vmatmul.mubr.bf16.gmra.mxu0 %v263
      %v2238 = vpop.f32.mrf.mxu0
      %v2239 = vadd.f32 %v252, %v2238
      %v2240 = vpop.f32.mrf.mxu0
      %v2241 = vadd.f32 %v252, %v2240
      %v2242 = vpop.f32.mrf.mxu0
      %v2243 = vpop.f32.mrf.mxu0
      %2244 = vdwg.mxu0
      %2245 = vmatprep.subr.bf16.mxu0 %v2119
      %2246 = vmatpush1.bf16.msra.mxu0 %v2118
      %2247 = vmatprep.subr.bf16.mxu0 %v2117
      %2248 = vmatpush1.bf16.msra.mxu0 %v2116
      %2249 = vmatprep.subr.bf16.mxu0 %v2115
      %2250 = vmatpush1.bf16.msra.mxu0 %v2114
      %2251 = vmatprep.subr.bf16.mxu0 %v2113
      %2252 = vmatpush1.bf16.msra.mxu0 %v2112
      %2253 = vmatprep.subr.bf16.mxu0 %v2111
      %2254 = vmatpush1.bf16.msra.mxu0 %v2110
      %2255 = vmatprep.subr.bf16.mxu0 %v2109
      %2256 = vmatpush1.bf16.msra.mxu0 %v2108
      %2257 = vmatprep.subr.bf16.mxu0 %v2107
      %2258 = vmatpush1.bf16.msra.mxu0 %v2106
      %2259 = vmatprep.subr.bf16.mxu0 %v2105
      %2260 = vmatpush1.bf16.msra.mxu0 %v2104
      %2261 = vmatprep.subr.bf16.mxu0 %v2135
      %2262 = vmatpush2.bf16.msra.mxu0 %v2134
      %2263 = vmatprep.subr.bf16.mxu0 %v2133
      %2264 = vmatpush2.bf16.msra.mxu0 %v2132
      %2265 = vmatprep.subr.bf16.mxu0 %v2131
      %2266 = vmatpush2.bf16.msra.mxu0 %v2130
      %2267 = vmatprep.subr.bf16.mxu0 %v2129
      %2268 = vmatpush2.bf16.msra.mxu0 %v2128
      %2269 = vmatprep.subr.bf16.mxu0 %v2127
      %2270 = vmatpush2.bf16.msra.mxu0 %v2126
      %2271 = vmatprep.subr.bf16.mxu0 %v2125
      %2272 = vmatpush2.bf16.msra.mxu0 %v2124
      %2273 = vmatprep.subr.bf16.mxu0 %v2123
      %2274 = vmatpush2.bf16.msra.mxu0 %v2122
      %2275 = vmatprep.subr.bf16.mxu0 %v2121
      %2276 = vmatpush2.bf16.msra.mxu0 %v2120
      %2277 = vmatprep.mubr.bf16.mxu0 %v272
      %2278 = vmatmul.mubr.bf16.gmra.mxu0 %v270
      %v2279 = vpop.f32.mrf.mxu0
      %v2280 = vadd.f32 %v2239, %v2279
      %v2281 = vpop.f32.mrf.mxu0
      %v2282 = vadd.f32 %v2241, %v2281
      %v2283 = vpop.f32.mrf.mxu0
      %v2284 = vpop.f32.mrf.mxu0
      %2285 = vdwg.mxu0
      %2286 = vmatprep.subr.bf16.mxu0 0
      %2287 = vmatpush1.bf16.msra.mxu0 0
      %2288 = vmatprep.subr.bf16.mxu0 0
      %2289 = vmatpush1.bf16.msra.mxu0 0
      %2290 = vmatprep.subr.bf16.mxu0 0
      %2291 = vmatpush1.bf16.msra.mxu0 0
      %2292 = vmatprep.subr.bf16.mxu0 0
      %2293 = vmatpush1.bf16.msra.mxu0 0
      %2294 = vmatprep.subr.bf16.mxu0 0
      %2295 = vmatpush1.bf16.msra.mxu0 0
      %2296 = vmatprep.subr.bf16.mxu0 0
      %2297 = vmatpush1.bf16.msra.mxu0 0
      %2298 = vmatprep.subr.bf16.mxu0 0
      %2299 = vmatpush1.bf16.msra.mxu0 0
      %2300 = vmatprep.subr.bf16.mxu0 %v2137
      %2301 = vmatpush1.bf16.msra.mxu0 %v2136
      %2302 = vmatprep.subr.bf16.mxu0 0
      %2303 = vmatpush2.bf16.msra.mxu0 0
      %2304 = vmatprep.subr.bf16.mxu0 0
      %2305 = vmatpush2.bf16.msra.mxu0 0
      %2306 = vmatprep.subr.bf16.mxu0 0
      %2307 = vmatpush2.bf16.msra.mxu0 0
      %2308 = vmatprep.subr.bf16.mxu0 0
      %2309 = vmatpush2.bf16.msra.mxu0 0
      %2310 = vmatprep.subr.bf16.mxu0 0
      %2311 = vmatpush2.bf16.msra.mxu0 0
      %2312 = vmatprep.subr.bf16.mxu0 0
      %2313 = vmatpush2.bf16.msra.mxu0 0
      %2314 = vmatprep.subr.bf16.mxu0 0
      %2315 = vmatpush2.bf16.msra.mxu0 0
      %2316 = vmatprep.subr.bf16.mxu0 0
      %2317 = vmatpush2.bf16.msra.mxu0 0
      %2318 = vmatprep.mubr.bf16.mxu0 0
      %2319 = vmatmul.mubr.bf16.gmra.mxu0 %v616
      %v2320 = vpop.f32.mrf.mxu0
      %v2321 = vadd.f32 %v2280, %v2320
      %v2322 = vpop.f32.mrf.mxu0
      %v2323 = vadd.f32 %v2282, %v2322
      %v2324 = vpop.f32.mrf.mxu0
      %v2325 = vpop.f32.mrf.mxu0
      %2326 = vdwg.mxu0
      %v2327 = vmax.f32 %v2321, 0.0
      %v2328 = vmax.f32 %v2323, 0.0
      %v2331 = vcombine.low %v2327, %v2328
      %s2333 = scalar_lea.vmem %s177, 24
      %2334 = vst.msk [vmem:[%s2333] sm:$0xff] %vm749, %v2331
      %s2335 = scalar_lea.vmem %s170, 2112
      %v2336 = vld [vmem:[%s2335] sm:$0xff]
      %v2337 = vld [vmem:[%s2335 + $0x8] sm:$0xff]
      %v2338 = vld [vmem:[%s2335 + $0x10] sm:$0xff]
      %v2339 = vld [vmem:[%s2335 + $0x18] sm:$0xff]
      %v2340 = vld [vmem:[%s2335 + $0x20] sm:$0xff]
      %v2341 = vld [vmem:[%s2335 + $0x28] sm:$0xff]
      %v2342 = vld [vmem:[%s2335 + $0x30] sm:$0xff]
      %v2343 = vld [vmem:[%s2335 + $0x38] sm:$0xff]
      %v2344 = vld [vmem:[%s2335 + $0x40] sm:$0xff]
      %v2345 = vld [vmem:[%s2335 + $0x48] sm:$0xff]
      %v2346 = vld [vmem:[%s2335 + $0x50] sm:$0xff]
      %v2347 = vld [vmem:[%s2335 + $0x58] sm:$0xff]
      %v2348 = vld [vmem:[%s2335 + $0x60] sm:$0xff]
      %v2349 = vld [vmem:[%s2335 + $0x68] sm:$0xff]
      %v2350 = vld [vmem:[%s2335 + $0x70] sm:$0xff]
      %v2351 = vld [vmem:[%s2335 + $0x78] sm:$0xff]
      %v2352 = vld [vmem:[%s2335 + $0x80] sm:$0xff]
      %v2353 = vld [vmem:[%s2335 + $0x88] sm:$0xff]
      %v2354 = vld [vmem:[%s2335 + $0x90] sm:$0xff]
      %v2355 = vld [vmem:[%s2335 + $0x98] sm:$0xff]
      %v2356 = vld [vmem:[%s2335 + $0xa0] sm:$0xff]
      %v2357 = vld [vmem:[%s2335 + $0xa8] sm:$0xff]
      %v2358 = vld [vmem:[%s2335 + $0xb0] sm:$0xff]
      %v2359 = vld [vmem:[%s2335 + $0xb8] sm:$0xff]
      %v2360 = vld [vmem:[%s2335 + $0xc0] sm:$0xff]
      %v2361 = vld [vmem:[%s2335 + $0xc8] sm:$0xff]
      %v2362 = vld [vmem:[%s2335 + $0xd0] sm:$0xff]
      %v2363 = vld [vmem:[%s2335 + $0xd8] sm:$0xff]
      %v2364 = vld [vmem:[%s2335 + $0xe0] sm:$0xff]
      %v2365 = vld [vmem:[%s2335 + $0xe8] sm:$0xff]
      %v2366 = vld [vmem:[%s2335 + $0xf0] sm:$0xff]
      %v2367 = vld [vmem:[%s2335 + $0xf8] sm:$0xff]
      %v2368 = vld [vmem:[%s2335 + $0x100] sm:$0xff]
      %v2369 = vld [vmem:[%s2335 + $0x108] sm:$0xff]
      %v2370 = vld [vmem:[%s2335 + $0x110] sm:$0xff]
      %v2371 = vld [vmem:[%s2335 + $0x118] sm:$0xff]
      %v2372 = vld [vmem:[%s2335 + $0x120] sm:$0xff]
      %v2373 = vld [vmem:[%s2335 + $0x128] sm:$0xff]
      %v2374 = vld [vmem:[%s2335 + $0x130] sm:$0xff]
      %v2375 = vld [vmem:[%s2335 + $0x138] sm:$0xff]
      %v2376 = vld [vmem:[%s2335 + $0x140] sm:$0xff]
      %v2377 = vld [vmem:[%s2335 + $0x148] sm:$0xff]
      %v2378 = vld [vmem:[%s2335 + $0x150] sm:$0xff]
      %v2379 = vld [vmem:[%s2335 + $0x158] sm:$0xff]
      %v2380 = vld [vmem:[%s2335 + $0x160] sm:$0xff]
      %v2381 = vld [vmem:[%s2335 + $0x168] sm:$0xff]
      %v2382 = vld [vmem:[%s2335 + $0x170] sm:$0xff]
      %v2383 = vld [vmem:[%s2335 + $0x178] sm:$0xff]
      %v2384 = vld [vmem:[%s2335 + $0x180] sm:$0xff]
      %v2385 = vld [vmem:[%s2335 + $0x188] sm:$0xff]
      %v2386 = vld [vmem:[%s2335 + $0x190] sm:$0xff]
      %v2387 = vld [vmem:[%s2335 + $0x198] sm:$0xff]
      %v2388 = vld [vmem:[%s2335 + $0x1a0] sm:$0xff]
      %v2389 = vld [vmem:[%s2335 + $0x1a8] sm:$0xff]
      %v2390 = vld [vmem:[%s2335 + $0x1b0] sm:$0xff]
      %v2391 = vld [vmem:[%s2335 + $0x1b8] sm:$0xff]
      %v2392 = vld [vmem:[%s2335 + $0x1c0] sm:$0xff]
      %v2393 = vld [vmem:[%s2335 + $0x1c8] sm:$0xff]
      %v2394 = vld [vmem:[%s2335 + $0x1d0] sm:$0xff]
      %v2395 = vld [vmem:[%s2335 + $0x1d8] sm:$0xff]
      %v2396 = vld [vmem:[%s2335 + $0x1e0] sm:$0xff]
      %v2397 = vld [vmem:[%s2335 + $0x1e8] sm:$0xff]
      %v2398 = vld [vmem:[%s2335 + $0x1f0] sm:$0xff]
      %v2399 = vld [vmem:[%s2335 + $0x1f8] sm:$0xff]
      %v2400 = vld [vmem:[%s2335 + $0x200] sm:$0xff]
      %v2401 = vld [vmem:[%s2335 + $0x208] sm:$0xff]
      %v2468 = vunpack.c.l.b16 %v2336
      %v2469 = vunpack.c.h.b16 %v2336
      %v2470 = vunpack.c.l.b16 %v2337
      %v2471 = vunpack.c.h.b16 %v2337
      %v2472 = vunpack.c.l.b16 %v2338
      %v2473 = vunpack.c.h.b16 %v2338
      %v2474 = vunpack.c.l.b16 %v2339
      %v2475 = vunpack.c.h.b16 %v2339
      %v2476 = vunpack.c.l.b16 %v2340
      %v2477 = vunpack.c.h.b16 %v2340
      %v2478 = vunpack.c.l.b16 %v2341
      %v2479 = vunpack.c.h.b16 %v2341
      %v2480 = vunpack.c.l.b16 %v2342
      %v2481 = vunpack.c.h.b16 %v2342
      %v2482 = vunpack.c.l.b16 %v2343
      %v2483 = vunpack.c.h.b16 %v2343
      %v2484 = vunpack.c.l.b16 %v2344
      %v2485 = vunpack.c.h.b16 %v2344
      %v2486 = vunpack.c.l.b16 %v2345
      %v2487 = vunpack.c.h.b16 %v2345
      %v2488 = vunpack.c.l.b16 %v2346
      %v2489 = vunpack.c.h.b16 %v2346
      %v2490 = vunpack.c.l.b16 %v2347
      %v2491 = vunpack.c.h.b16 %v2347
      %v2492 = vunpack.c.l.b16 %v2348
      %v2493 = vunpack.c.h.b16 %v2348
      %v2494 = vunpack.c.l.b16 %v2349
      %v2495 = vunpack.c.h.b16 %v2349
      %v2496 = vunpack.c.l.b16 %v2350
      %v2497 = vunpack.c.h.b16 %v2350
      %v2498 = vunpack.c.l.b16 %v2351
      %v2499 = vunpack.c.h.b16 %v2351
      %v2500 = vunpack.c.l.b16 %v2352
      %v2501 = vunpack.c.h.b16 %v2352
      %v2502 = vunpack.c.l.b16 %v2353
      %v2503 = vunpack.c.h.b16 %v2353
      %v2504 = vunpack.c.l.b16 %v2354
      %v2505 = vunpack.c.h.b16 %v2354
      %v2506 = vunpack.c.l.b16 %v2355
      %v2507 = vunpack.c.h.b16 %v2355
      %v2508 = vunpack.c.l.b16 %v2356
      %v2509 = vunpack.c.h.b16 %v2356
      %v2510 = vunpack.c.l.b16 %v2357
      %v2511 = vunpack.c.h.b16 %v2357
      %v2512 = vunpack.c.l.b16 %v2358
      %v2513 = vunpack.c.h.b16 %v2358
      %v2514 = vunpack.c.l.b16 %v2359
      %v2515 = vunpack.c.h.b16 %v2359
      %v2516 = vunpack.c.l.b16 %v2360
      %v2517 = vunpack.c.h.b16 %v2360
      %v2518 = vunpack.c.l.b16 %v2361
      %v2519 = vunpack.c.h.b16 %v2361
      %v2520 = vunpack.c.l.b16 %v2362
      %v2521 = vunpack.c.h.b16 %v2362
      %v2522 = vunpack.c.l.b16 %v2363
      %v2523 = vunpack.c.h.b16 %v2363
      %v2524 = vunpack.c.l.b16 %v2364
      %v2525 = vunpack.c.h.b16 %v2364
      %v2526 = vunpack.c.l.b16 %v2365
      %v2527 = vunpack.c.h.b16 %v2365
      %v2528 = vunpack.c.l.b16 %v2366
      %v2529 = vunpack.c.h.b16 %v2366
      %v2530 = vunpack.c.l.b16 %v2367
      %v2531 = vunpack.c.h.b16 %v2367
      %v2532 = vunpack.c.l.b16 %v2368
      %v2533 = vunpack.c.h.b16 %v2368
      %v2534 = vunpack.c.l.b16 %v2369
      %v2535 = vunpack.c.h.b16 %v2369
      %v2536 = vunpack.c.l.b16 %v2370
      %v2537 = vunpack.c.h.b16 %v2370
      %v2538 = vunpack.c.l.b16 %v2371
      %v2539 = vunpack.c.h.b16 %v2371
      %v2540 = vunpack.c.l.b16 %v2372
      %v2541 = vunpack.c.h.b16 %v2372
      %v2542 = vunpack.c.l.b16 %v2373
      %v2543 = vunpack.c.h.b16 %v2373
      %v2544 = vunpack.c.l.b16 %v2374
      %v2545 = vunpack.c.h.b16 %v2374
      %v2546 = vunpack.c.l.b16 %v2375
      %v2547 = vunpack.c.h.b16 %v2375
      %v2548 = vunpack.c.l.b16 %v2376
      %v2549 = vunpack.c.h.b16 %v2376
      %v2550 = vunpack.c.l.b16 %v2377
      %v2551 = vunpack.c.h.b16 %v2377
      %v2552 = vunpack.c.l.b16 %v2378
      %v2553 = vunpack.c.h.b16 %v2378
      %v2554 = vunpack.c.l.b16 %v2379
      %v2555 = vunpack.c.h.b16 %v2379
      %v2556 = vunpack.c.l.b16 %v2380
      %v2557 = vunpack.c.h.b16 %v2380
      %v2558 = vunpack.c.l.b16 %v2381
      %v2559 = vunpack.c.h.b16 %v2381
      %v2560 = vunpack.c.l.b16 %v2382
      %v2561 = vunpack.c.h.b16 %v2382
      %v2562 = vunpack.c.l.b16 %v2383
      %v2563 = vunpack.c.h.b16 %v2383
      %v2564 = vunpack.c.l.b16 %v2384
      %v2565 = vunpack.c.h.b16 %v2384
      %v2566 = vunpack.c.l.b16 %v2385
      %v2567 = vunpack.c.h.b16 %v2385
      %v2568 = vunpack.c.l.b16 %v2386
      %v2569 = vunpack.c.h.b16 %v2386
      %v2570 = vunpack.c.l.b16 %v2387
      %v2571 = vunpack.c.h.b16 %v2387
      %v2572 = vunpack.c.l.b16 %v2388
      %v2573 = vunpack.c.h.b16 %v2388
      %v2574 = vunpack.c.l.b16 %v2389
      %v2575 = vunpack.c.h.b16 %v2389
      %v2576 = vunpack.c.l.b16 %v2390
      %v2577 = vunpack.c.h.b16 %v2390
      %v2578 = vunpack.c.l.b16 %v2391
      %v2579 = vunpack.c.h.b16 %v2391
      %v2580 = vunpack.c.l.b16 %v2392
      %v2581 = vunpack.c.h.b16 %v2392
      %v2582 = vunpack.c.l.b16 %v2393
      %v2583 = vunpack.c.h.b16 %v2393
      %v2584 = vunpack.c.l.b16 %v2394
      %v2585 = vunpack.c.h.b16 %v2394
      %v2586 = vunpack.c.l.b16 %v2395
      %v2587 = vunpack.c.h.b16 %v2395
      %v2588 = vunpack.c.l.b16 %v2396
      %v2589 = vunpack.c.h.b16 %v2396
      %v2590 = vunpack.c.l.b16 %v2397
      %v2591 = vunpack.c.h.b16 %v2397
      %v2592 = vunpack.c.l.b16 %v2398
      %v2593 = vunpack.c.h.b16 %v2398
      %v2594 = vunpack.c.l.b16 %v2399
      %v2595 = vunpack.c.h.b16 %v2399
      %v2596 = vunpack.c.l.b16 %v2400
      %v2597 = vunpack.c.h.b16 %v2400
      %v2598 = vunpack.c.l.b16 %v2401
      %v2599 = vunpack.c.h.b16 %v2401
      %v2600 = vpack.c.b16 %v2470, %v2468
      %v2601 = vpack.c.b16 %v2471, %v2469
      %v2602 = vpack.c.b16 %v2474, %v2472
      %v2603 = vpack.c.b16 %v2475, %v2473
      %v2604 = vpack.c.b16 %v2478, %v2476
      %v2605 = vpack.c.b16 %v2479, %v2477
      %v2606 = vpack.c.b16 %v2482, %v2480
      %v2607 = vpack.c.b16 %v2483, %v2481
      %v2608 = vpack.c.b16 %v2486, %v2484
      %v2609 = vpack.c.b16 %v2487, %v2485
      %v2610 = vpack.c.b16 %v2490, %v2488
      %v2611 = vpack.c.b16 %v2491, %v2489
      %v2612 = vpack.c.b16 %v2494, %v2492
      %v2613 = vpack.c.b16 %v2495, %v2493
      %v2614 = vpack.c.b16 %v2498, %v2496
      %v2615 = vpack.c.b16 %v2499, %v2497
      %v2616 = vpack.c.b16 %v2502, %v2500
      %v2617 = vpack.c.b16 %v2503, %v2501
      %v2618 = vpack.c.b16 %v2506, %v2504
      %v2619 = vpack.c.b16 %v2507, %v2505
      %v2620 = vpack.c.b16 %v2510, %v2508
      %v2621 = vpack.c.b16 %v2511, %v2509
      %v2622 = vpack.c.b16 %v2514, %v2512
      %v2623 = vpack.c.b16 %v2515, %v2513
      %v2624 = vpack.c.b16 %v2518, %v2516
      %v2625 = vpack.c.b16 %v2519, %v2517
      %v2626 = vpack.c.b16 %v2522, %v2520
      %v2627 = vpack.c.b16 %v2523, %v2521
      %v2628 = vpack.c.b16 %v2526, %v2524
      %v2629 = vpack.c.b16 %v2527, %v2525
      %v2630 = vpack.c.b16 %v2530, %v2528
      %v2631 = vpack.c.b16 %v2531, %v2529
      %v2632 = vpack.c.b16 %v2534, %v2532
      %v2633 = vpack.c.b16 %v2535, %v2533
      %v2634 = vpack.c.b16 %v2538, %v2536
      %v2635 = vpack.c.b16 %v2539, %v2537
      %v2636 = vpack.c.b16 %v2542, %v2540
      %v2637 = vpack.c.b16 %v2543, %v2541
      %v2638 = vpack.c.b16 %v2546, %v2544
      %v2639 = vpack.c.b16 %v2547, %v2545
      %v2640 = vpack.c.b16 %v2550, %v2548
      %v2641 = vpack.c.b16 %v2551, %v2549
      %v2642 = vpack.c.b16 %v2554, %v2552
      %v2643 = vpack.c.b16 %v2555, %v2553
      %v2644 = vpack.c.b16 %v2558, %v2556
      %v2645 = vpack.c.b16 %v2559, %v2557
      %v2646 = vpack.c.b16 %v2562, %v2560
      %v2647 = vpack.c.b16 %v2563, %v2561
      %v2648 = vpack.c.b16 %v2566, %v2564
      %v2649 = vpack.c.b16 %v2567, %v2565
      %v2650 = vpack.c.b16 %v2570, %v2568
      %v2651 = vpack.c.b16 %v2571, %v2569
      %v2652 = vpack.c.b16 %v2574, %v2572
      %v2653 = vpack.c.b16 %v2575, %v2573
      %v2654 = vpack.c.b16 %v2578, %v2576
      %v2655 = vpack.c.b16 %v2579, %v2577
      %v2656 = vpack.c.b16 %v2582, %v2580
      %v2657 = vpack.c.b16 %v2583, %v2581
      %v2658 = vpack.c.b16 %v2586, %v2584
      %v2659 = vpack.c.b16 %v2587, %v2585
      %v2660 = vpack.c.b16 %v2590, %v2588
      %v2661 = vpack.c.b16 %v2591, %v2589
      %v2662 = vpack.c.b16 %v2594, %v2592
      %v2663 = vpack.c.b16 %v2595, %v2593
      %v2664 = vpack.c.b16 %v2598, %v2596
      %v2665 = vpack.c.b16 %v2599, %v2597
      %2732 = vmatprep.subr.bf16.mxu0 %v2615
      %2733 = vmatpush1.bf16.msra.mxu0 %v2614
      %2734 = vmatprep.subr.bf16.mxu0 %v2613
      %2735 = vmatpush1.bf16.msra.mxu0 %v2612
      %2736 = vmatprep.subr.bf16.mxu0 %v2611
      %2737 = vmatpush1.bf16.msra.mxu0 %v2610
      %2738 = vmatprep.subr.bf16.mxu0 %v2609
      %2739 = vmatpush1.bf16.msra.mxu0 %v2608
      %2740 = vmatprep.subr.bf16.mxu0 %v2607
      %2741 = vmatpush1.bf16.msra.mxu0 %v2606
      %2742 = vmatprep.subr.bf16.mxu0 %v2605
      %2743 = vmatpush1.bf16.msra.mxu0 %v2604
      %2744 = vmatprep.subr.bf16.mxu0 %v2603
      %2745 = vmatpush1.bf16.msra.mxu0 %v2602
      %2746 = vmatprep.subr.bf16.mxu0 %v2601
      %2747 = vmatpush1.bf16.msra.mxu0 %v2600
      %2748 = vmatprep.subr.bf16.mxu0 %v2631
      %2749 = vmatpush2.bf16.msra.mxu0 %v2630
      %2750 = vmatprep.subr.bf16.mxu0 %v2629
      %2751 = vmatpush2.bf16.msra.mxu0 %v2628
      %2752 = vmatprep.subr.bf16.mxu0 %v2627
      %2753 = vmatpush2.bf16.msra.mxu0 %v2626
      %2754 = vmatprep.subr.bf16.mxu0 %v2625
      %2755 = vmatpush2.bf16.msra.mxu0 %v2624
      %2756 = vmatprep.subr.bf16.mxu0 %v2623
      %2757 = vmatpush2.bf16.msra.mxu0 %v2622
      %2758 = vmatprep.subr.bf16.mxu0 %v2621
      %2759 = vmatpush2.bf16.msra.mxu0 %v2620
      %2760 = vmatprep.subr.bf16.mxu0 %v2619
      %2761 = vmatpush2.bf16.msra.mxu0 %v2618
      %2762 = vmatprep.subr.bf16.mxu0 %v2617
      %2763 = vmatpush2.bf16.msra.mxu0 %v2616
      %2764 = vmatprep.mubr.bf16.mxu0 %v271
      %2765 = vmatmul.mubr.bf16.gmra.mxu0 %v263
      %v2766 = vpop.f32.mrf.mxu0
      %v2767 = vadd.f32 %v252, %v2766
      %v2768 = vpop.f32.mrf.mxu0
      %v2769 = vadd.f32 %v252, %v2768
      %v2770 = vpop.f32.mrf.mxu0
      %v2771 = vpop.f32.mrf.mxu0
      %2772 = vdwg.mxu0
      %2773 = vmatprep.subr.bf16.mxu0 %v2647
      %2774 = vmatpush1.bf16.msra.mxu0 %v2646
      %2775 = vmatprep.subr.bf16.mxu0 %v2645
      %2776 = vmatpush1.bf16.msra.mxu0 %v2644
      %2777 = vmatprep.subr.bf16.mxu0 %v2643
      %2778 = vmatpush1.bf16.msra.mxu0 %v2642
      %2779 = vmatprep.subr.bf16.mxu0 %v2641
      %2780 = vmatpush1.bf16.msra.mxu0 %v2640
      %2781 = vmatprep.subr.bf16.mxu0 %v2639
      %2782 = vmatpush1.bf16.msra.mxu0 %v2638
      %2783 = vmatprep.subr.bf16.mxu0 %v2637
      %2784 = vmatpush1.bf16.msra.mxu0 %v2636
      %2785 = vmatprep.subr.bf16.mxu0 %v2635
      %2786 = vmatpush1.bf16.msra.mxu0 %v2634
      %2787 = vmatprep.subr.bf16.mxu0 %v2633
      %2788 = vmatpush1.bf16.msra.mxu0 %v2632
      %2789 = vmatprep.subr.bf16.mxu0 %v2663
      %2790 = vmatpush2.bf16.msra.mxu0 %v2662
      %2791 = vmatprep.subr.bf16.mxu0 %v2661
      %2792 = vmatpush2.bf16.msra.mxu0 %v2660
      %2793 = vmatprep.subr.bf16.mxu0 %v2659
      %2794 = vmatpush2.bf16.msra.mxu0 %v2658
      %2795 = vmatprep.subr.bf16.mxu0 %v2657
      %2796 = vmatpush2.bf16.msra.mxu0 %v2656
      %2797 = vmatprep.subr.bf16.mxu0 %v2655
      %2798 = vmatpush2.bf16.msra.mxu0 %v2654
      %2799 = vmatprep.subr.bf16.mxu0 %v2653
      %2800 = vmatpush2.bf16.msra.mxu0 %v2652
      %2801 = vmatprep.subr.bf16.mxu0 %v2651
      %2802 = vmatpush2.bf16.msra.mxu0 %v2650
      %2803 = vmatprep.subr.bf16.mxu0 %v2649
      %2804 = vmatpush2.bf16.msra.mxu0 %v2648
      %2805 = vmatprep.mubr.bf16.mxu0 %v272
      %2806 = vmatmul.mubr.bf16.gmra.mxu0 %v270
      %v2807 = vpop.f32.mrf.mxu0
      %v2808 = vadd.f32 %v2767, %v2807
      %v2809 = vpop.f32.mrf.mxu0
      %v2810 = vadd.f32 %v2769, %v2809
      %v2811 = vpop.f32.mrf.mxu0
      %v2812 = vpop.f32.mrf.mxu0
      %2813 = vdwg.mxu0
      %2814 = vmatprep.subr.bf16.mxu0 0
      %2815 = vmatpush1.bf16.msra.mxu0 0
      %2816 = vmatprep.subr.bf16.mxu0 0
      %2817 = vmatpush1.bf16.msra.mxu0 0
      %2818 = vmatprep.subr.bf16.mxu0 0
      %2819 = vmatpush1.bf16.msra.mxu0 0
      %2820 = vmatprep.subr.bf16.mxu0 0
      %2821 = vmatpush1.bf16.msra.mxu0 0
      %2822 = vmatprep.subr.bf16.mxu0 0
      %2823 = vmatpush1.bf16.msra.mxu0 0
      %2824 = vmatprep.subr.bf16.mxu0 0
      %2825 = vmatpush1.bf16.msra.mxu0 0
      %2826 = vmatprep.subr.bf16.mxu0 0
      %2827 = vmatpush1.bf16.msra.mxu0 0
      %2828 = vmatprep.subr.bf16.mxu0 %v2665
      %2829 = vmatpush1.bf16.msra.mxu0 %v2664
      %2830 = vmatprep.subr.bf16.mxu0 0
      %2831 = vmatpush2.bf16.msra.mxu0 0
      %2832 = vmatprep.subr.bf16.mxu0 0
      %2833 = vmatpush2.bf16.msra.mxu0 0
      %2834 = vmatprep.subr.bf16.mxu0 0
      %2835 = vmatpush2.bf16.msra.mxu0 0
      %2836 = vmatprep.subr.bf16.mxu0 0
      %2837 = vmatpush2.bf16.msra.mxu0 0
      %2838 = vmatprep.subr.bf16.mxu0 0
      %2839 = vmatpush2.bf16.msra.mxu0 0
      %2840 = vmatprep.subr.bf16.mxu0 0
      %2841 = vmatpush2.bf16.msra.mxu0 0
      %2842 = vmatprep.subr.bf16.mxu0 0
      %2843 = vmatpush2.bf16.msra.mxu0 0
      %2844 = vmatprep.subr.bf16.mxu0 0
      %2845 = vmatpush2.bf16.msra.mxu0 0
      %2846 = vmatprep.mubr.bf16.mxu0 0
      %2847 = vmatmul.mubr.bf16.gmra.mxu0 %v616
      %v2848 = vpop.f32.mrf.mxu0
      %v2849 = vadd.f32 %v2808, %v2848
      %v2850 = vpop.f32.mrf.mxu0
      %v2851 = vadd.f32 %v2810, %v2850
      %v2852 = vpop.f32.mrf.mxu0
      %v2853 = vpop.f32.mrf.mxu0
      %2854 = vdwg.mxu0
      %v2855 = vmax.f32 %v2849, 0.0
      %v2856 = vmax.f32 %v2851, 0.0
      %v2859 = vcombine.low %v2855, %v2856
      %s2861 = scalar_lea.vmem %s177, 32
      %2862 = vst.msk [vmem:[%s2861] sm:$0xff] %vm749, %v2859
      %s2863 = scalar_lea.vmem %s170, 2640
      %v2864 = vld [vmem:[%s2863] sm:$0xff]
      %v2865 = vld [vmem:[%s2863 + $0x8] sm:$0xff]
      %v2866 = vld [vmem:[%s2863 + $0x10] sm:$0xff]
      %v2867 = vld [vmem:[%s2863 + $0x18] sm:$0xff]
      %v2868 = vld [vmem:[%s2863 + $0x20] sm:$0xff]
      %v2869 = vld [vmem:[%s2863 + $0x28] sm:$0xff]
      %v2870 = vld [vmem:[%s2863 + $0x30] sm:$0xff]
      %v2871 = vld [vmem:[%s2863 + $0x38] sm:$0xff]
      %v2872 = vld [vmem:[%s2863 + $0x40] sm:$0xff]
      %v2873 = vld [vmem:[%s2863 + $0x48] sm:$0xff]
      %v2874 = vld [vmem:[%s2863 + $0x50] sm:$0xff]
      %v2875 = vld [vmem:[%s2863 + $0x58] sm:$0xff]
      %v2876 = vld [vmem:[%s2863 + $0x60] sm:$0xff]
      %v2877 = vld [vmem:[%s2863 + $0x68] sm:$0xff]
      %v2878 = vld [vmem:[%s2863 + $0x70] sm:$0xff]
      %v2879 = vld [vmem:[%s2863 + $0x78] sm:$0xff]
      %v2880 = vld [vmem:[%s2863 + $0x80] sm:$0xff]
      %v2881 = vld [vmem:[%s2863 + $0x88] sm:$0xff]
      %v2882 = vld [vmem:[%s2863 + $0x90] sm:$0xff]
      %v2883 = vld [vmem:[%s2863 + $0x98] sm:$0xff]
      %v2884 = vld [vmem:[%s2863 + $0xa0] sm:$0xff]
      %v2885 = vld [vmem:[%s2863 + $0xa8] sm:$0xff]
      %v2886 = vld [vmem:[%s2863 + $0xb0] sm:$0xff]
      %v2887 = vld [vmem:[%s2863 + $0xb8] sm:$0xff]
      %v2888 = vld [vmem:[%s2863 + $0xc0] sm:$0xff]
      %v2889 = vld [vmem:[%s2863 + $0xc8] sm:$0xff]
      %v2890 = vld [vmem:[%s2863 + $0xd0] sm:$0xff]
      %v2891 = vld [vmem:[%s2863 + $0xd8] sm:$0xff]
      %v2892 = vld [vmem:[%s2863 + $0xe0] sm:$0xff]
      %v2893 = vld [vmem:[%s2863 + $0xe8] sm:$0xff]
      %v2894 = vld [vmem:[%s2863 + $0xf0] sm:$0xff]
      %v2895 = vld [vmem:[%s2863 + $0xf8] sm:$0xff]
      %v2896 = vld [vmem:[%s2863 + $0x100] sm:$0xff]
      %v2897 = vld [vmem:[%s2863 + $0x108] sm:$0xff]
      %v2898 = vld [vmem:[%s2863 + $0x110] sm:$0xff]
      %v2899 = vld [vmem:[%s2863 + $0x118] sm:$0xff]
      %v2900 = vld [vmem:[%s2863 + $0x120] sm:$0xff]
      %v2901 = vld [vmem:[%s2863 + $0x128] sm:$0xff]
      %v2902 = vld [vmem:[%s2863 + $0x130] sm:$0xff]
      %v2903 = vld [vmem:[%s2863 + $0x138] sm:$0xff]
      %v2904 = vld [vmem:[%s2863 + $0x140] sm:$0xff]
      %v2905 = vld [vmem:[%s2863 + $0x148] sm:$0xff]
      %v2906 = vld [vmem:[%s2863 + $0x150] sm:$0xff]
      %v2907 = vld [vmem:[%s2863 + $0x158] sm:$0xff]
      %v2908 = vld [vmem:[%s2863 + $0x160] sm:$0xff]
      %v2909 = vld [vmem:[%s2863 + $0x168] sm:$0xff]
      %v2910 = vld [vmem:[%s2863 + $0x170] sm:$0xff]
      %v2911 = vld [vmem:[%s2863 + $0x178] sm:$0xff]
      %v2912 = vld [vmem:[%s2863 + $0x180] sm:$0xff]
      %v2913 = vld [vmem:[%s2863 + $0x188] sm:$0xff]
      %v2914 = vld [vmem:[%s2863 + $0x190] sm:$0xff]
      %v2915 = vld [vmem:[%s2863 + $0x198] sm:$0xff]
      %v2916 = vld [vmem:[%s2863 + $0x1a0] sm:$0xff]
      %v2917 = vld [vmem:[%s2863 + $0x1a8] sm:$0xff]
      %v2918 = vld [vmem:[%s2863 + $0x1b0] sm:$0xff]
      %v2919 = vld [vmem:[%s2863 + $0x1b8] sm:$0xff]
      %v2920 = vld [vmem:[%s2863 + $0x1c0] sm:$0xff]
      %v2921 = vld [vmem:[%s2863 + $0x1c8] sm:$0xff]
      %v2922 = vld [vmem:[%s2863 + $0x1d0] sm:$0xff]
      %v2923 = vld [vmem:[%s2863 + $0x1d8] sm:$0xff]
      %v2924 = vld [vmem:[%s2863 + $0x1e0] sm:$0xff]
      %v2925 = vld [vmem:[%s2863 + $0x1e8] sm:$0xff]
      %v2926 = vld [vmem:[%s2863 + $0x1f0] sm:$0xff]
      %v2927 = vld [vmem:[%s2863 + $0x1f8] sm:$0xff]
      %v2928 = vld [vmem:[%s2863 + $0x200] sm:$0xff]
      %v2929 = vld [vmem:[%s2863 + $0x208] sm:$0xff]
      %v2996 = vunpack.c.l.b16 %v2864
      %v2997 = vunpack.c.h.b16 %v2864
      %v2998 = vunpack.c.l.b16 %v2865
      %v2999 = vunpack.c.h.b16 %v2865
      %v3000 = vunpack.c.l.b16 %v2866
      %v3001 = vunpack.c.h.b16 %v2866
      %v3002 = vunpack.c.l.b16 %v2867
      %v3003 = vunpack.c.h.b16 %v2867
      %v3004 = vunpack.c.l.b16 %v2868
      %v3005 = vunpack.c.h.b16 %v2868
      %v3006 = vunpack.c.l.b16 %v2869
      %v3007 = vunpack.c.h.b16 %v2869
      %v3008 = vunpack.c.l.b16 %v2870
      %v3009 = vunpack.c.h.b16 %v2870
      %v3010 = vunpack.c.l.b16 %v2871
      %v3011 = vunpack.c.h.b16 %v2871
      %v3012 = vunpack.c.l.b16 %v2872
      %v3013 = vunpack.c.h.b16 %v2872
      %v3014 = vunpack.c.l.b16 %v2873
      %v3015 = vunpack.c.h.b16 %v2873
      %v3016 = vunpack.c.l.b16 %v2874
      %v3017 = vunpack.c.h.b16 %v2874
      %v3018 = vunpack.c.l.b16 %v2875
      %v3019 = vunpack.c.h.b16 %v2875
      %v3020 = vunpack.c.l.b16 %v2876
      %v3021 = vunpack.c.h.b16 %v2876
      %v3022 = vunpack.c.l.b16 %v2877
      %v3023 = vunpack.c.h.b16 %v2877
      %v3024 = vunpack.c.l.b16 %v2878
      %v3025 = vunpack.c.h.b16 %v2878
      %v3026 = vunpack.c.l.b16 %v2879
      %v3027 = vunpack.c.h.b16 %v2879
      %v3028 = vunpack.c.l.b16 %v2880
      %v3029 = vunpack.c.h.b16 %v2880
      %v3030 = vunpack.c.l.b16 %v2881
      %v3031 = vunpack.c.h.b16 %v2881
      %v3032 = vunpack.c.l.b16 %v2882
      %v3033 = vunpack.c.h.b16 %v2882
      %v3034 = vunpack.c.l.b16 %v2883
      %v3035 = vunpack.c.h.b16 %v2883
      %v3036 = vunpack.c.l.b16 %v2884
      %v3037 = vunpack.c.h.b16 %v2884
      %v3038 = vunpack.c.l.b16 %v2885
      %v3039 = vunpack.c.h.b16 %v2885
      %v3040 = vunpack.c.l.b16 %v2886
      %v3041 = vunpack.c.h.b16 %v2886
      %v3042 = vunpack.c.l.b16 %v2887
      %v3043 = vunpack.c.h.b16 %v2887
      %v3044 = vunpack.c.l.b16 %v2888
      %v3045 = vunpack.c.h.b16 %v2888
      %v3046 = vunpack.c.l.b16 %v2889
      %v3047 = vunpack.c.h.b16 %v2889
      %v3048 = vunpack.c.l.b16 %v2890
      %v3049 = vunpack.c.h.b16 %v2890
      %v3050 = vunpack.c.l.b16 %v2891
      %v3051 = vunpack.c.h.b16 %v2891
      %v3052 = vunpack.c.l.b16 %v2892
      %v3053 = vunpack.c.h.b16 %v2892
      %v3054 = vunpack.c.l.b16 %v2893
      %v3055 = vunpack.c.h.b16 %v2893
      %v3056 = vunpack.c.l.b16 %v2894
      %v3057 = vunpack.c.h.b16 %v2894
      %v3058 = vunpack.c.l.b16 %v2895
      %v3059 = vunpack.c.h.b16 %v2895
      %v3060 = vunpack.c.l.b16 %v2896
      %v3061 = vunpack.c.h.b16 %v2896
      %v3062 = vunpack.c.l.b16 %v2897
      %v3063 = vunpack.c.h.b16 %v2897
      %v3064 = vunpack.c.l.b16 %v2898
      %v3065 = vunpack.c.h.b16 %v2898
      %v3066 = vunpack.c.l.b16 %v2899
      %v3067 = vunpack.c.h.b16 %v2899
      %v3068 = vunpack.c.l.b16 %v2900
      %v3069 = vunpack.c.h.b16 %v2900
      %v3070 = vunpack.c.l.b16 %v2901
      %v3071 = vunpack.c.h.b16 %v2901
      %v3072 = vunpack.c.l.b16 %v2902
      %v3073 = vunpack.c.h.b16 %v2902
      %v3074 = vunpack.c.l.b16 %v2903
      %v3075 = vunpack.c.h.b16 %v2903
      %v3076 = vunpack.c.l.b16 %v2904
      %v3077 = vunpack.c.h.b16 %v2904
      %v3078 = vunpack.c.l.b16 %v2905
      %v3079 = vunpack.c.h.b16 %v2905
      %v3080 = vunpack.c.l.b16 %v2906
      %v3081 = vunpack.c.h.b16 %v2906
      %v3082 = vunpack.c.l.b16 %v2907
      %v3083 = vunpack.c.h.b16 %v2907
      %v3084 = vunpack.c.l.b16 %v2908
      %v3085 = vunpack.c.h.b16 %v2908
      %v3086 = vunpack.c.l.b16 %v2909
      %v3087 = vunpack.c.h.b16 %v2909
      %v3088 = vunpack.c.l.b16 %v2910
      %v3089 = vunpack.c.h.b16 %v2910
      %v3090 = vunpack.c.l.b16 %v2911
      %v3091 = vunpack.c.h.b16 %v2911
      %v3092 = vunpack.c.l.b16 %v2912
      %v3093 = vunpack.c.h.b16 %v2912
      %v3094 = vunpack.c.l.b16 %v2913
      %v3095 = vunpack.c.h.b16 %v2913
      %v3096 = vunpack.c.l.b16 %v2914
      %v3097 = vunpack.c.h.b16 %v2914
      %v3098 = vunpack.c.l.b16 %v2915
      %v3099 = vunpack.c.h.b16 %v2915
      %v3100 = vunpack.c.l.b16 %v2916
      %v3101 = vunpack.c.h.b16 %v2916
      %v3102 = vunpack.c.l.b16 %v2917
      %v3103 = vunpack.c.h.b16 %v2917
      %v3104 = vunpack.c.l.b16 %v2918
      %v3105 = vunpack.c.h.b16 %v2918
      %v3106 = vunpack.c.l.b16 %v2919
      %v3107 = vunpack.c.h.b16 %v2919
      %v3108 = vunpack.c.l.b16 %v2920
      %v3109 = vunpack.c.h.b16 %v2920
      %v3110 = vunpack.c.l.b16 %v2921
      %v3111 = vunpack.c.h.b16 %v2921
      %v3112 = vunpack.c.l.b16 %v2922
      %v3113 = vunpack.c.h.b16 %v2922
      %v3114 = vunpack.c.l.b16 %v2923
      %v3115 = vunpack.c.h.b16 %v2923
      %v3116 = vunpack.c.l.b16 %v2924
      %v3117 = vunpack.c.h.b16 %v2924
      %v3118 = vunpack.c.l.b16 %v2925
      %v3119 = vunpack.c.h.b16 %v2925
      %v3120 = vunpack.c.l.b16 %v2926
      %v3121 = vunpack.c.h.b16 %v2926
      %v3122 = vunpack.c.l.b16 %v2927
      %v3123 = vunpack.c.h.b16 %v2927
      %v3124 = vunpack.c.l.b16 %v2928
      %v3125 = vunpack.c.h.b16 %v2928
      %v3126 = vunpack.c.l.b16 %v2929
      %v3127 = vunpack.c.h.b16 %v2929
      %v3128 = vpack.c.b16 %v2998, %v2996
      %v3129 = vpack.c.b16 %v2999, %v2997
      %v3130 = vpack.c.b16 %v3002, %v3000
      %v3131 = vpack.c.b16 %v3003, %v3001
      %v3132 = vpack.c.b16 %v3006, %v3004
      %v3133 = vpack.c.b16 %v3007, %v3005
      %v3134 = vpack.c.b16 %v3010, %v3008
      %v3135 = vpack.c.b16 %v3011, %v3009
      %v3136 = vpack.c.b16 %v3014, %v3012
      %v3137 = vpack.c.b16 %v3015, %v3013
      %v3138 = vpack.c.b16 %v3018, %v3016
      %v3139 = vpack.c.b16 %v3019, %v3017
      %v3140 = vpack.c.b16 %v3022, %v3020
      %v3141 = vpack.c.b16 %v3023, %v3021
      %v3142 = vpack.c.b16 %v3026, %v3024
      %v3143 = vpack.c.b16 %v3027, %v3025
      %v3144 = vpack.c.b16 %v3030, %v3028
      %v3145 = vpack.c.b16 %v3031, %v3029
      %v3146 = vpack.c.b16 %v3034, %v3032
      %v3147 = vpack.c.b16 %v3035, %v3033
      %v3148 = vpack.c.b16 %v3038, %v3036
      %v3149 = vpack.c.b16 %v3039, %v3037
      %v3150 = vpack.c.b16 %v3042, %v3040
      %v3151 = vpack.c.b16 %v3043, %v3041
      %v3152 = vpack.c.b16 %v3046, %v3044
      %v3153 = vpack.c.b16 %v3047, %v3045
      %v3154 = vpack.c.b16 %v3050, %v3048
      %v3155 = vpack.c.b16 %v3051, %v3049
      %v3156 = vpack.c.b16 %v3054, %v3052
      %v3157 = vpack.c.b16 %v3055, %v3053
      %v3158 = vpack.c.b16 %v3058, %v3056
      %v3159 = vpack.c.b16 %v3059, %v3057
      %v3160 = vpack.c.b16 %v3062, %v3060
      %v3161 = vpack.c.b16 %v3063, %v3061
      %v3162 = vpack.c.b16 %v3066, %v3064
      %v3163 = vpack.c.b16 %v3067, %v3065
      %v3164 = vpack.c.b16 %v3070, %v3068
      %v3165 = vpack.c.b16 %v3071, %v3069
      %v3166 = vpack.c.b16 %v3074, %v3072
      %v3167 = vpack.c.b16 %v3075, %v3073
      %v3168 = vpack.c.b16 %v3078, %v3076
      %v3169 = vpack.c.b16 %v3079, %v3077
      %v3170 = vpack.c.b16 %v3082, %v3080
      %v3171 = vpack.c.b16 %v3083, %v3081
      %v3172 = vpack.c.b16 %v3086, %v3084
      %v3173 = vpack.c.b16 %v3087, %v3085
      %v3174 = vpack.c.b16 %v3090, %v3088
      %v3175 = vpack.c.b16 %v3091, %v3089
      %v3176 = vpack.c.b16 %v3094, %v3092
      %v3177 = vpack.c.b16 %v3095, %v3093
      %v3178 = vpack.c.b16 %v3098, %v3096
      %v3179 = vpack.c.b16 %v3099, %v3097
      %v3180 = vpack.c.b16 %v3102, %v3100
      %v3181 = vpack.c.b16 %v3103, %v3101
      %v3182 = vpack.c.b16 %v3106, %v3104
      %v3183 = vpack.c.b16 %v3107, %v3105
      %v3184 = vpack.c.b16 %v3110, %v3108
      %v3185 = vpack.c.b16 %v3111, %v3109
      %v3186 = vpack.c.b16 %v3114, %v3112
      %v3187 = vpack.c.b16 %v3115, %v3113
      %v3188 = vpack.c.b16 %v3118, %v3116
      %v3189 = vpack.c.b16 %v3119, %v3117
      %v3190 = vpack.c.b16 %v3122, %v3120
      %v3191 = vpack.c.b16 %v3123, %v3121
      %v3192 = vpack.c.b16 %v3126, %v3124
      %v3193 = vpack.c.b16 %v3127, %v3125
      %3260 = vmatprep.subr.bf16.mxu0 %v3143
      %3261 = vmatpush1.bf16.msra.mxu0 %v3142
      %3262 = vmatprep.subr.bf16.mxu0 %v3141
      %3263 = vmatpush1.bf16.msra.mxu0 %v3140
      %3264 = vmatprep.subr.bf16.mxu0 %v3139
      %3265 = vmatpush1.bf16.msra.mxu0 %v3138
      %3266 = vmatprep.subr.bf16.mxu0 %v3137
      %3267 = vmatpush1.bf16.msra.mxu0 %v3136
      %3268 = vmatprep.subr.bf16.mxu0 %v3135
      %3269 = vmatpush1.bf16.msra.mxu0 %v3134
      %3270 = vmatprep.subr.bf16.mxu0 %v3133
      %3271 = vmatpush1.bf16.msra.mxu0 %v3132
      %3272 = vmatprep.subr.bf16.mxu0 %v3131
      %3273 = vmatpush1.bf16.msra.mxu0 %v3130
      %3274 = vmatprep.subr.bf16.mxu0 %v3129
      %3275 = vmatpush1.bf16.msra.mxu0 %v3128
      %3276 = vmatprep.subr.bf16.mxu0 %v3159
      %3277 = vmatpush2.bf16.msra.mxu0 %v3158
      %3278 = vmatprep.subr.bf16.mxu0 %v3157
      %3279 = vmatpush2.bf16.msra.mxu0 %v3156
      %3280 = vmatprep.subr.bf16.mxu0 %v3155
      %3281 = vmatpush2.bf16.msra.mxu0 %v3154
      %3282 = vmatprep.subr.bf16.mxu0 %v3153
      %3283 = vmatpush2.bf16.msra.mxu0 %v3152
      %3284 = vmatprep.subr.bf16.mxu0 %v3151
      %3285 = vmatpush2.bf16.msra.mxu0 %v3150
      %3286 = vmatprep.subr.bf16.mxu0 %v3149
      %3287 = vmatpush2.bf16.msra.mxu0 %v3148
      %3288 = vmatprep.subr.bf16.mxu0 %v3147
      %3289 = vmatpush2.bf16.msra.mxu0 %v3146
      %3290 = vmatprep.subr.bf16.mxu0 %v3145
      %3291 = vmatpush2.bf16.msra.mxu0 %v3144
      %3292 = vmatprep.mubr.bf16.mxu0 %v271
      %3293 = vmatmul.mubr.bf16.gmra.mxu0 %v263
      %v3294 = vpop.f32.mrf.mxu0
      %v3295 = vadd.f32 %v252, %v3294
      %v3296 = vpop.f32.mrf.mxu0
      %v3297 = vadd.f32 %v252, %v3296
      %v3298 = vpop.f32.mrf.mxu0
      %v3299 = vpop.f32.mrf.mxu0
      %3300 = vdwg.mxu0
      %3301 = vmatprep.subr.bf16.mxu0 %v3175
      %3302 = vmatpush1.bf16.msra.mxu0 %v3174
      %3303 = vmatprep.subr.bf16.mxu0 %v3173
      %3304 = vmatpush1.bf16.msra.mxu0 %v3172
      %3305 = vmatprep.subr.bf16.mxu0 %v3171
      %3306 = vmatpush1.bf16.msra.mxu0 %v3170
      %3307 = vmatprep.subr.bf16.mxu0 %v3169
      %3308 = vmatpush1.bf16.msra.mxu0 %v3168
      %3309 = vmatprep.subr.bf16.mxu0 %v3167
      %3310 = vmatpush1.bf16.msra.mxu0 %v3166
      %3311 = vmatprep.subr.bf16.mxu0 %v3165
      %3312 = vmatpush1.bf16.msra.mxu0 %v3164
      %3313 = vmatprep.subr.bf16.mxu0 %v3163
      %3314 = vmatpush1.bf16.msra.mxu0 %v3162
      %3315 = vmatprep.subr.bf16.mxu0 %v3161
      %3316 = vmatpush1.bf16.msra.mxu0 %v3160
      %3317 = vmatprep.subr.bf16.mxu0 %v3191
      %3318 = vmatpush2.bf16.msra.mxu0 %v3190
      %3319 = vmatprep.subr.bf16.mxu0 %v3189
      %3320 = vmatpush2.bf16.msra.mxu0 %v3188
      %3321 = vmatprep.subr.bf16.mxu0 %v3187
      %3322 = vmatpush2.bf16.msra.mxu0 %v3186
      %3323 = vmatprep.subr.bf16.mxu0 %v3185
      %3324 = vmatpush2.bf16.msra.mxu0 %v3184
      %3325 = vmatprep.subr.bf16.mxu0 %v3183
      %3326 = vmatpush2.bf16.msra.mxu0 %v3182
      %3327 = vmatprep.subr.bf16.mxu0 %v3181
      %3328 = vmatpush2.bf16.msra.mxu0 %v3180
      %3329 = vmatprep.subr.bf16.mxu0 %v3179
      %3330 = vmatpush2.bf16.msra.mxu0 %v3178
      %3331 = vmatprep.subr.bf16.mxu0 %v3177
      %3332 = vmatpush2.bf16.msra.mxu0 %v3176
      %3333 = vmatprep.mubr.bf16.mxu0 %v272
      %3334 = vmatmul.mubr.bf16.gmra.mxu0 %v270
      %v3335 = vpop.f32.mrf.mxu0
      %v3336 = vadd.f32 %v3295, %v3335
      %v3337 = vpop.f32.mrf.mxu0
      %v3338 = vadd.f32 %v3297, %v3337
      %v3339 = vpop.f32.mrf.mxu0
      %v3340 = vpop.f32.mrf.mxu0
      %3341 = vdwg.mxu0
      %3342 = vmatprep.subr.bf16.mxu0 0
      %3343 = vmatpush1.bf16.msra.mxu0 0
      %3344 = vmatprep.subr.bf16.mxu0 0
      %3345 = vmatpush1.bf16.msra.mxu0 0
      %3346 = vmatprep.subr.bf16.mxu0 0
      %3347 = vmatpush1.bf16.msra.mxu0 0
      %3348 = vmatprep.subr.bf16.mxu0 0
      %3349 = vmatpush1.bf16.msra.mxu0 0
      %3350 = vmatprep.subr.bf16.mxu0 0
      %3351 = vmatpush1.bf16.msra.mxu0 0
      %3352 = vmatprep.subr.bf16.mxu0 0
      %3353 = vmatpush1.bf16.msra.mxu0 0
      %3354 = vmatprep.subr.bf16.mxu0 0
      %3355 = vmatpush1.bf16.msra.mxu0 0
      %3356 = vmatprep.subr.bf16.mxu0 %v3193
      %3357 = vmatpush1.bf16.msra.mxu0 %v3192
      %3358 = vmatprep.subr.bf16.mxu0 0
      %3359 = vmatpush2.bf16.msra.mxu0 0
      %3360 = vmatprep.subr.bf16.mxu0 0
      %3361 = vmatpush2.bf16.msra.mxu0 0
      %3362 = vmatprep.subr.bf16.mxu0 0
      %3363 = vmatpush2.bf16.msra.mxu0 0
      %3364 = vmatprep.subr.bf16.mxu0 0
      %3365 = vmatpush2.bf16.msra.mxu0 0
      %3366 = vmatprep.subr.bf16.mxu0 0
      %3367 = vmatpush2.bf16.msra.mxu0 0
      %3368 = vmatprep.subr.bf16.mxu0 0
      %3369 = vmatpush2.bf16.msra.mxu0 0
      %3370 = vmatprep.subr.bf16.mxu0 0
      %3371 = vmatpush2.bf16.msra.mxu0 0
      %3372 = vmatprep.subr.bf16.mxu0 0
      %3373 = vmatpush2.bf16.msra.mxu0 0
      %3374 = vmatprep.mubr.bf16.mxu0 0
      %3375 = vmatmul.mubr.bf16.gmra.mxu0 %v616
      %v3376 = vpop.f32.mrf.mxu0
      %v3377 = vadd.f32 %v3336, %v3376
      %v3378 = vpop.f32.mrf.mxu0
      %v3379 = vadd.f32 %v3338, %v3378
      %v3380 = vpop.f32.mrf.mxu0
      %v3381 = vpop.f32.mrf.mxu0
      %3382 = vdwg.mxu0
      %v3383 = vmax.f32 %v3377, 0.0
      %v3384 = vmax.f32 %v3379, 0.0
      %v3387 = vcombine.low %v3383, %v3384
      %s3389 = scalar_lea.vmem %s177, 40
      %3390 = vst.msk [vmem:[%s3389] sm:$0xff] %vm749, %v3387
      %s3391 = scalar_lea.vmem %s170, 3168
      %v3392 = vld [vmem:[%s3391] sm:$0xff]
      %v3393 = vld [vmem:[%s3391 + $0x8] sm:$0xff]
      %v3394 = vld [vmem:[%s3391 + $0x10] sm:$0xff]
      %v3395 = vld [vmem:[%s3391 + $0x18] sm:$0xff]
      %v3396 = vld [vmem:[%s3391 + $0x20] sm:$0xff]
      %v3397 = vld [vmem:[%s3391 + $0x28] sm:$0xff]
      %v3398 = vld [vmem:[%s3391 + $0x30] sm:$0xff]
      %v3399 = vld [vmem:[%s3391 + $0x38] sm:$0xff]
      %v3400 = vld [vmem:[%s3391 + $0x40] sm:$0xff]
      %v3401 = vld [vmem:[%s3391 + $0x48] sm:$0xff]
      %v3402 = vld [vmem:[%s3391 + $0x50] sm:$0xff]
      %v3403 = vld [vmem:[%s3391 + $0x58] sm:$0xff]
      %v3404 = vld [vmem:[%s3391 + $0x60] sm:$0xff]
      %v3405 = vld [vmem:[%s3391 + $0x68] sm:$0xff]
      %v3406 = vld [vmem:[%s3391 + $0x70] sm:$0xff]
      %v3407 = vld [vmem:[%s3391 + $0x78] sm:$0xff]
      %v3408 = vld [vmem:[%s3391 + $0x80] sm:$0xff]
      %v3409 = vld [vmem:[%s3391 + $0x88] sm:$0xff]
      %v3410 = vld [vmem:[%s3391 + $0x90] sm:$0xff]
      %v3411 = vld [vmem:[%s3391 + $0x98] sm:$0xff]
      %v3412 = vld [vmem:[%s3391 + $0xa0] sm:$0xff]
      %v3413 = vld [vmem:[%s3391 + $0xa8] sm:$0xff]
      %v3414 = vld [vmem:[%s3391 + $0xb0] sm:$0xff]
      %v3415 = vld [vmem:[%s3391 + $0xb8] sm:$0xff]
      %v3416 = vld [vmem:[%s3391 + $0xc0] sm:$0xff]
      %v3417 = vld [vmem:[%s3391 + $0xc8] sm:$0xff]
      %v3418 = vld [vmem:[%s3391 + $0xd0] sm:$0xff]
      %v3419 = vld [vmem:[%s3391 + $0xd8] sm:$0xff]
      %v3420 = vld [vmem:[%s3391 + $0xe0] sm:$0xff]
      %v3421 = vld [vmem:[%s3391 + $0xe8] sm:$0xff]
      %v3422 = vld [vmem:[%s3391 + $0xf0] sm:$0xff]
      %v3423 = vld [vmem:[%s3391 + $0xf8] sm:$0xff]
      %v3424 = vld [vmem:[%s3391 + $0x100] sm:$0xff]
      %v3425 = vld [vmem:[%s3391 + $0x108] sm:$0xff]
      %v3426 = vld [vmem:[%s3391 + $0x110] sm:$0xff]
      %v3427 = vld [vmem:[%s3391 + $0x118] sm:$0xff]
      %v3428 = vld [vmem:[%s3391 + $0x120] sm:$0xff]
      %v3429 = vld [vmem:[%s3391 + $0x128] sm:$0xff]
      %v3430 = vld [vmem:[%s3391 + $0x130] sm:$0xff]
      %v3431 = vld [vmem:[%s3391 + $0x138] sm:$0xff]
      %v3432 = vld [vmem:[%s3391 + $0x140] sm:$0xff]
      %v3433 = vld [vmem:[%s3391 + $0x148] sm:$0xff]
      %v3434 = vld [vmem:[%s3391 + $0x150] sm:$0xff]
      %v3435 = vld [vmem:[%s3391 + $0x158] sm:$0xff]
      %v3436 = vld [vmem:[%s3391 + $0x160] sm:$0xff]
      %v3437 = vld [vmem:[%s3391 + $0x168] sm:$0xff]
      %v3438 = vld [vmem:[%s3391 + $0x170] sm:$0xff]
      %v3439 = vld [vmem:[%s3391 + $0x178] sm:$0xff]
      %v3440 = vld [vmem:[%s3391 + $0x180] sm:$0xff]
      %v3441 = vld [vmem:[%s3391 + $0x188] sm:$0xff]
      %v3442 = vld [vmem:[%s3391 + $0x190] sm:$0xff]
      %v3443 = vld [vmem:[%s3391 + $0x198] sm:$0xff]
      %v3444 = vld [vmem:[%s3391 + $0x1a0] sm:$0xff]
      %v3445 = vld [vmem:[%s3391 + $0x1a8] sm:$0xff]
      %v3446 = vld [vmem:[%s3391 + $0x1b0] sm:$0xff]
      %v3447 = vld [vmem:[%s3391 + $0x1b8] sm:$0xff]
      %v3448 = vld [vmem:[%s3391 + $0x1c0] sm:$0xff]
      %v3449 = vld [vmem:[%s3391 + $0x1c8] sm:$0xff]
      %v3450 = vld [vmem:[%s3391 + $0x1d0] sm:$0xff]
      %v3451 = vld [vmem:[%s3391 + $0x1d8] sm:$0xff]
      %v3452 = vld [vmem:[%s3391 + $0x1e0] sm:$0xff]
      %v3453 = vld [vmem:[%s3391 + $0x1e8] sm:$0xff]
      %v3454 = vld [vmem:[%s3391 + $0x1f0] sm:$0xff]
      %v3455 = vld [vmem:[%s3391 + $0x1f8] sm:$0xff]
      %v3456 = vld [vmem:[%s3391 + $0x200] sm:$0xff]
      %v3457 = vld [vmem:[%s3391 + $0x208] sm:$0xff]
      %v3524 = vunpack.c.l.b16 %v3392
      %v3525 = vunpack.c.h.b16 %v3392
      %v3526 = vunpack.c.l.b16 %v3393
      %v3527 = vunpack.c.h.b16 %v3393
      %v3528 = vunpack.c.l.b16 %v3394
      %v3529 = vunpack.c.h.b16 %v3394
      %v3530 = vunpack.c.l.b16 %v3395
      %v3531 = vunpack.c.h.b16 %v3395
      %v3532 = vunpack.c.l.b16 %v3396
      %v3533 = vunpack.c.h.b16 %v3396
      %v3534 = vunpack.c.l.b16 %v3397
      %v3535 = vunpack.c.h.b16 %v3397
      %v3536 = vunpack.c.l.b16 %v3398
      %v3537 = vunpack.c.h.b16 %v3398
      %v3538 = vunpack.c.l.b16 %v3399
      %v3539 = vunpack.c.h.b16 %v3399
      %v3540 = vunpack.c.l.b16 %v3400
      %v3541 = vunpack.c.h.b16 %v3400
      %v3542 = vunpack.c.l.b16 %v3401
      %v3543 = vunpack.c.h.b16 %v3401
      %v3544 = vunpack.c.l.b16 %v3402
      %v3545 = vunpack.c.h.b16 %v3402
      %v3546 = vunpack.c.l.b16 %v3403
      %v3547 = vunpack.c.h.b16 %v3403
      %v3548 = vunpack.c.l.b16 %v3404
      %v3549 = vunpack.c.h.b16 %v3404
      %v3550 = vunpack.c.l.b16 %v3405
      %v3551 = vunpack.c.h.b16 %v3405
      %v3552 = vunpack.c.l.b16 %v3406
      %v3553 = vunpack.c.h.b16 %v3406
      %v3554 = vunpack.c.l.b16 %v3407
      %v3555 = vunpack.c.h.b16 %v3407
      %v3556 = vunpack.c.l.b16 %v3408
      %v3557 = vunpack.c.h.b16 %v3408
      %v3558 = vunpack.c.l.b16 %v3409
      %v3559 = vunpack.c.h.b16 %v3409
      %v3560 = vunpack.c.l.b16 %v3410
      %v3561 = vunpack.c.h.b16 %v3410
      %v3562 = vunpack.c.l.b16 %v3411
      %v3563 = vunpack.c.h.b16 %v3411
      %v3564 = vunpack.c.l.b16 %v3412
      %v3565 = vunpack.c.h.b16 %v3412
      %v3566 = vunpack.c.l.b16 %v3413
      %v3567 = vunpack.c.h.b16 %v3413
      %v3568 = vunpack.c.l.b16 %v3414
      %v3569 = vunpack.c.h.b16 %v3414
      %v3570 = vunpack.c.l.b16 %v3415
      %v3571 = vunpack.c.h.b16 %v3415
      %v3572 = vunpack.c.l.b16 %v3416
      %v3573 = vunpack.c.h.b16 %v3416
      %v3574 = vunpack.c.l.b16 %v3417
      %v3575 = vunpack.c.h.b16 %v3417
      %v3576 = vunpack.c.l.b16 %v3418
      %v3577 = vunpack.c.h.b16 %v3418
      %v3578 = vunpack.c.l.b16 %v3419
      %v3579 = vunpack.c.h.b16 %v3419
      %v3580 = vunpack.c.l.b16 %v3420
      %v3581 = vunpack.c.h.b16 %v3420
      %v3582 = vunpack.c.l.b16 %v3421
      %v3583 = vunpack.c.h.b16 %v3421
      %v3584 = vunpack.c.l.b16 %v3422
      %v3585 = vunpack.c.h.b16 %v3422
      %v3586 = vunpack.c.l.b16 %v3423
      %v3587 = vunpack.c.h.b16 %v3423
      %v3588 = vunpack.c.l.b16 %v3424
      %v3589 = vunpack.c.h.b16 %v3424
      %v3590 = vunpack.c.l.b16 %v3425
      %v3591 = vunpack.c.h.b16 %v3425
      %v3592 = vunpack.c.l.b16 %v3426
      %v3593 = vunpack.c.h.b16 %v3426
      %v3594 = vunpack.c.l.b16 %v3427
      %v3595 = vunpack.c.h.b16 %v3427
      %v3596 = vunpack.c.l.b16 %v3428
      %v3597 = vunpack.c.h.b16 %v3428
      %v3598 = vunpack.c.l.b16 %v3429
      %v3599 = vunpack.c.h.b16 %v3429
      %v3600 = vunpack.c.l.b16 %v3430
      %v3601 = vunpack.c.h.b16 %v3430
      %v3602 = vunpack.c.l.b16 %v3431
      %v3603 = vunpack.c.h.b16 %v3431
      %v3604 = vunpack.c.l.b16 %v3432
      %v3605 = vunpack.c.h.b16 %v3432
      %v3606 = vunpack.c.l.b16 %v3433
      %v3607 = vunpack.c.h.b16 %v3433
      %v3608 = vunpack.c.l.b16 %v3434
      %v3609 = vunpack.c.h.b16 %v3434
      %v3610 = vunpack.c.l.b16 %v3435
      %v3611 = vunpack.c.h.b16 %v3435
      %v3612 = vunpack.c.l.b16 %v3436
      %v3613 = vunpack.c.h.b16 %v3436
      %v3614 = vunpack.c.l.b16 %v3437
      %v3615 = vunpack.c.h.b16 %v3437
      %v3616 = vunpack.c.l.b16 %v3438
      %v3617 = vunpack.c.h.b16 %v3438
      %v3618 = vunpack.c.l.b16 %v3439
      %v3619 = vunpack.c.h.b16 %v3439
      %v3620 = vunpack.c.l.b16 %v3440
      %v3621 = vunpack.c.h.b16 %v3440
      %v3622 = vunpack.c.l.b16 %v3441
      %v3623 = vunpack.c.h.b16 %v3441
      %v3624 = vunpack.c.l.b16 %v3442
      %v3625 = vunpack.c.h.b16 %v3442
      %v3626 = vunpack.c.l.b16 %v3443
      %v3627 = vunpack.c.h.b16 %v3443
      %v3628 = vunpack.c.l.b16 %v3444
      %v3629 = vunpack.c.h.b16 %v3444
      %v3630 = vunpack.c.l.b16 %v3445
      %v3631 = vunpack.c.h.b16 %v3445
      %v3632 = vunpack.c.l.b16 %v3446
      %v3633 = vunpack.c.h.b16 %v3446
      %v3634 = vunpack.c.l.b16 %v3447
      %v3635 = vunpack.c.h.b16 %v3447
      %v3636 = vunpack.c.l.b16 %v3448
      %v3637 = vunpack.c.h.b16 %v3448
      %v3638 = vunpack.c.l.b16 %v3449
      %v3639 = vunpack.c.h.b16 %v3449
      %v3640 = vunpack.c.l.b16 %v3450
      %v3641 = vunpack.c.h.b16 %v3450
      %v3642 = vunpack.c.l.b16 %v3451
      %v3643 = vunpack.c.h.b16 %v3451
      %v3644 = vunpack.c.l.b16 %v3452
      %v3645 = vunpack.c.h.b16 %v3452
      %v3646 = vunpack.c.l.b16 %v3453
      %v3647 = vunpack.c.h.b16 %v3453
      %v3648 = vunpack.c.l.b16 %v3454
      %v3649 = vunpack.c.h.b16 %v3454
      %v3650 = vunpack.c.l.b16 %v3455
      %v3651 = vunpack.c.h.b16 %v3455
      %v3652 = vunpack.c.l.b16 %v3456
      %v3653 = vunpack.c.h.b16 %v3456
      %v3654 = vunpack.c.l.b16 %v3457
      %v3655 = vunpack.c.h.b16 %v3457
      %v3656 = vpack.c.b16 %v3526, %v3524
      %v3657 = vpack.c.b16 %v3527, %v3525
      %v3658 = vpack.c.b16 %v3530, %v3528
      %v3659 = vpack.c.b16 %v3531, %v3529
      %v3660 = vpack.c.b16 %v3534, %v3532
      %v3661 = vpack.c.b16 %v3535, %v3533
      %v3662 = vpack.c.b16 %v3538, %v3536
      %v3663 = vpack.c.b16 %v3539, %v3537
      %v3664 = vpack.c.b16 %v3542, %v3540
      %v3665 = vpack.c.b16 %v3543, %v3541
      %v3666 = vpack.c.b16 %v3546, %v3544
      %v3667 = vpack.c.b16 %v3547, %v3545
      %v3668 = vpack.c.b16 %v3550, %v3548
      %v3669 = vpack.c.b16 %v3551, %v3549
      %v3670 = vpack.c.b16 %v3554, %v3552
      %v3671 = vpack.c.b16 %v3555, %v3553
      %v3672 = vpack.c.b16 %v3558, %v3556
      %v3673 = vpack.c.b16 %v3559, %v3557
      %v3674 = vpack.c.b16 %v3562, %v3560
      %v3675 = vpack.c.b16 %v3563, %v3561
      %v3676 = vpack.c.b16 %v3566, %v3564
      %v3677 = vpack.c.b16 %v3567, %v3565
      %v3678 = vpack.c.b16 %v3570, %v3568
      %v3679 = vpack.c.b16 %v3571, %v3569
      %v3680 = vpack.c.b16 %v3574, %v3572
      %v3681 = vpack.c.b16 %v3575, %v3573
      %v3682 = vpack.c.b16 %v3578, %v3576
      %v3683 = vpack.c.b16 %v3579, %v3577
      %v3684 = vpack.c.b16 %v3582, %v3580
      %v3685 = vpack.c.b16 %v3583, %v3581
      %v3686 = vpack.c.b16 %v3586, %v3584
      %v3687 = vpack.c.b16 %v3587, %v3585
      %v3688 = vpack.c.b16 %v3590, %v3588
      %v3689 = vpack.c.b16 %v3591, %v3589
      %v3690 = vpack.c.b16 %v3594, %v3592
      %v3691 = vpack.c.b16 %v3595, %v3593
      %v3692 = vpack.c.b16 %v3598, %v3596
      %v3693 = vpack.c.b16 %v3599, %v3597
      %v3694 = vpack.c.b16 %v3602, %v3600
      %v3695 = vpack.c.b16 %v3603, %v3601
      %v3696 = vpack.c.b16 %v3606, %v3604
      %v3697 = vpack.c.b16 %v3607, %v3605
      %v3698 = vpack.c.b16 %v3610, %v3608
      %v3699 = vpack.c.b16 %v3611, %v3609
      %v3700 = vpack.c.b16 %v3614, %v3612
      %v3701 = vpack.c.b16 %v3615, %v3613
      %v3702 = vpack.c.b16 %v3618, %v3616
      %v3703 = vpack.c.b16 %v3619, %v3617
      %v3704 = vpack.c.b16 %v3622, %v3620
      %v3705 = vpack.c.b16 %v3623, %v3621
      %v3706 = vpack.c.b16 %v3626, %v3624
      %v3707 = vpack.c.b16 %v3627, %v3625
      %v3708 = vpack.c.b16 %v3630, %v3628
      %v3709 = vpack.c.b16 %v3631, %v3629
      %v3710 = vpack.c.b16 %v3634, %v3632
      %v3711 = vpack.c.b16 %v3635, %v3633
      %v3712 = vpack.c.b16 %v3638, %v3636
      %v3713 = vpack.c.b16 %v3639, %v3637
      %v3714 = vpack.c.b16 %v3642, %v3640
      %v3715 = vpack.c.b16 %v3643, %v3641
      %v3716 = vpack.c.b16 %v3646, %v3644
      %v3717 = vpack.c.b16 %v3647, %v3645
      %v3718 = vpack.c.b16 %v3650, %v3648
      %v3719 = vpack.c.b16 %v3651, %v3649
      %v3720 = vpack.c.b16 %v3654, %v3652
      %v3721 = vpack.c.b16 %v3655, %v3653
      %3788 = vmatprep.subr.bf16.mxu0 %v3671
      %3789 = vmatpush1.bf16.msra.mxu0 %v3670
      %3790 = vmatprep.subr.bf16.mxu0 %v3669
      %3791 = vmatpush1.bf16.msra.mxu0 %v3668
      %3792 = vmatprep.subr.bf16.mxu0 %v3667
      %3793 = vmatpush1.bf16.msra.mxu0 %v3666
      %3794 = vmatprep.subr.bf16.mxu0 %v3665
      %3795 = vmatpush1.bf16.msra.mxu0 %v3664
      %3796 = vmatprep.subr.bf16.mxu0 %v3663
      %3797 = vmatpush1.bf16.msra.mxu0 %v3662
      %3798 = vmatprep.subr.bf16.mxu0 %v3661
      %3799 = vmatpush1.bf16.msra.mxu0 %v3660
      %3800 = vmatprep.subr.bf16.mxu0 %v3659
      %3801 = vmatpush1.bf16.msra.mxu0 %v3658
      %3802 = vmatprep.subr.bf16.mxu0 %v3657
      %3803 = vmatpush1.bf16.msra.mxu0 %v3656
      %3804 = vmatprep.subr.bf16.mxu0 %v3687
      %3805 = vmatpush2.bf16.msra.mxu0 %v3686
      %3806 = vmatprep.subr.bf16.mxu0 %v3685
      %3807 = vmatpush2.bf16.msra.mxu0 %v3684
      %3808 = vmatprep.subr.bf16.mxu0 %v3683
      %3809 = vmatpush2.bf16.msra.mxu0 %v3682
      %3810 = vmatprep.subr.bf16.mxu0 %v3681
      %3811 = vmatpush2.bf16.msra.mxu0 %v3680
      %3812 = vmatprep.subr.bf16.mxu0 %v3679
      %3813 = vmatpush2.bf16.msra.mxu0 %v3678
      %3814 = vmatprep.subr.bf16.mxu0 %v3677
      %3815 = vmatpush2.bf16.msra.mxu0 %v3676
      %3816 = vmatprep.subr.bf16.mxu0 %v3675
      %3817 = vmatpush2.bf16.msra.mxu0 %v3674
      %3818 = vmatprep.subr.bf16.mxu0 %v3673
      %3819 = vmatpush2.bf16.msra.mxu0 %v3672
      %3820 = vmatprep.mubr.bf16.mxu0 %v271
      %3821 = vmatmul.mubr.bf16.gmra.mxu0 %v263
      %v3822 = vpop.f32.mrf.mxu0
      %v3823 = vadd.f32 %v252, %v3822
      %v3824 = vpop.f32.mrf.mxu0
      %v3825 = vadd.f32 %v252, %v3824
      %v3826 = vpop.f32.mrf.mxu0
      %v3827 = vpop.f32.mrf.mxu0
      %3828 = vdwg.mxu0
      %3829 = vmatprep.subr.bf16.mxu0 %v3703
      %3830 = vmatpush1.bf16.msra.mxu0 %v3702
      %3831 = vmatprep.subr.bf16.mxu0 %v3701
      %3832 = vmatpush1.bf16.msra.mxu0 %v3700
      %3833 = vmatprep.subr.bf16.mxu0 %v3699
      %3834 = vmatpush1.bf16.msra.mxu0 %v3698
      %3835 = vmatprep.subr.bf16.mxu0 %v3697
      %3836 = vmatpush1.bf16.msra.mxu0 %v3696
      %3837 = vmatprep.subr.bf16.mxu0 %v3695
      %3838 = vmatpush1.bf16.msra.mxu0 %v3694
      %3839 = vmatprep.subr.bf16.mxu0 %v3693
      %3840 = vmatpush1.bf16.msra.mxu0 %v3692
      %3841 = vmatprep.subr.bf16.mxu0 %v3691
      %3842 = vmatpush1.bf16.msra.mxu0 %v3690
      %3843 = vmatprep.subr.bf16.mxu0 %v3689
      %3844 = vmatpush1.bf16.msra.mxu0 %v3688
      %3845 = vmatprep.subr.bf16.mxu0 %v3719
      %3846 = vmatpush2.bf16.msra.mxu0 %v3718
      %3847 = vmatprep.subr.bf16.mxu0 %v3717
      %3848 = vmatpush2.bf16.msra.mxu0 %v3716
      %3849 = vmatprep.subr.bf16.mxu0 %v3715
      %3850 = vmatpush2.bf16.msra.mxu0 %v3714
      %3851 = vmatprep.subr.bf16.mxu0 %v3713
      %3852 = vmatpush2.bf16.msra.mxu0 %v3712
      %3853 = vmatprep.subr.bf16.mxu0 %v3711
      %3854 = vmatpush2.bf16.msra.mxu0 %v3710
      %3855 = vmatprep.subr.bf16.mxu0 %v3709
      %3856 = vmatpush2.bf16.msra.mxu0 %v3708
      %3857 = vmatprep.subr.bf16.mxu0 %v3707
      %3858 = vmatpush2.bf16.msra.mxu0 %v3706
      %3859 = vmatprep.subr.bf16.mxu0 %v3705
      %3860 = vmatpush2.bf16.msra.mxu0 %v3704
      %3861 = vmatprep.mubr.bf16.mxu0 %v272
      %3862 = vmatmul.mubr.bf16.gmra.mxu0 %v270
      %v3863 = vpop.f32.mrf.mxu0
      %v3864 = vadd.f32 %v3823, %v3863
      %v3865 = vpop.f32.mrf.mxu0
      %v3866 = vadd.f32 %v3825, %v3865
      %v3867 = vpop.f32.mrf.mxu0
      %v3868 = vpop.f32.mrf.mxu0
      %3869 = vdwg.mxu0
      %3870 = vmatprep.subr.bf16.mxu0 0
      %3871 = vmatpush1.bf16.msra.mxu0 0
      %3872 = vmatprep.subr.bf16.mxu0 0
      %3873 = vmatpush1.bf16.msra.mxu0 0
      %3874 = vmatprep.subr.bf16.mxu0 0
      %3875 = vmatpush1.bf16.msra.mxu0 0
      %3876 = vmatprep.subr.bf16.mxu0 0
      %3877 = vmatpush1.bf16.msra.mxu0 0
      %3878 = vmatprep.subr.bf16.mxu0 0
      %3879 = vmatpush1.bf16.msra.mxu0 0
      %3880 = vmatprep.subr.bf16.mxu0 0
      %3881 = vmatpush1.bf16.msra.mxu0 0
      %3882 = vmatprep.subr.bf16.mxu0 0
      %3883 = vmatpush1.bf16.msra.mxu0 0
      %3884 = vmatprep.subr.bf16.mxu0 %v3721
      %3885 = vmatpush1.bf16.msra.mxu0 %v3720
      %3886 = vmatprep.subr.bf16.mxu0 0
      %3887 = vmatpush2.bf16.msra.mxu0 0
      %3888 = vmatprep.subr.bf16.mxu0 0
      %3889 = vmatpush2.bf16.msra.mxu0 0
      %3890 = vmatprep.subr.bf16.mxu0 0
      %3891 = vmatpush2.bf16.msra.mxu0 0
      %3892 = vmatprep.subr.bf16.mxu0 0
      %3893 = vmatpush2.bf16.msra.mxu0 0
      %3894 = vmatprep.subr.bf16.mxu0 0
      %3895 = vmatpush2.bf16.msra.mxu0 0
      %3896 = vmatprep.subr.bf16.mxu0 0
      %3897 = vmatpush2.bf16.msra.mxu0 0
      %3898 = vmatprep.subr.bf16.mxu0 0
      %3899 = vmatpush2.bf16.msra.mxu0 0
      %3900 = vmatprep.subr.bf16.mxu0 0
      %3901 = vmatpush2.bf16.msra.mxu0 0
      %3902 = vmatprep.mubr.bf16.mxu0 0
      %3903 = vmatmul.mubr.bf16.gmra.mxu0 %v616
      %v3904 = vpop.f32.mrf.mxu0
      %v3905 = vadd.f32 %v3864, %v3904
      %v3906 = vpop.f32.mrf.mxu0
      %v3907 = vadd.f32 %v3866, %v3906
      %v3908 = vpop.f32.mrf.mxu0
      %v3909 = vpop.f32.mrf.mxu0
      %3910 = vdwg.mxu0
      %v3911 = vmax.f32 %v3905, 0.0
      %v3912 = vmax.f32 %v3907, 0.0
      %v3915 = vcombine.low %v3911, %v3912
      %s3917 = scalar_lea.vmem %s177, 48
      %3918 = vst.msk [vmem:[%s3917] sm:$0xff] %vm749, %v3915
      %s3919 = scalar_lea.vmem %s170, 3696
      %v3920 = vld [vmem:[%s3919] sm:$0xff]
      %v3921 = vld [vmem:[%s3919 + $0x8] sm:$0xff]
      %v3922 = vld [vmem:[%s3919 + $0x10] sm:$0xff]
      %v3923 = vld [vmem:[%s3919 + $0x18] sm:$0xff]
      %v3924 = vld [vmem:[%s3919 + $0x20] sm:$0xff]
      %v3925 = vld [vmem:[%s3919 + $0x28] sm:$0xff]
      %v3926 = vld [vmem:[%s3919 + $0x30] sm:$0xff]
      %v3927 = vld [vmem:[%s3919 + $0x38] sm:$0xff]
      %v3928 = vld [vmem:[%s3919 + $0x40] sm:$0xff]
      %v3929 = vld [vmem:[%s3919 + $0x48] sm:$0xff]
      %v3930 = vld [vmem:[%s3919 + $0x50] sm:$0xff]
      %v3931 = vld [vmem:[%s3919 + $0x58] sm:$0xff]
      %v3932 = vld [vmem:[%s3919 + $0x60] sm:$0xff]
      %v3933 = vld [vmem:[%s3919 + $0x68] sm:$0xff]
      %v3934 = vld [vmem:[%s3919 + $0x70] sm:$0xff]
      %v3935 = vld [vmem:[%s3919 + $0x78] sm:$0xff]
      %v3936 = vld [vmem:[%s3919 + $0x80] sm:$0xff]
      %v3937 = vld [vmem:[%s3919 + $0x88] sm:$0xff]
      %v3938 = vld [vmem:[%s3919 + $0x90] sm:$0xff]
      %v3939 = vld [vmem:[%s3919 + $0x98] sm:$0xff]
      %v3940 = vld [vmem:[%s3919 + $0xa0] sm:$0xff]
      %v3941 = vld [vmem:[%s3919 + $0xa8] sm:$0xff]
      %v3942 = vld [vmem:[%s3919 + $0xb0] sm:$0xff]
      %v3943 = vld [vmem:[%s3919 + $0xb8] sm:$0xff]
      %v3944 = vld [vmem:[%s3919 + $0xc0] sm:$0xff]
      %v3945 = vld [vmem:[%s3919 + $0xc8] sm:$0xff]
      %v3946 = vld [vmem:[%s3919 + $0xd0] sm:$0xff]
      %v3947 = vld [vmem:[%s3919 + $0xd8] sm:$0xff]
      %v3948 = vld [vmem:[%s3919 + $0xe0] sm:$0xff]
      %v3949 = vld [vmem:[%s3919 + $0xe8] sm:$0xff]
      %v3950 = vld [vmem:[%s3919 + $0xf0] sm:$0xff]
      %v3951 = vld [vmem:[%s3919 + $0xf8] sm:$0xff]
      %v3952 = vld [vmem:[%s3919 + $0x100] sm:$0xff]
      %v3953 = vld [vmem:[%s3919 + $0x108] sm:$0xff]
      %v3954 = vld [vmem:[%s3919 + $0x110] sm:$0xff]
      %v3955 = vld [vmem:[%s3919 + $0x118] sm:$0xff]
      %v3956 = vld [vmem:[%s3919 + $0x120] sm:$0xff]
      %v3957 = vld [vmem:[%s3919 + $0x128] sm:$0xff]
      %v3958 = vld [vmem:[%s3919 + $0x130] sm:$0xff]
      %v3959 = vld [vmem:[%s3919 + $0x138] sm:$0xff]
      %v3960 = vld [vmem:[%s3919 + $0x140] sm:$0xff]
      %v3961 = vld [vmem:[%s3919 + $0x148] sm:$0xff]
      %v3962 = vld [vmem:[%s3919 + $0x150] sm:$0xff]
      %v3963 = vld [vmem:[%s3919 + $0x158] sm:$0xff]
      %v3964 = vld [vmem:[%s3919 + $0x160] sm:$0xff]
      %v3965 = vld [vmem:[%s3919 + $0x168] sm:$0xff]
      %v3966 = vld [vmem:[%s3919 + $0x170] sm:$0xff]
      %v3967 = vld [vmem:[%s3919 + $0x178] sm:$0xff]
      %v3968 = vld [vmem:[%s3919 + $0x180] sm:$0xff]
      %v3969 = vld [vmem:[%s3919 + $0x188] sm:$0xff]
      %v3970 = vld [vmem:[%s3919 + $0x190] sm:$0xff]
      %v3971 = vld [vmem:[%s3919 + $0x198] sm:$0xff]
      %v3972 = vld [vmem:[%s3919 + $0x1a0] sm:$0xff]
      %v3973 = vld [vmem:[%s3919 + $0x1a8] sm:$0xff]
      %v3974 = vld [vmem:[%s3919 + $0x1b0] sm:$0xff]
      %v3975 = vld [vmem:[%s3919 + $0x1b8] sm:$0xff]
      %v3976 = vld [vmem:[%s3919 + $0x1c0] sm:$0xff]
      %v3977 = vld [vmem:[%s3919 + $0x1c8] sm:$0xff]
      %v3978 = vld [vmem:[%s3919 + $0x1d0] sm:$0xff]
      %v3979 = vld [vmem:[%s3919 + $0x1d8] sm:$0xff]
      %v3980 = vld [vmem:[%s3919 + $0x1e0] sm:$0xff]
      %v3981 = vld [vmem:[%s3919 + $0x1e8] sm:$0xff]
      %v3982 = vld [vmem:[%s3919 + $0x1f0] sm:$0xff]
      %v3983 = vld [vmem:[%s3919 + $0x1f8] sm:$0xff]
      %v3984 = vld [vmem:[%s3919 + $0x200] sm:$0xff]
      %v3985 = vld [vmem:[%s3919 + $0x208] sm:$0xff]
      %v4052 = vunpack.c.l.b16 %v3920
      %v4053 = vunpack.c.h.b16 %v3920
      %v4054 = vunpack.c.l.b16 %v3921
      %v4055 = vunpack.c.h.b16 %v3921
      %v4056 = vunpack.c.l.b16 %v3922
      %v4057 = vunpack.c.h.b16 %v3922
      %v4058 = vunpack.c.l.b16 %v3923
      %v4059 = vunpack.c.h.b16 %v3923
      %v4060 = vunpack.c.l.b16 %v3924
      %v4061 = vunpack.c.h.b16 %v3924
      %v4062 = vunpack.c.l.b16 %v3925
      %v4063 = vunpack.c.h.b16 %v3925
      %v4064 = vunpack.c.l.b16 %v3926
      %v4065 = vunpack.c.h.b16 %v3926
      %v4066 = vunpack.c.l.b16 %v3927
      %v4067 = vunpack.c.h.b16 %v3927
      %v4068 = vunpack.c.l.b16 %v3928
      %v4069 = vunpack.c.h.b16 %v3928
      %v4070 = vunpack.c.l.b16 %v3929
      %v4071 = vunpack.c.h.b16 %v3929
      %v4072 = vunpack.c.l.b16 %v3930
      %v4073 = vunpack.c.h.b16 %v3930
      %v4074 = vunpack.c.l.b16 %v3931
      %v4075 = vunpack.c.h.b16 %v3931
      %v4076 = vunpack.c.l.b16 %v3932
      %v4077 = vunpack.c.h.b16 %v3932
      %v4078 = vunpack.c.l.b16 %v3933
      %v4079 = vunpack.c.h.b16 %v3933
      %v4080 = vunpack.c.l.b16 %v3934
      %v4081 = vunpack.c.h.b16 %v3934
      %v4082 = vunpack.c.l.b16 %v3935
      %v4083 = vunpack.c.h.b16 %v3935
      %v4084 = vunpack.c.l.b16 %v3936
      %v4085 = vunpack.c.h.b16 %v3936
      %v4086 = vunpack.c.l.b16 %v3937
      %v4087 = vunpack.c.h.b16 %v3937
      %v4088 = vunpack.c.l.b16 %v3938
      %v4089 = vunpack.c.h.b16 %v3938
      %v4090 = vunpack.c.l.b16 %v3939
      %v4091 = vunpack.c.h.b16 %v3939
      %v4092 = vunpack.c.l.b16 %v3940
      %v4093 = vunpack.c.h.b16 %v3940
      %v4094 = vunpack.c.l.b16 %v3941
      %v4095 = vunpack.c.h.b16 %v3941
      %v4096 = vunpack.c.l.b16 %v3942
      %v4097 = vunpack.c.h.b16 %v3942
      %v4098 = vunpack.c.l.b16 %v3943
      %v4099 = vunpack.c.h.b16 %v3943
      %v4100 = vunpack.c.l.b16 %v3944
      %v4101 = vunpack.c.h.b16 %v3944
      %v4102 = vunpack.c.l.b16 %v3945
      %v4103 = vunpack.c.h.b16 %v3945
      %v4104 = vunpack.c.l.b16 %v3946
      %v4105 = vunpack.c.h.b16 %v3946
      %v4106 = vunpack.c.l.b16 %v3947
      %v4107 = vunpack.c.h.b16 %v3947
      %v4108 = vunpack.c.l.b16 %v3948
      %v4109 = vunpack.c.h.b16 %v3948
      %v4110 = vunpack.c.l.b16 %v3949
      %v4111 = vunpack.c.h.b16 %v3949
      %v4112 = vunpack.c.l.b16 %v3950
      %v4113 = vunpack.c.h.b16 %v3950
      %v4114 = vunpack.c.l.b16 %v3951
      %v4115 = vunpack.c.h.b16 %v3951
      %v4116 = vunpack.c.l.b16 %v3952
      %v4117 = vunpack.c.h.b16 %v3952
      %v4118 = vunpack.c.l.b16 %v3953
      %v4119 = vunpack.c.h.b16 %v3953
      %v4120 = vunpack.c.l.b16 %v3954
      %v4121 = vunpack.c.h.b16 %v3954
      %v4122 = vunpack.c.l.b16 %v3955
      %v4123 = vunpack.c.h.b16 %v3955
      %v4124 = vunpack.c.l.b16 %v3956
      %v4125 = vunpack.c.h.b16 %v3956
      %v4126 = vunpack.c.l.b16 %v3957
      %v4127 = vunpack.c.h.b16 %v3957
      %v4128 = vunpack.c.l.b16 %v3958
      %v4129 = vunpack.c.h.b16 %v3958
      %v4130 = vunpack.c.l.b16 %v3959
      %v4131 = vunpack.c.h.b16 %v3959
      %v4132 = vunpack.c.l.b16 %v3960
      %v4133 = vunpack.c.h.b16 %v3960
      %v4134 = vunpack.c.l.b16 %v3961
      %v4135 = vunpack.c.h.b16 %v3961
      %v4136 = vunpack.c.l.b16 %v3962
      %v4137 = vunpack.c.h.b16 %v3962
      %v4138 = vunpack.c.l.b16 %v3963
      %v4139 = vunpack.c.h.b16 %v3963
      %v4140 = vunpack.c.l.b16 %v3964
      %v4141 = vunpack.c.h.b16 %v3964
      %v4142 = vunpack.c.l.b16 %v3965
      %v4143 = vunpack.c.h.b16 %v3965
      %v4144 = vunpack.c.l.b16 %v3966
      %v4145 = vunpack.c.h.b16 %v3966
      %v4146 = vunpack.c.l.b16 %v3967
      %v4147 = vunpack.c.h.b16 %v3967
      %v4148 = vunpack.c.l.b16 %v3968
      %v4149 = vunpack.c.h.b16 %v3968
      %v4150 = vunpack.c.l.b16 %v3969
      %v4151 = vunpack.c.h.b16 %v3969
      %v4152 = vunpack.c.l.b16 %v3970
      %v4153 = vunpack.c.h.b16 %v3970
      %v4154 = vunpack.c.l.b16 %v3971
      %v4155 = vunpack.c.h.b16 %v3971
      %v4156 = vunpack.c.l.b16 %v3972
      %v4157 = vunpack.c.h.b16 %v3972
      %v4158 = vunpack.c.l.b16 %v3973
      %v4159 = vunpack.c.h.b16 %v3973
      %v4160 = vunpack.c.l.b16 %v3974
      %v4161 = vunpack.c.h.b16 %v3974
      %v4162 = vunpack.c.l.b16 %v3975
      %v4163 = vunpack.c.h.b16 %v3975
      %v4164 = vunpack.c.l.b16 %v3976
      %v4165 = vunpack.c.h.b16 %v3976
      %v4166 = vunpack.c.l.b16 %v3977
      %v4167 = vunpack.c.h.b16 %v3977
      %v4168 = vunpack.c.l.b16 %v3978
      %v4169 = vunpack.c.h.b16 %v3978
      %v4170 = vunpack.c.l.b16 %v3979
      %v4171 = vunpack.c.h.b16 %v3979
      %v4172 = vunpack.c.l.b16 %v3980
      %v4173 = vunpack.c.h.b16 %v3980
      %v4174 = vunpack.c.l.b16 %v3981
      %v4175 = vunpack.c.h.b16 %v3981
      %v4176 = vunpack.c.l.b16 %v3982
      %v4177 = vunpack.c.h.b16 %v3982
      %v4178 = vunpack.c.l.b16 %v3983
      %v4179 = vunpack.c.h.b16 %v3983
      %v4180 = vunpack.c.l.b16 %v3984
      %v4181 = vunpack.c.h.b16 %v3984
      %v4182 = vunpack.c.l.b16 %v3985
      %v4183 = vunpack.c.h.b16 %v3985
      %v4184 = vpack.c.b16 %v4054, %v4052
      %v4185 = vpack.c.b16 %v4055, %v4053
      %v4186 = vpack.c.b16 %v4058, %v4056
      %v4187 = vpack.c.b16 %v4059, %v4057
      %v4188 = vpack.c.b16 %v4062, %v4060
      %v4189 = vpack.c.b16 %v4063, %v4061
      %v4190 = vpack.c.b16 %v4066, %v4064
      %v4191 = vpack.c.b16 %v4067, %v4065
      %v4192 = vpack.c.b16 %v4070, %v4068
      %v4193 = vpack.c.b16 %v4071, %v4069
      %v4194 = vpack.c.b16 %v4074, %v4072
      %v4195 = vpack.c.b16 %v4075, %v4073
      %v4196 = vpack.c.b16 %v4078, %v4076
      %v4197 = vpack.c.b16 %v4079, %v4077
      %v4198 = vpack.c.b16 %v4082, %v4080
      %v4199 = vpack.c.b16 %v4083, %v4081
      %v4200 = vpack.c.b16 %v4086, %v4084
      %v4201 = vpack.c.b16 %v4087, %v4085
      %v4202 = vpack.c.b16 %v4090, %v4088
      %v4203 = vpack.c.b16 %v4091, %v4089
      %v4204 = vpack.c.b16 %v4094, %v4092
      %v4205 = vpack.c.b16 %v4095, %v4093
      %v4206 = vpack.c.b16 %v4098, %v4096
      %v4207 = vpack.c.b16 %v4099, %v4097
      %v4208 = vpack.c.b16 %v4102, %v4100
      %v4209 = vpack.c.b16 %v4103, %v4101
      %v4210 = vpack.c.b16 %v4106, %v4104
      %v4211 = vpack.c.b16 %v4107, %v4105
      %v4212 = vpack.c.b16 %v4110, %v4108
      %v4213 = vpack.c.b16 %v4111, %v4109
      %v4214 = vpack.c.b16 %v4114, %v4112
      %v4215 = vpack.c.b16 %v4115, %v4113
      %v4216 = vpack.c.b16 %v4118, %v4116
      %v4217 = vpack.c.b16 %v4119, %v4117
      %v4218 = vpack.c.b16 %v4122, %v4120
      %v4219 = vpack.c.b16 %v4123, %v4121
      %v4220 = vpack.c.b16 %v4126, %v4124
      %v4221 = vpack.c.b16 %v4127, %v4125
      %v4222 = vpack.c.b16 %v4130, %v4128
      %v4223 = vpack.c.b16 %v4131, %v4129
      %v4224 = vpack.c.b16 %v4134, %v4132
      %v4225 = vpack.c.b16 %v4135, %v4133
      %v4226 = vpack.c.b16 %v4138, %v4136
      %v4227 = vpack.c.b16 %v4139, %v4137
      %v4228 = vpack.c.b16 %v4142, %v4140
      %v4229 = vpack.c.b16 %v4143, %v4141
      %v4230 = vpack.c.b16 %v4146, %v4144
      %v4231 = vpack.c.b16 %v4147, %v4145
      %v4232 = vpack.c.b16 %v4150, %v4148
      %v4233 = vpack.c.b16 %v4151, %v4149
      %v4234 = vpack.c.b16 %v4154, %v4152
      %v4235 = vpack.c.b16 %v4155, %v4153
      %v4236 = vpack.c.b16 %v4158, %v4156
      %v4237 = vpack.c.b16 %v4159, %v4157
      %v4238 = vpack.c.b16 %v4162, %v4160
      %v4239 = vpack.c.b16 %v4163, %v4161
      %v4240 = vpack.c.b16 %v4166, %v4164
      %v4241 = vpack.c.b16 %v4167, %v4165
      %v4242 = vpack.c.b16 %v4170, %v4168
      %v4243 = vpack.c.b16 %v4171, %v4169
      %v4244 = vpack.c.b16 %v4174, %v4172
      %v4245 = vpack.c.b16 %v4175, %v4173
      %v4246 = vpack.c.b16 %v4178, %v4176
      %v4247 = vpack.c.b16 %v4179, %v4177
      %v4248 = vpack.c.b16 %v4182, %v4180
      %v4249 = vpack.c.b16 %v4183, %v4181
      %4316 = vmatprep.subr.bf16.mxu0 %v4199
      %4317 = vmatpush1.bf16.msra.mxu0 %v4198
      %4318 = vmatprep.subr.bf16.mxu0 %v4197
      %4319 = vmatpush1.bf16.msra.mxu0 %v4196
      %4320 = vmatprep.subr.bf16.mxu0 %v4195
      %4321 = vmatpush1.bf16.msra.mxu0 %v4194
      %4322 = vmatprep.subr.bf16.mxu0 %v4193
      %4323 = vmatpush1.bf16.msra.mxu0 %v4192
      %4324 = vmatprep.subr.bf16.mxu0 %v4191
      %4325 = vmatpush1.bf16.msra.mxu0 %v4190
      %4326 = vmatprep.subr.bf16.mxu0 %v4189
      %4327 = vmatpush1.bf16.msra.mxu0 %v4188
      %4328 = vmatprep.subr.bf16.mxu0 %v4187
      %4329 = vmatpush1.bf16.msra.mxu0 %v4186
      %4330 = vmatprep.subr.bf16.mxu0 %v4185
      %4331 = vmatpush1.bf16.msra.mxu0 %v4184
      %4332 = vmatprep.subr.bf16.mxu0 %v4215
      %4333 = vmatpush2.bf16.msra.mxu0 %v4214
      %4334 = vmatprep.subr.bf16.mxu0 %v4213
      %4335 = vmatpush2.bf16.msra.mxu0 %v4212
      %4336 = vmatprep.subr.bf16.mxu0 %v4211
      %4337 = vmatpush2.bf16.msra.mxu0 %v4210
      %4338 = vmatprep.subr.bf16.mxu0 %v4209
      %4339 = vmatpush2.bf16.msra.mxu0 %v4208
      %4340 = vmatprep.subr.bf16.mxu0 %v4207
      %4341 = vmatpush2.bf16.msra.mxu0 %v4206
      %4342 = vmatprep.subr.bf16.mxu0 %v4205
      %4343 = vmatpush2.bf16.msra.mxu0 %v4204
      %4344 = vmatprep.subr.bf16.mxu0 %v4203
      %4345 = vmatpush2.bf16.msra.mxu0 %v4202
      %4346 = vmatprep.subr.bf16.mxu0 %v4201
      %4347 = vmatpush2.bf16.msra.mxu0 %v4200
      %4348 = vmatprep.mubr.bf16.mxu0 %v271
      %4349 = vmatmul.mubr.bf16.gmra.mxu0 %v263
      %v4350 = vpop.f32.mrf.mxu0
      %v4351 = vadd.f32 %v252, %v4350
      %v4352 = vpop.f32.mrf.mxu0
      %v4353 = vadd.f32 %v252, %v4352
      %v4354 = vpop.f32.mrf.mxu0
      %v4355 = vpop.f32.mrf.mxu0
      %4356 = vdwg.mxu0
      %4357 = vmatprep.subr.bf16.mxu0 %v4231
      %4358 = vmatpush1.bf16.msra.mxu0 %v4230
      %4359 = vmatprep.subr.bf16.mxu0 %v4229
      %4360 = vmatpush1.bf16.msra.mxu0 %v4228
      %4361 = vmatprep.subr.bf16.mxu0 %v4227
      %4362 = vmatpush1.bf16.msra.mxu0 %v4226
      %4363 = vmatprep.subr.bf16.mxu0 %v4225
      %4364 = vmatpush1.bf16.msra.mxu0 %v4224
      %4365 = vmatprep.subr.bf16.mxu0 %v4223
      %4366 = vmatpush1.bf16.msra.mxu0 %v4222
      %4367 = vmatprep.subr.bf16.mxu0 %v4221
      %4368 = vmatpush1.bf16.msra.mxu0 %v4220
      %4369 = vmatprep.subr.bf16.mxu0 %v4219
      %4370 = vmatpush1.bf16.msra.mxu0 %v4218
      %4371 = vmatprep.subr.bf16.mxu0 %v4217
      %4372 = vmatpush1.bf16.msra.mxu0 %v4216
      %4373 = vmatprep.subr.bf16.mxu0 %v4247
      %4374 = vmatpush2.bf16.msra.mxu0 %v4246
      %4375 = vmatprep.subr.bf16.mxu0 %v4245
      %4376 = vmatpush2.bf16.msra.mxu0 %v4244
      %4377 = vmatprep.subr.bf16.mxu0 %v4243
      %4378 = vmatpush2.bf16.msra.mxu0 %v4242
      %4379 = vmatprep.subr.bf16.mxu0 %v4241
      %4380 = vmatpush2.bf16.msra.mxu0 %v4240
      %4381 = vmatprep.subr.bf16.mxu0 %v4239
      %4382 = vmatpush2.bf16.msra.mxu0 %v4238
      %4383 = vmatprep.subr.bf16.mxu0 %v4237
      %4384 = vmatpush2.bf16.msra.mxu0 %v4236
      %4385 = vmatprep.subr.bf16.mxu0 %v4235
      %4386 = vmatpush2.bf16.msra.mxu0 %v4234
      %4387 = vmatprep.subr.bf16.mxu0 %v4233
      %4388 = vmatpush2.bf16.msra.mxu0 %v4232
      %4389 = vmatprep.mubr.bf16.mxu0 %v272
      %4390 = vmatmul.mubr.bf16.gmra.mxu0 %v270
      %v4391 = vpop.f32.mrf.mxu0
      %v4392 = vadd.f32 %v4351, %v4391
      %v4393 = vpop.f32.mrf.mxu0
      %v4394 = vadd.f32 %v4353, %v4393
      %v4395 = vpop.f32.mrf.mxu0
      %v4396 = vpop.f32.mrf.mxu0
      %4397 = vdwg.mxu0
      %4398 = vmatprep.subr.bf16.mxu0 0
      %4399 = vmatpush1.bf16.msra.mxu0 0
      %4400 = vmatprep.subr.bf16.mxu0 0
      %4401 = vmatpush1.bf16.msra.mxu0 0
      %4402 = vmatprep.subr.bf16.mxu0 0
      %4403 = vmatpush1.bf16.msra.mxu0 0
      %4404 = vmatprep.subr.bf16.mxu0 0
      %4405 = vmatpush1.bf16.msra.mxu0 0
      %4406 = vmatprep.subr.bf16.mxu0 0
      %4407 = vmatpush1.bf16.msra.mxu0 0
      %4408 = vmatprep.subr.bf16.mxu0 0
      %4409 = vmatpush1.bf16.msra.mxu0 0
      %4410 = vmatprep.subr.bf16.mxu0 0
      %4411 = vmatpush1.bf16.msra.mxu0 0
      %4412 = vmatprep.subr.bf16.mxu0 %v4249
      %4413 = vmatpush1.bf16.msra.mxu0 %v4248
      %4414 = vmatprep.subr.bf16.mxu0 0
      %4415 = vmatpush2.bf16.msra.mxu0 0
      %4416 = vmatprep.subr.bf16.mxu0 0
      %4417 = vmatpush2.bf16.msra.mxu0 0
      %4418 = vmatprep.subr.bf16.mxu0 0
      %4419 = vmatpush2.bf16.msra.mxu0 0
      %4420 = vmatprep.subr.bf16.mxu0 0
      %4421 = vmatpush2.bf16.msra.mxu0 0
      %4422 = vmatprep.subr.bf16.mxu0 0
      %4423 = vmatpush2.bf16.msra.mxu0 0
      %4424 = vmatprep.subr.bf16.mxu0 0
      %4425 = vmatpush2.bf16.msra.mxu0 0
      %4426 = vmatprep.subr.bf16.mxu0 0
      %4427 = vmatpush2.bf16.msra.mxu0 0
      %4428 = vmatprep.subr.bf16.mxu0 0
      %4429 = vmatpush2.bf16.msra.mxu0 0
      %4430 = vmatprep.mubr.bf16.mxu0 0
      %4431 = vmatmul.mubr.bf16.gmra.mxu0 %v616
      %v4432 = vpop.f32.mrf.mxu0
      %v4433 = vadd.f32 %v4392, %v4432
      %v4434 = vpop.f32.mrf.mxu0
      %v4435 = vadd.f32 %v4394, %v4434
      %v4436 = vpop.f32.mrf.mxu0
      %v4437 = vpop.f32.mrf.mxu0
      %4438 = vdwg.mxu0
      %v4439 = vmax.f32 %v4433, 0.0
      %v4440 = vmax.f32 %v4435, 0.0
      %v4443 = vcombine.low %v4439, %v4440
      %s4445 = scalar_lea.vmem %s177, 56
      %4446 = vst.msk [vmem:[%s4445] sm:$0xff] %vm749, %v4443
      %s4447 = smul.u32 8, %s14
      %p4448 = scmp.lt.s32.totalorder %s4447, 15
      %s4449 = scalar_select %p4448, %s4447, 15
      %s4450 = smul.addr %s4449, 2
      %s4451 = smul.addr %s4450, 4
      %s4452 = scalar_lea.vmem %s3, %s4451
      // Predicated region
      $region33: #{naive_fov_prediction_forward.3} parent=31 // pred_check
        %p4453 = pneg %p100
      $region34: #{naive_fov_prediction_forward.3} parent=31 // pred_check_branch
        %4455 = sbr.rel (%p4453) target = $region36
      $region35: #{naive_fov_prediction_forward.3} parent=31 // pred_region
        %s4456 = smul.u32 8, %s14
      $region36: #{naive_fov_prediction_forward.3} parent=31 // pred_fallthru
        _
    $region32: #{naive_fov_prediction_forward.3} parent=5 // pred_fallthru
      _
    %p4457 = scmp.le.s32.totalorder 2, %s9
    // Predicated region
    $region37: #{naive_fov_prediction_forward.3} parent=5 // pred_check
      %p4458 = pneg %p4457
    $region38: #{naive_fov_prediction_forward.3} parent=5 // pred_check_branch
      %4460 = sbr.rel (%p4458) target = $region40
    $region39: #{naive_fov_prediction_forward.3} parent=5 // pred_region
      %s4461 = ssub.s32 %s9, 2
      // Predicated region
      $region41: #{naive_fov_prediction_forward.3} parent=39 // pred_check
        %p4462 = pneg %p106
      $region42: #{naive_fov_prediction_forward.3} parent=39 // pred_check_branch
        %4464 = sbr.rel (%p4462) target = $region44
      $region43: #{naive_fov_prediction_forward.3} parent=39 // pred_region
        %s4465 = smul.u32 8, %s15
        %p4466 = scmp.lt.s32.totalorder %s4465, 15
        %s4467 = scalar_select %p4466, %s4465, 15
        %s4468 = smul.addr %s4467, 2
        %s4469 = smul.addr %s4468, 4
        %s4470 = scalar_lea.vmem %s3, %s4469
      $region44: #{naive_fov_prediction_forward.3} parent=39 // pred_fallthru
        _
    $region40: #{naive_fov_prediction_forward.3} parent=5 // pred_fallthru
      _
  $region6: #{naive_fov_prediction_forward.3} parent=0 // loop_footer
    %s13 = sadd.s32 1, %s9
  $region7: #{naive_fov_prediction_forward.3} parent=0 // loop_footer_branch
    %8 = sbr.rel target = $region3
  $region8: #{naive_fov_prediction_forward.3} parent=0 // loop_exit
    _

// kernel: naive_fov_prediction_forward.2
$region0: #{naive_fov_prediction_forward.2}
  #allocation0 [shape = 'u32[]', space=smem, size = 0x4, offset = 0x4, fixed_abs, tag = 'smem constant byte address 0x4 - core index']
  #allocation1 [shape = 'u32[144,128]{1,0:T(1,128)}', space=vmem, size = 0x12000, scoped, tag = 'internal scratch']
  %s0 = inlined_call_operand.vmem [shape: bf16[4,528,196], index: 0, kind: input, shape index: {}]
  %s1 = inlined_call_operand.vmem [shape: bf16[4,528], index: 1, kind: input, shape index: {}]
  %s2 = inlined_call_operand.vmem [shape: f32[4,1], index: 2, kind: input, shape index: {}]
  %s3 = inlined_call_operand.vmem [shape: f32[4,4,196], index: 3, kind: output, shape index: {}]
  %s4 = sld [smem:[#allocation0]]
  $region45: #{naive_fov_prediction_forward.2} parent=0
    _
  %s6 = ssub.s32 1, %s4
  %s7 = scalar_select 0, %s6, %s4
  loop: start=0, step=1, limit=4
  $region2: #{naive_fov_prediction_forward.2} parent=0 // loop_pre_header
    _
  $region3: #{naive_fov_prediction_forward.2} parent=0 // loop_header
    %s9 = sphi 0, %s13
    %p10 = scmp.ge.s32.totalorder %s9, 4
    %s19 = sphi 0, %s21
    %s22 = sphi 0, %s19
    %s23 = sphi 0, %s22
    %s39 = sphi 0, %s23
    %s43 = sphi 0, %s43
    %s45 = sphi 0, %s43
    %s46 = sphi 0, %s45
    %s60 = sphi 0, %s46
    %s64 = sphi 0, %s64
    %s66 = sphi 0, %s64
    %s67 = sphi 0, %s66
    %s81 = sphi 0, %s67
    %s87 = sphi 0, %s89
    %s90 = sphi 0, %s87
    %s91 = sphi 0, %s90
    %s107 = sphi 0, %s91
  $region4: #{naive_fov_prediction_forward.2} parent=0 // loop_header_branch
    %12 = sbr.rel (%p10) target = $region8
  $region5: #{naive_fov_prediction_forward.2} parent=0 // loop_body
    %s14 = ssub.s32 %s9, 1
    %s15 = ssub.s32 %s9, 2
    %s16 = sadd.s32 %s9, 1
    %s17 = ssub.s32 %s9, %s16
    %p18 = scmp.eq.s32.totalorder %s17, 0
    %s20 = sadd.s32 %s19, 1
    %s21 = scalar_select %p18, %s19, %s20
    %p24 = pneg %p18
    %p25 = scmp.eq.s32.totalorder %s9, 1
    %p26 = por %p24, %p25
    %p27 = scmp.ne.s32.totalorder %s19, %s22
    %p28 = scmp.eq.s32.totalorder %s9, 0
    %p29 = por %p27, %p28
    %p30 = scmp.ne.s32.totalorder %s19, %s22
    %p31 = scmp.eq.s32.totalorder %s14, 1
    %p32 = por %p30, %p31
    %p33 = scmp.ne.s32.totalorder %s22, %s23
    %p34 = scmp.eq.s32.totalorder %s14, 0
    %p35 = por %p33, %p34
    %p36 = scmp.ne.s32.totalorder %s22, %s23
    %p37 = scmp.eq.s32.totalorder %s15, 1
    %p38 = por %p36, %p37
    %p40 = scmp.ne.s32.totalorder %s23, %s39
    %p41 = scmp.eq.s32.totalorder %s15, 0
    %p42 = por %p40, %p41
    %s44 = sadd.s32 %s43, 1
    %p47 = scmp.eq.s32.totalorder %s9, 1
    %p48 = scmp.ne.s32.totalorder %s43, %s45
    %p49 = scmp.eq.s32.totalorder %s9, 0
    %p50 = por %p48, %p49
    %p51 = scmp.ne.s32.totalorder %s43, %s45
    %p52 = scmp.eq.s32.totalorder %s14, 1
    %p53 = por %p51, %p52
    %p54 = scmp.ne.s32.totalorder %s45, %s46
    %p55 = scmp.eq.s32.totalorder %s14, 0
    %p56 = por %p54, %p55
    %p57 = scmp.ne.s32.totalorder %s45, %s46
    %p58 = scmp.eq.s32.totalorder %s15, 1
    %p59 = por %p57, %p58
    %p61 = scmp.ne.s32.totalorder %s46, %s60
    %p62 = scmp.eq.s32.totalorder %s15, 0
    %p63 = por %p61, %p62
    %s65 = sadd.s32 %s64, 1
    %p68 = scmp.eq.s32.totalorder %s9, 1
    %p69 = scmp.ne.s32.totalorder %s64, %s66
    %p70 = scmp.eq.s32.totalorder %s9, 0
    %p71 = por %p69, %p70
    %p72 = scmp.ne.s32.totalorder %s64, %s66
    %p73 = scmp.eq.s32.totalorder %s14, 1
    %p74 = por %p72, %p73
    %p75 = scmp.ne.s32.totalorder %s66, %s67
    %p76 = scmp.eq.s32.totalorder %s14, 0
    %p77 = por %p75, %p76
    %p78 = scmp.ne.s32.totalorder %s66, %s67
    %p79 = scmp.eq.s32.totalorder %s15, 1
    %p80 = por %p78, %p79
    %p82 = scmp.ne.s32.totalorder %s67, %s81
    %p83 = scmp.eq.s32.totalorder %s15, 0
    %p84 = por %p82, %p83
    %s85 = ssub.s32 %s9, %s16
    %p86 = scmp.eq.s32.totalorder %s85, 0
    %s88 = sadd.s32 %s87, 1
    %s89 = scalar_select %p86, %s87, %s88
    %p92 = pneg %p86
    %p93 = scmp.eq.s32.totalorder %s9, 1
    %p94 = por %p92, %p93
    %p95 = scmp.ne.s32.totalorder %s87, %s90
    %p96 = scmp.eq.s32.totalorder %s9, 0
    %p97 = por %p95, %p96
    %p98 = scmp.ne.s32.totalorder %s87, %s90
    %p99 = scmp.eq.s32.totalorder %s14, 1
    %p100 = por %p98, %p99
    %p101 = scmp.ne.s32.totalorder %s90, %s91
    %p102 = scmp.eq.s32.totalorder %s14, 0
    %p103 = por %p101, %p102
    %p104 = scmp.ne.s32.totalorder %s90, %s91
    %p105 = scmp.eq.s32.totalorder %s15, 1
    %p106 = por %p104, %p105
    %p108 = scmp.ne.s32.totalorder %s91, %s107
    %p109 = scmp.eq.s32.totalorder %s15, 0
    %p110 = por %p108, %p109
    %p111 = scmp.le.s32.totalorder 1, %s9
    %p112 = scmp.lt.s32.totalorder %s9, 3
    %p113 = pnand %p111, %p112
    %p114 = pneg %p113
    // Predicated region
    $region9: #{naive_fov_prediction_forward.2} parent=5 // pred_check
      _
    $region10: #{naive_fov_prediction_forward.2} parent=5 // pred_check_branch
      %116 = sbr.rel (%p113) target = $region12
    $region11: #{naive_fov_prediction_forward.2} parent=5 // pred_region
      %s117 = ssub.s32 %s9, 1
      // Predicated region
      $region13: #{naive_fov_prediction_forward.2} parent=11 // pred_check
        %p118 = pneg %p56
      $region14: #{naive_fov_prediction_forward.2} parent=11 // pred_check_branch
        %120 = sbr.rel (%p118) target = $region16
      $region15: #{naive_fov_prediction_forward.2} parent=11 // pred_region
        _
      $region16: #{naive_fov_prediction_forward.2} parent=11 // pred_fallthru
        _
      // Predicated region
      $region17: #{naive_fov_prediction_forward.2} parent=11 // pred_check
        %p121 = pneg %p77
      $region18: #{naive_fov_prediction_forward.2} parent=11 // pred_check_branch
        %123 = sbr.rel (%p121) target = $region20
      $region19: #{naive_fov_prediction_forward.2} parent=11 // pred_region
        _
      $region20: #{naive_fov_prediction_forward.2} parent=11 // pred_fallthru
        _
    $region12: #{naive_fov_prediction_forward.2} parent=5 // pred_fallthru
      _
    %p124 = scmp.lt.s32.totalorder %s9, 2
    // Predicated region
    $region21: #{naive_fov_prediction_forward.2} parent=5 // pred_check
      %p125 = pneg %p124
    $region22: #{naive_fov_prediction_forward.2} parent=5 // pred_check_branch
      %127 = sbr.rel (%p125) target = $region24
    $region23: #{naive_fov_prediction_forward.2} parent=5 // pred_region
      // Predicated region
      $region25: #{naive_fov_prediction_forward.2} parent=23 // pred_check
        %p128 = pneg %p29
      $region26: #{naive_fov_prediction_forward.2} parent=23 // pred_check_branch
        %130 = sbr.rel (%p128) target = $region28
      $region27: #{naive_fov_prediction_forward.2} parent=23 // pred_region
        %s131 = smul.u32 2, %s9
        %p132 = scmp.lt.s32.totalorder %s131, 3
        %s133 = scalar_select %p132, %s131, 3
        %s134 = smul.addr %s133, 132
        %s135 = smul.addr %s134, 4
        %s136 = scalar_lea.vmem %s0, %s135
        %s137 = smul.u32 2, %s9
      $region28: #{naive_fov_prediction_forward.2} parent=23 // pred_fallthru
        _
    $region24: #{naive_fov_prediction_forward.2} parent=5 // pred_fallthru
      _
    %p138 = scmp.le.s32.totalorder 1, %s9
    %p139 = scmp.lt.s32.totalorder %s9, 3
    %p140 = pnand %p138, %p139
    %p141 = pneg %p140
    // Predicated region
    $region29: #{naive_fov_prediction_forward.2} parent=5 // pred_check
      _
    $region30: #{naive_fov_prediction_forward.2} parent=5 // pred_check_branch
      %143 = sbr.rel (%p140) target = $region32
    $region31: #{naive_fov_prediction_forward.2} parent=5 // pred_region
      %s144 = ssub.s32 %s9, 1
      %s145 = smul.u32 2, %s14
      %p146 = scmp.lt.s32.totalorder %s145, 3
      %s147 = scalar_select %p146, %s145, 3
      %s148 = smul.addr %s147, 132
      %s149 = smul.addr %s148, 4
      %s150 = scalar_lea.vmem %s0, %s149
      %p151 = pneg %p35
      %p152 = pneg %p32
      %p153 = pneg %p56
      %p154 = pneg %p53
      %p155 = pneg %p77
      %p156 = pneg %p74
      %p157 = pneg %p103
      %p158 = pneg %p100
      %s159 = smul.u32 2, %s14
      %p160 = scmp.lt.s32.totalorder %s159, 3
      %s161 = scalar_select %p160, %s159, 3
      %s162 = smul.addr %s161, 2
      %s163 = smul.addr %s162, 4
      %s164 = scalar_lea.vmem %s3, %s163
      %s165 = smul.u32 2, %s14
      %p166 = scmp.lt.s32.totalorder %s165, 3
      %s167 = scalar_select %p166, %s165, 3
      %s168 = smul.addr %s167, 132
      %s169 = smul.addr %s168, 4
      %s170 = scalar_lea.vmem %s0, %s169
      %s171 = smul.u32 2, %s14
      %s172 = smul.u32 2, %s14
      %p173 = scmp.lt.s32.totalorder %s172, 3
      %s174 = scalar_select %p173, %s172, 3
      %s175 = smul.addr %s174, 2
      %s176 = smul.addr %s175, 4
      %s177 = scalar_lea.vmem %s3, %s176
      %s178 = smul.u32 2, %s14
      %v180 = vld [vmem:[%s1] sm:$0xff]
      %v181 = vld [vmem:[%s1 + $0x8] sm:$0x3]
      %v182 = vld [vmem:[%s2] sm:$0xf]
      %v183 = vld [vmem:[%s170] sm:$0xff]
      %v184 = vld [vmem:[%s170 + $0x8] sm:$0xff]
      %v185 = vld [vmem:[%s170 + $0x10] sm:$0xff]
      %v186 = vld [vmem:[%s170 + $0x18] sm:$0xff]
      %v187 = vld [vmem:[%s170 + $0x20] sm:$0xff]
      %v188 = vld [vmem:[%s170 + $0x28] sm:$0xff]
      %v189 = vld [vmem:[%s170 + $0x30] sm:$0xff]
      %v190 = vld [vmem:[%s170 + $0x38] sm:$0xff]
      %v191 = vld [vmem:[%s170 + $0x40] sm:$0xff]
      %v192 = vld [vmem:[%s170 + $0x48] sm:$0xff]
      %v193 = vld [vmem:[%s170 + $0x50] sm:$0xff]
      %v194 = vld [vmem:[%s170 + $0x58] sm:$0xff]
      %v195 = vld [vmem:[%s170 + $0x60] sm:$0xff]
      %v196 = vld [vmem:[%s170 + $0x68] sm:$0xff]
      %v197 = vld [vmem:[%s170 + $0x70] sm:$0xff]
      %v198 = vld [vmem:[%s170 + $0x78] sm:$0xff]
      %v199 = vld [vmem:[%s170 + $0x80] sm:$0xff]
      %v200 = vld [vmem:[%s170 + $0x88] sm:$0xff]
      %v201 = vld [vmem:[%s170 + $0x90] sm:$0xff]
      %v202 = vld [vmem:[%s170 + $0x98] sm:$0xff]
      %v203 = vld [vmem:[%s170 + $0xa0] sm:$0xff]
      %v204 = vld [vmem:[%s170 + $0xa8] sm:$0xff]
      %v205 = vld [vmem:[%s170 + $0xb0] sm:$0xff]
      %v206 = vld [vmem:[%s170 + $0xb8] sm:$0xff]
      %v207 = vld [vmem:[%s170 + $0xc0] sm:$0xff]
      %v208 = vld [vmem:[%s170 + $0xc8] sm:$0xff]
      %v209 = vld [vmem:[%s170 + $0xd0] sm:$0xff]
      %v210 = vld [vmem:[%s170 + $0xd8] sm:$0xff]
      %v211 = vld [vmem:[%s170 + $0xe0] sm:$0xff]
      %v212 = vld [vmem:[%s170 + $0xe8] sm:$0xff]
      %v213 = vld [vmem:[%s170 + $0xf0] sm:$0xff]
      %v214 = vld [vmem:[%s170 + $0xf8] sm:$0xff]
      %v215 = vld [vmem:[%s170 + $0x100] sm:$0xff]
      %v216 = vld [vmem:[%s170 + $0x108] sm:$0xff]
      %v217 = vld [vmem:[%s170 + $0x110] sm:$0xff]
      %v218 = vld [vmem:[%s170 + $0x118] sm:$0xff]
      %v219 = vld [vmem:[%s170 + $0x120] sm:$0xff]
      %v220 = vld [vmem:[%s170 + $0x128] sm:$0xff]
      %v221 = vld [vmem:[%s170 + $0x130] sm:$0xff]
      %v222 = vld [vmem:[%s170 + $0x138] sm:$0xff]
      %v223 = vld [vmem:[%s170 + $0x140] sm:$0xff]
      %v224 = vld [vmem:[%s170 + $0x148] sm:$0xff]
      %v225 = vld [vmem:[%s170 + $0x150] sm:$0xff]
      %v226 = vld [vmem:[%s170 + $0x158] sm:$0xff]
      %v227 = vld [vmem:[%s170 + $0x160] sm:$0xff]
      %v228 = vld [vmem:[%s170 + $0x168] sm:$0xff]
      %v229 = vld [vmem:[%s170 + $0x170] sm:$0xff]
      %v230 = vld [vmem:[%s170 + $0x178] sm:$0xff]
      %v231 = vld [vmem:[%s170 + $0x180] sm:$0xff]
      %v232 = vld [vmem:[%s170 + $0x188] sm:$0xff]
      %v233 = vld [vmem:[%s170 + $0x190] sm:$0xff]
      %v234 = vld [vmem:[%s170 + $0x198] sm:$0xff]
      %v235 = vld [vmem:[%s170 + $0x1a0] sm:$0xff]
      %v236 = vld [vmem:[%s170 + $0x1a8] sm:$0xff]
      %v237 = vld [vmem:[%s170 + $0x1b0] sm:$0xff]
      %v238 = vld [vmem:[%s170 + $0x1b8] sm:$0xff]
      %v239 = vld [vmem:[%s170 + $0x1c0] sm:$0xff]
      %v240 = vld [vmem:[%s170 + $0x1c8] sm:$0xff]
      %v241 = vld [vmem:[%s170 + $0x1d0] sm:$0xff]
      %v242 = vld [vmem:[%s170 + $0x1d8] sm:$0xff]
      %v243 = vld [vmem:[%s170 + $0x1e0] sm:$0xff]
      %v244 = vld [vmem:[%s170 + $0x1e8] sm:$0xff]
      %v245 = vld [vmem:[%s170 + $0x1f0] sm:$0xff]
      %v246 = vld [vmem:[%s170 + $0x1f8] sm:$0xff]
      %v247 = vld [vmem:[%s170 + $0x200] sm:$0xff]
      %v248 = vld [vmem:[%s170 + $0x208] sm:$0xff]
      %250 = vset.pattern.permute.xlu0 0
      %251 = vperm.xlu0 %250, %v182
      %v252 = vpop.permute.xlu0 %251
      %v256 = vcombine.high %v180, %v180
      %v258 = vunpack.c.l.s4 1983009808
      %v259 = vunpack.c.0.s8 %v258
      %v260 = vlaneseq
      %v261 = vshrl.u32 %v260, 7
      %v262 = vsub.s32 %v259, %v261
      %v263 = vrot.slane %v180, %v262
      %v265 = vunpack.c.l.s4 1983009808
      %v266 = vunpack.c.0.s8 %v265
      %v267 = vlaneseq
      %v268 = vshrl.u32 %v267, 7
      %v269 = vsub.s32 %v266, %v268
      %v270 = vrot.slane %v256, %v269
      %v271 = vcombine.high %v263, %v263
      %v272 = vcombine.high %v270, %v270
      %v274 = vunpack.c.l.s4 1983009808
      %v275 = vunpack.c.0.s8 %v274
      %v276 = vlaneseq
      %v277 = vshrl.u32 %v276, 7
      %v278 = vsub.s32 %v275, %v277
      %v279 = vrot.slane %v181, %v278
      %v350 = vunpack.c.l.b16 %v183
      %v351 = vunpack.c.h.b16 %v183
      %v352 = vunpack.c.l.b16 %v184
      %v353 = vunpack.c.h.b16 %v184
      %v354 = vunpack.c.l.b16 %v185
      %v355 = vunpack.c.h.b16 %v185
      %v356 = vunpack.c.l.b16 %v186
      %v357 = vunpack.c.h.b16 %v186
      %v358 = vunpack.c.l.b16 %v187
      %v359 = vunpack.c.h.b16 %v187
      %v360 = vunpack.c.l.b16 %v188
      %v361 = vunpack.c.h.b16 %v188
      %v362 = vunpack.c.l.b16 %v189
      %v363 = vunpack.c.h.b16 %v189
      %v364 = vunpack.c.l.b16 %v190
      %v365 = vunpack.c.h.b16 %v190
      %v366 = vunpack.c.l.b16 %v191
      %v367 = vunpack.c.h.b16 %v191
      %v368 = vunpack.c.l.b16 %v192
      %v369 = vunpack.c.h.b16 %v192
      %v370 = vunpack.c.l.b16 %v193
      %v371 = vunpack.c.h.b16 %v193
      %v372 = vunpack.c.l.b16 %v194
      %v373 = vunpack.c.h.b16 %v194
      %v374 = vunpack.c.l.b16 %v195
      %v375 = vunpack.c.h.b16 %v195
      %v376 = vunpack.c.l.b16 %v196
      %v377 = vunpack.c.h.b16 %v196
      %v378 = vunpack.c.l.b16 %v197
      %v379 = vunpack.c.h.b16 %v197
      %v380 = vunpack.c.l.b16 %v198
      %v381 = vunpack.c.h.b16 %v198
      %v382 = vunpack.c.l.b16 %v199
      %v383 = vunpack.c.h.b16 %v199
      %v384 = vunpack.c.l.b16 %v200
      %v385 = vunpack.c.h.b16 %v200
      %v386 = vunpack.c.l.b16 %v201
      %v387 = vunpack.c.h.b16 %v201
      %v388 = vunpack.c.l.b16 %v202
      %v389 = vunpack.c.h.b16 %v202
      %v390 = vunpack.c.l.b16 %v203
      %v391 = vunpack.c.h.b16 %v203
      %v392 = vunpack.c.l.b16 %v204
      %v393 = vunpack.c.h.b16 %v204
      %v394 = vunpack.c.l.b16 %v205
      %v395 = vunpack.c.h.b16 %v205
      %v396 = vunpack.c.l.b16 %v206
      %v397 = vunpack.c.h.b16 %v206
      %v398 = vunpack.c.l.b16 %v207
      %v399 = vunpack.c.h.b16 %v207
      %v400 = vunpack.c.l.b16 %v208
      %v401 = vunpack.c.h.b16 %v208
      %v402 = vunpack.c.l.b16 %v209
      %v403 = vunpack.c.h.b16 %v209
      %v404 = vunpack.c.l.b16 %v210
      %v405 = vunpack.c.h.b16 %v210
      %v406 = vunpack.c.l.b16 %v211
      %v407 = vunpack.c.h.b16 %v211
      %v408 = vunpack.c.l.b16 %v212
      %v409 = vunpack.c.h.b16 %v212
      %v410 = vunpack.c.l.b16 %v213
      %v411 = vunpack.c.h.b16 %v213
      %v412 = vunpack.c.l.b16 %v214
      %v413 = vunpack.c.h.b16 %v214
      %v414 = vunpack.c.l.b16 %v215
      %v415 = vunpack.c.h.b16 %v215
      %v416 = vunpack.c.l.b16 %v216
      %v417 = vunpack.c.h.b16 %v216
      %v418 = vunpack.c.l.b16 %v217
      %v419 = vunpack.c.h.b16 %v217
      %v420 = vunpack.c.l.b16 %v218
      %v421 = vunpack.c.h.b16 %v218
      %v422 = vunpack.c.l.b16 %v219
      %v423 = vunpack.c.h.b16 %v219
      %v424 = vunpack.c.l.b16 %v220
      %v425 = vunpack.c.h.b16 %v220
      %v426 = vunpack.c.l.b16 %v221
      %v427 = vunpack.c.h.b16 %v221
      %v428 = vunpack.c.l.b16 %v222
      %v429 = vunpack.c.h.b16 %v222
      %v430 = vunpack.c.l.b16 %v223
      %v431 = vunpack.c.h.b16 %v223
      %v432 = vunpack.c.l.b16 %v224
      %v433 = vunpack.c.h.b16 %v224
      %v434 = vunpack.c.l.b16 %v225
      %v435 = vunpack.c.h.b16 %v225
      %v436 = vunpack.c.l.b16 %v226
      %v437 = vunpack.c.h.b16 %v226
      %v438 = vunpack.c.l.b16 %v227
      %v439 = vunpack.c.h.b16 %v227
      %v440 = vunpack.c.l.b16 %v228
      %v441 = vunpack.c.h.b16 %v228
      %v442 = vunpack.c.l.b16 %v229
      %v443 = vunpack.c.h.b16 %v229
      %v444 = vunpack.c.l.b16 %v230
      %v445 = vunpack.c.h.b16 %v230
      %v446 = vunpack.c.l.b16 %v231
      %v447 = vunpack.c.h.b16 %v231
      %v448 = vunpack.c.l.b16 %v232
      %v449 = vunpack.c.h.b16 %v232
      %v450 = vunpack.c.l.b16 %v233
      %v451 = vunpack.c.h.b16 %v233
      %v452 = vunpack.c.l.b16 %v234
      %v453 = vunpack.c.h.b16 %v234
      %v454 = vunpack.c.l.b16 %v235
      %v455 = vunpack.c.h.b16 %v235
      %v456 = vunpack.c.l.b16 %v236
      %v457 = vunpack.c.h.b16 %v236
      %v458 = vunpack.c.l.b16 %v237
      %v459 = vunpack.c.h.b16 %v237
      %v460 = vunpack.c.l.b16 %v238
      %v461 = vunpack.c.h.b16 %v238
      %v462 = vunpack.c.l.b16 %v239
      %v463 = vunpack.c.h.b16 %v239
      %v464 = vunpack.c.l.b16 %v240
      %v465 = vunpack.c.h.b16 %v240
      %v466 = vunpack.c.l.b16 %v241
      %v467 = vunpack.c.h.b16 %v241
      %v468 = vunpack.c.l.b16 %v242
      %v469 = vunpack.c.h.b16 %v242
      %v470 = vunpack.c.l.b16 %v243
      %v471 = vunpack.c.h.b16 %v243
      %v472 = vunpack.c.l.b16 %v244
      %v473 = vunpack.c.h.b16 %v244
      %v474 = vunpack.c.l.b16 %v245
      %v475 = vunpack.c.h.b16 %v245
      %v476 = vunpack.c.l.b16 %v246
      %v477 = vunpack.c.h.b16 %v246
      %v478 = vunpack.c.l.b16 %v247
      %v479 = vunpack.c.h.b16 %v247
      %v480 = vunpack.c.l.b16 %v248
      %v481 = vunpack.c.h.b16 %v248
      %v482 = vpack.c.b16 %v352, %v350
      %v483 = vpack.c.b16 %v353, %v351
      %v484 = vpack.c.b16 %v356, %v354
      %v485 = vpack.c.b16 %v357, %v355
      %v486 = vpack.c.b16 %v360, %v358
      %v487 = vpack.c.b16 %v361, %v359
      %v488 = vpack.c.b16 %v364, %v362
      %v489 = vpack.c.b16 %v365, %v363
      %v490 = vpack.c.b16 %v368, %v366
      %v491 = vpack.c.b16 %v369, %v367
      %v492 = vpack.c.b16 %v372, %v370
      %v493 = vpack.c.b16 %v373, %v371
      %v494 = vpack.c.b16 %v376, %v374
      %v495 = vpack.c.b16 %v377, %v375
      %v496 = vpack.c.b16 %v380, %v378
      %v497 = vpack.c.b16 %v381, %v379
      %v498 = vpack.c.b16 %v384, %v382
      %v499 = vpack.c.b16 %v385, %v383
      %v500 = vpack.c.b16 %v388, %v386
      %v501 = vpack.c.b16 %v389, %v387
      %v502 = vpack.c.b16 %v392, %v390
      %v503 = vpack.c.b16 %v393, %v391
      %v504 = vpack.c.b16 %v396, %v394
      %v505 = vpack.c.b16 %v397, %v395
      %v506 = vpack.c.b16 %v400, %v398
      %v507 = vpack.c.b16 %v401, %v399
      %v508 = vpack.c.b16 %v404, %v402
      %v509 = vpack.c.b16 %v405, %v403
      %v510 = vpack.c.b16 %v408, %v406
      %v511 = vpack.c.b16 %v409, %v407
      %v512 = vpack.c.b16 %v412, %v410
      %v513 = vpack.c.b16 %v413, %v411
      %v514 = vpack.c.b16 %v416, %v414
      %v515 = vpack.c.b16 %v417, %v415
      %v516 = vpack.c.b16 %v420, %v418
      %v517 = vpack.c.b16 %v421, %v419
      %v518 = vpack.c.b16 %v424, %v422
      %v519 = vpack.c.b16 %v425, %v423
      %v520 = vpack.c.b16 %v428, %v426
      %v521 = vpack.c.b16 %v429, %v427
      %v522 = vpack.c.b16 %v432, %v430
      %v523 = vpack.c.b16 %v433, %v431
      %v524 = vpack.c.b16 %v436, %v434
      %v525 = vpack.c.b16 %v437, %v435
      %v526 = vpack.c.b16 %v440, %v438
      %v527 = vpack.c.b16 %v441, %v439
      %v528 = vpack.c.b16 %v444, %v442
      %v529 = vpack.c.b16 %v445, %v443
      %v530 = vpack.c.b16 %v448, %v446
      %v531 = vpack.c.b16 %v449, %v447
      %v532 = vpack.c.b16 %v452, %v450
      %v533 = vpack.c.b16 %v453, %v451
      %v534 = vpack.c.b16 %v456, %v454
      %v535 = vpack.c.b16 %v457, %v455
      %v536 = vpack.c.b16 %v460, %v458
      %v537 = vpack.c.b16 %v461, %v459
      %v538 = vpack.c.b16 %v464, %v462
      %v539 = vpack.c.b16 %v465, %v463
      %v540 = vpack.c.b16 %v468, %v466
      %v541 = vpack.c.b16 %v469, %v467
      %v542 = vpack.c.b16 %v472, %v470
      %v543 = vpack.c.b16 %v473, %v471
      %v544 = vpack.c.b16 %v476, %v474
      %v545 = vpack.c.b16 %v477, %v475
      %v546 = vpack.c.b16 %v480, %v478
      %v547 = vpack.c.b16 %v481, %v479
      %vm614 = vcmask 130048
      %v616 = vsel %vm614, %v279, 0
      %618 = vmatprep.subr.bf16.mxu0 %v497
      %619 = vmatpush1.bf16.msra.mxu0 %v496
      %620 = vmatprep.subr.bf16.mxu0 %v495
      %621 = vmatpush1.bf16.msra.mxu0 %v494
      %622 = vmatprep.subr.bf16.mxu0 %v493
      %623 = vmatpush1.bf16.msra.mxu0 %v492
      %624 = vmatprep.subr.bf16.mxu0 %v491
      %625 = vmatpush1.bf16.msra.mxu0 %v490
      %626 = vmatprep.subr.bf16.mxu0 %v489
      %627 = vmatpush1.bf16.msra.mxu0 %v488
      %628 = vmatprep.subr.bf16.mxu0 %v487
      %629 = vmatpush1.bf16.msra.mxu0 %v486
      %630 = vmatprep.subr.bf16.mxu0 %v485
      %631 = vmatpush1.bf16.msra.mxu0 %v484
      %632 = vmatprep.subr.bf16.mxu0 %v483
      %633 = vmatpush1.bf16.msra.mxu0 %v482
      %634 = vmatprep.subr.bf16.mxu0 %v513
      %635 = vmatpush2.bf16.msra.mxu0 %v512
      %636 = vmatprep.subr.bf16.mxu0 %v511
      %637 = vmatpush2.bf16.msra.mxu0 %v510
      %638 = vmatprep.subr.bf16.mxu0 %v509
      %639 = vmatpush2.bf16.msra.mxu0 %v508
      %640 = vmatprep.subr.bf16.mxu0 %v507
      %641 = vmatpush2.bf16.msra.mxu0 %v506
      %642 = vmatprep.subr.bf16.mxu0 %v505
      %643 = vmatpush2.bf16.msra.mxu0 %v504
      %644 = vmatprep.subr.bf16.mxu0 %v503
      %645 = vmatpush2.bf16.msra.mxu0 %v502
      %646 = vmatprep.subr.bf16.mxu0 %v501
      %647 = vmatpush2.bf16.msra.mxu0 %v500
      %648 = vmatprep.subr.bf16.mxu0 %v499
      %649 = vmatpush2.bf16.msra.mxu0 %v498
      %650 = vmatprep.mubr.bf16.mxu0 %v271
      %651 = vmatmul.mubr.bf16.gmra.mxu0 %v263
      %v652 = vpop.f32.mrf.mxu0
      %v653 = vadd.f32 %v252, %v652
      %v654 = vpop.f32.mrf.mxu0
      %v655 = vadd.f32 %v252, %v654
      %v656 = vpop.f32.mrf.mxu0
      %v657 = vpop.f32.mrf.mxu0
      %658 = vdwg.mxu0
      %659 = vmatprep.subr.bf16.mxu0 %v529
      %660 = vmatpush1.bf16.msra.mxu0 %v528
      %661 = vmatprep.subr.bf16.mxu0 %v527
      %662 = vmatpush1.bf16.msra.mxu0 %v526
      %663 = vmatprep.subr.bf16.mxu0 %v525
      %664 = vmatpush1.bf16.msra.mxu0 %v524
      %665 = vmatprep.subr.bf16.mxu0 %v523
      %666 = vmatpush1.bf16.msra.mxu0 %v522
      %667 = vmatprep.subr.bf16.mxu0 %v521
      %668 = vmatpush1.bf16.msra.mxu0 %v520
      %669 = vmatprep.subr.bf16.mxu0 %v519
      %670 = vmatpush1.bf16.msra.mxu0 %v518
      %671 = vmatprep.subr.bf16.mxu0 %v517
      %672 = vmatpush1.bf16.msra.mxu0 %v516
      %673 = vmatprep.subr.bf16.mxu0 %v515
      %674 = vmatpush1.bf16.msra.mxu0 %v514
      %675 = vmatprep.subr.bf16.mxu0 %v545
      %676 = vmatpush2.bf16.msra.mxu0 %v544
      %677 = vmatprep.subr.bf16.mxu0 %v543
      %678 = vmatpush2.bf16.msra.mxu0 %v542
      %679 = vmatprep.subr.bf16.mxu0 %v541
      %680 = vmatpush2.bf16.msra.mxu0 %v540
      %681 = vmatprep.subr.bf16.mxu0 %v539
      %682 = vmatpush2.bf16.msra.mxu0 %v538
      %683 = vmatprep.subr.bf16.mxu0 %v537
      %684 = vmatpush2.bf16.msra.mxu0 %v536
      %685 = vmatprep.subr.bf16.mxu0 %v535
      %686 = vmatpush2.bf16.msra.mxu0 %v534
      %687 = vmatprep.subr.bf16.mxu0 %v533
      %688 = vmatpush2.bf16.msra.mxu0 %v532
      %689 = vmatprep.subr.bf16.mxu0 %v531
      %690 = vmatpush2.bf16.msra.mxu0 %v530
      %691 = vmatprep.mubr.bf16.mxu0 %v272
      %692 = vmatmul.mubr.bf16.gmra.mxu0 %v270
      %v693 = vpop.f32.mrf.mxu0
      %v694 = vadd.f32 %v653, %v693
      %v695 = vpop.f32.mrf.mxu0
      %v696 = vadd.f32 %v655, %v695
      %v697 = vpop.f32.mrf.mxu0
      %v698 = vpop.f32.mrf.mxu0
      %699 = vdwg.mxu0
      %700 = vmatprep.subr.bf16.mxu0 0
      %701 = vmatpush1.bf16.msra.mxu0 0
      %702 = vmatprep.subr.bf16.mxu0 0
      %703 = vmatpush1.bf16.msra.mxu0 0
      %704 = vmatprep.subr.bf16.mxu0 0
      %705 = vmatpush1.bf16.msra.mxu0 0
      %706 = vmatprep.subr.bf16.mxu0 0
      %707 = vmatpush1.bf16.msra.mxu0 0
      %708 = vmatprep.subr.bf16.mxu0 0
      %709 = vmatpush1.bf16.msra.mxu0 0
      %710 = vmatprep.subr.bf16.mxu0 0
      %711 = vmatpush1.bf16.msra.mxu0 0
      %712 = vmatprep.subr.bf16.mxu0 0
      %713 = vmatpush1.bf16.msra.mxu0 0
      %714 = vmatprep.subr.bf16.mxu0 %v547
      %715 = vmatpush1.bf16.msra.mxu0 %v546
      %716 = vmatprep.subr.bf16.mxu0 0
      %717 = vmatpush2.bf16.msra.mxu0 0
      %718 = vmatprep.subr.bf16.mxu0 0
      %719 = vmatpush2.bf16.msra.mxu0 0
      %720 = vmatprep.subr.bf16.mxu0 0
      %721 = vmatpush2.bf16.msra.mxu0 0
      %722 = vmatprep.subr.bf16.mxu0 0
      %723 = vmatpush2.bf16.msra.mxu0 0
      %724 = vmatprep.subr.bf16.mxu0 0
      %725 = vmatpush2.bf16.msra.mxu0 0
      %726 = vmatprep.subr.bf16.mxu0 0
      %727 = vmatpush2.bf16.msra.mxu0 0
      %728 = vmatprep.subr.bf16.mxu0 0
      %729 = vmatpush2.bf16.msra.mxu0 0
      %730 = vmatprep.subr.bf16.mxu0 0
      %731 = vmatpush2.bf16.msra.mxu0 0
      %732 = vmatprep.mubr.bf16.mxu0 0
      %733 = vmatmul.mubr.bf16.gmra.mxu0 %v616
      %v734 = vpop.f32.mrf.mxu0
      %v735 = vadd.f32 %v694, %v734
      %v736 = vpop.f32.mrf.mxu0
      %v737 = vadd.f32 %v696, %v736
      %v738 = vpop.f32.mrf.mxu0
      %v739 = vpop.f32.mrf.mxu0
      %740 = vdwg.mxu0
      %v741 = vmax.f32 %v735, 0.0
      %v742 = vmax.f32 %v737, 0.0
      %v745 = vcombine.low %v741, %v742
      %vm747 = vcmask 1043456
      %vm748 = vcmask 556036
      %vm749 = vmor %vm748, %vm747
      %750 = vst.msk [vmem:[%s177] sm:$0xff] %vm749, %v745
      %s751 = scalar_lea.vmem %s170, 528
      %v752 = vld [vmem:[%s751] sm:$0xff]
      %v753 = vld [vmem:[%s751 + $0x8] sm:$0xff]
      %v754 = vld [vmem:[%s751 + $0x10] sm:$0xff]
      %v755 = vld [vmem:[%s751 + $0x18] sm:$0xff]
      %v756 = vld [vmem:[%s751 + $0x20] sm:$0xff]
      %v757 = vld [vmem:[%s751 + $0x28] sm:$0xff]
      %v758 = vld [vmem:[%s751 + $0x30] sm:$0xff]
      %v759 = vld [vmem:[%s751 + $0x38] sm:$0xff]
      %v760 = vld [vmem:[%s751 + $0x40] sm:$0xff]
      %v761 = vld [vmem:[%s751 + $0x48] sm:$0xff]
      %v762 = vld [vmem:[%s751 + $0x50] sm:$0xff]
      %v763 = vld [vmem:[%s751 + $0x58] sm:$0xff]
      %v764 = vld [vmem:[%s751 + $0x60] sm:$0xff]
      %v765 = vld [vmem:[%s751 + $0x68] sm:$0xff]
      %v766 = vld [vmem:[%s751 + $0x70] sm:$0xff]
      %v767 = vld [vmem:[%s751 + $0x78] sm:$0xff]
      %v768 = vld [vmem:[%s751 + $0x80] sm:$0xff]
      %v769 = vld [vmem:[%s751 + $0x88] sm:$0xff]
      %v770 = vld [vmem:[%s751 + $0x90] sm:$0xff]
      %v771 = vld [vmem:[%s751 + $0x98] sm:$0xff]
      %v772 = vld [vmem:[%s751 + $0xa0] sm:$0xff]
      %v773 = vld [vmem:[%s751 + $0xa8] sm:$0xff]
      %v774 = vld [vmem:[%s751 + $0xb0] sm:$0xff]
      %v775 = vld [vmem:[%s751 + $0xb8] sm:$0xff]
      %v776 = vld [vmem:[%s751 + $0xc0] sm:$0xff]
      %v777 = vld [vmem:[%s751 + $0xc8] sm:$0xff]
      %v778 = vld [vmem:[%s751 + $0xd0] sm:$0xff]
      %v779 = vld [vmem:[%s751 + $0xd8] sm:$0xff]
      %v780 = vld [vmem:[%s751 + $0xe0] sm:$0xff]
      %v781 = vld [vmem:[%s751 + $0xe8] sm:$0xff]
      %v782 = vld [vmem:[%s751 + $0xf0] sm:$0xff]
      %v783 = vld [vmem:[%s751 + $0xf8] sm:$0xff]
      %v784 = vld [vmem:[%s751 + $0x100] sm:$0xff]
      %v785 = vld [vmem:[%s751 + $0x108] sm:$0xff]
      %v786 = vld [vmem:[%s751 + $0x110] sm:$0xff]
      %v787 = vld [vmem:[%s751 + $0x118] sm:$0xff]
      %v788 = vld [vmem:[%s751 + $0x120] sm:$0xff]
      %v789 = vld [vmem:[%s751 + $0x128] sm:$0xff]
      %v790 = vld [vmem:[%s751 + $0x130] sm:$0xff]
      %v791 = vld [vmem:[%s751 + $0x138] sm:$0xff]
      %v792 = vld [vmem:[%s751 + $0x140] sm:$0xff]
      %v793 = vld [vmem:[%s751 + $0x148] sm:$0xff]
      %v794 = vld [vmem:[%s751 + $0x150] sm:$0xff]
      %v795 = vld [vmem:[%s751 + $0x158] sm:$0xff]
      %v796 = vld [vmem:[%s751 + $0x160] sm:$0xff]
      %v797 = vld [vmem:[%s751 + $0x168] sm:$0xff]
      %v798 = vld [vmem:[%s751 + $0x170] sm:$0xff]
      %v799 = vld [vmem:[%s751 + $0x178] sm:$0xff]
      %v800 = vld [vmem:[%s751 + $0x180] sm:$0xff]
      %v801 = vld [vmem:[%s751 + $0x188] sm:$0xff]
      %v802 = vld [vmem:[%s751 + $0x190] sm:$0xff]
      %v803 = vld [vmem:[%s751 + $0x198] sm:$0xff]
      %v804 = vld [vmem:[%s751 + $0x1a0] sm:$0xff]
      %v805 = vld [vmem:[%s751 + $0x1a8] sm:$0xff]
      %v806 = vld [vmem:[%s751 + $0x1b0] sm:$0xff]
      %v807 = vld [vmem:[%s751 + $0x1b8] sm:$0xff]
      %v808 = vld [vmem:[%s751 + $0x1c0] sm:$0xff]
      %v809 = vld [vmem:[%s751 + $0x1c8] sm:$0xff]
      %v810 = vld [vmem:[%s751 + $0x1d0] sm:$0xff]
      %v811 = vld [vmem:[%s751 + $0x1d8] sm:$0xff]
      %v812 = vld [vmem:[%s751 + $0x1e0] sm:$0xff]
      %v813 = vld [vmem:[%s751 + $0x1e8] sm:$0xff]
      %v814 = vld [vmem:[%s751 + $0x1f0] sm:$0xff]
      %v815 = vld [vmem:[%s751 + $0x1f8] sm:$0xff]
      %v816 = vld [vmem:[%s751 + $0x200] sm:$0xff]
      %v817 = vld [vmem:[%s751 + $0x208] sm:$0xff]
      %v884 = vunpack.c.l.b16 %v752
      %v885 = vunpack.c.h.b16 %v752
      %v886 = vunpack.c.l.b16 %v753
      %v887 = vunpack.c.h.b16 %v753
      %v888 = vunpack.c.l.b16 %v754
      %v889 = vunpack.c.h.b16 %v754
      %v890 = vunpack.c.l.b16 %v755
      %v891 = vunpack.c.h.b16 %v755
      %v892 = vunpack.c.l.b16 %v756
      %v893 = vunpack.c.h.b16 %v756
      %v894 = vunpack.c.l.b16 %v757
      %v895 = vunpack.c.h.b16 %v757
      %v896 = vunpack.c.l.b16 %v758
      %v897 = vunpack.c.h.b16 %v758
      %v898 = vunpack.c.l.b16 %v759
      %v899 = vunpack.c.h.b16 %v759
      %v900 = vunpack.c.l.b16 %v760
      %v901 = vunpack.c.h.b16 %v760
      %v902 = vunpack.c.l.b16 %v761
      %v903 = vunpack.c.h.b16 %v761
      %v904 = vunpack.c.l.b16 %v762
      %v905 = vunpack.c.h.b16 %v762
      %v906 = vunpack.c.l.b16 %v763
      %v907 = vunpack.c.h.b16 %v763
      %v908 = vunpack.c.l.b16 %v764
      %v909 = vunpack.c.h.b16 %v764
      %v910 = vunpack.c.l.b16 %v765
      %v911 = vunpack.c.h.b16 %v765
      %v912 = vunpack.c.l.b16 %v766
      %v913 = vunpack.c.h.b16 %v766
      %v914 = vunpack.c.l.b16 %v767
      %v915 = vunpack.c.h.b16 %v767
      %v916 = vunpack.c.l.b16 %v768
      %v917 = vunpack.c.h.b16 %v768
      %v918 = vunpack.c.l.b16 %v769
      %v919 = vunpack.c.h.b16 %v769
      %v920 = vunpack.c.l.b16 %v770
      %v921 = vunpack.c.h.b16 %v770
      %v922 = vunpack.c.l.b16 %v771
      %v923 = vunpack.c.h.b16 %v771
      %v924 = vunpack.c.l.b16 %v772
      %v925 = vunpack.c.h.b16 %v772
      %v926 = vunpack.c.l.b16 %v773
      %v927 = vunpack.c.h.b16 %v773
      %v928 = vunpack.c.l.b16 %v774
      %v929 = vunpack.c.h.b16 %v774
      %v930 = vunpack.c.l.b16 %v775
      %v931 = vunpack.c.h.b16 %v775
      %v932 = vunpack.c.l.b16 %v776
      %v933 = vunpack.c.h.b16 %v776
      %v934 = vunpack.c.l.b16 %v777
      %v935 = vunpack.c.h.b16 %v777
      %v936 = vunpack.c.l.b16 %v778
      %v937 = vunpack.c.h.b16 %v778
      %v938 = vunpack.c.l.b16 %v779
      %v939 = vunpack.c.h.b16 %v779
      %v940 = vunpack.c.l.b16 %v780
      %v941 = vunpack.c.h.b16 %v780
      %v942 = vunpack.c.l.b16 %v781
      %v943 = vunpack.c.h.b16 %v781
      %v944 = vunpack.c.l.b16 %v782
      %v945 = vunpack.c.h.b16 %v782
      %v946 = vunpack.c.l.b16 %v783
      %v947 = vunpack.c.h.b16 %v783
      %v948 = vunpack.c.l.b16 %v784
      %v949 = vunpack.c.h.b16 %v784
      %v950 = vunpack.c.l.b16 %v785
      %v951 = vunpack.c.h.b16 %v785
      %v952 = vunpack.c.l.b16 %v786
      %v953 = vunpack.c.h.b16 %v786
      %v954 = vunpack.c.l.b16 %v787
      %v955 = vunpack.c.h.b16 %v787
      %v956 = vunpack.c.l.b16 %v788
      %v957 = vunpack.c.h.b16 %v788
      %v958 = vunpack.c.l.b16 %v789
      %v959 = vunpack.c.h.b16 %v789
      %v960 = vunpack.c.l.b16 %v790
      %v961 = vunpack.c.h.b16 %v790
      %v962 = vunpack.c.l.b16 %v791
      %v963 = vunpack.c.h.b16 %v791
      %v964 = vunpack.c.l.b16 %v792
      %v965 = vunpack.c.h.b16 %v792
      %v966 = vunpack.c.l.b16 %v793
      %v967 = vunpack.c.h.b16 %v793
      %v968 = vunpack.c.l.b16 %v794
      %v969 = vunpack.c.h.b16 %v794
      %v970 = vunpack.c.l.b16 %v795
      %v971 = vunpack.c.h.b16 %v795
      %v972 = vunpack.c.l.b16 %v796
      %v973 = vunpack.c.h.b16 %v796
      %v974 = vunpack.c.l.b16 %v797
      %v975 = vunpack.c.h.b16 %v797
      %v976 = vunpack.c.l.b16 %v798
      %v977 = vunpack.c.h.b16 %v798
      %v978 = vunpack.c.l.b16 %v799
      %v979 = vunpack.c.h.b16 %v799
      %v980 = vunpack.c.l.b16 %v800
      %v981 = vunpack.c.h.b16 %v800
      %v982 = vunpack.c.l.b16 %v801
      %v983 = vunpack.c.h.b16 %v801
      %v984 = vunpack.c.l.b16 %v802
      %v985 = vunpack.c.h.b16 %v802
      %v986 = vunpack.c.l.b16 %v803
      %v987 = vunpack.c.h.b16 %v803
      %v988 = vunpack.c.l.b16 %v804
      %v989 = vunpack.c.h.b16 %v804
      %v990 = vunpack.c.l.b16 %v805
      %v991 = vunpack.c.h.b16 %v805
      %v992 = vunpack.c.l.b16 %v806
      %v993 = vunpack.c.h.b16 %v806
      %v994 = vunpack.c.l.b16 %v807
      %v995 = vunpack.c.h.b16 %v807
      %v996 = vunpack.c.l.b16 %v808
      %v997 = vunpack.c.h.b16 %v808
      %v998 = vunpack.c.l.b16 %v809
      %v999 = vunpack.c.h.b16 %v809
      %v1000 = vunpack.c.l.b16 %v810
      %v1001 = vunpack.c.h.b16 %v810
      %v1002 = vunpack.c.l.b16 %v811
      %v1003 = vunpack.c.h.b16 %v811
      %v1004 = vunpack.c.l.b16 %v812
      %v1005 = vunpack.c.h.b16 %v812
      %v1006 = vunpack.c.l.b16 %v813
      %v1007 = vunpack.c.h.b16 %v813
      %v1008 = vunpack.c.l.b16 %v814
      %v1009 = vunpack.c.h.b16 %v814
      %v1010 = vunpack.c.l.b16 %v815
      %v1011 = vunpack.c.h.b16 %v815
      %v1012 = vunpack.c.l.b16 %v816
      %v1013 = vunpack.c.h.b16 %v816
      %v1014 = vunpack.c.l.b16 %v817
      %v1015 = vunpack.c.h.b16 %v817
      %v1016 = vpack.c.b16 %v886, %v884
      %v1017 = vpack.c.b16 %v887, %v885
      %v1018 = vpack.c.b16 %v890, %v888
      %v1019 = vpack.c.b16 %v891, %v889
      %v1020 = vpack.c.b16 %v894, %v892
      %v1021 = vpack.c.b16 %v895, %v893
      %v1022 = vpack.c.b16 %v898, %v896
      %v1023 = vpack.c.b16 %v899, %v897
      %v1024 = vpack.c.b16 %v902, %v900
      %v1025 = vpack.c.b16 %v903, %v901
      %v1026 = vpack.c.b16 %v906, %v904
      %v1027 = vpack.c.b16 %v907, %v905
      %v1028 = vpack.c.b16 %v910, %v908
      %v1029 = vpack.c.b16 %v911, %v909
      %v1030 = vpack.c.b16 %v914, %v912
      %v1031 = vpack.c.b16 %v915, %v913
      %v1032 = vpack.c.b16 %v918, %v916
      %v1033 = vpack.c.b16 %v919, %v917
      %v1034 = vpack.c.b16 %v922, %v920
      %v1035 = vpack.c.b16 %v923, %v921
      %v1036 = vpack.c.b16 %v926, %v924
      %v1037 = vpack.c.b16 %v927, %v925
      %v1038 = vpack.c.b16 %v930, %v928
      %v1039 = vpack.c.b16 %v931, %v929
      %v1040 = vpack.c.b16 %v934, %v932
      %v1041 = vpack.c.b16 %v935, %v933
      %v1042 = vpack.c.b16 %v938, %v936
      %v1043 = vpack.c.b16 %v939, %v937
      %v1044 = vpack.c.b16 %v942, %v940
      %v1045 = vpack.c.b16 %v943, %v941
      %v1046 = vpack.c.b16 %v946, %v944
      %v1047 = vpack.c.b16 %v947, %v945
      %v1048 = vpack.c.b16 %v950, %v948
      %v1049 = vpack.c.b16 %v951, %v949
      %v1050 = vpack.c.b16 %v954, %v952
      %v1051 = vpack.c.b16 %v955, %v953
      %v1052 = vpack.c.b16 %v958, %v956
      %v1053 = vpack.c.b16 %v959, %v957
      %v1054 = vpack.c.b16 %v962, %v960
      %v1055 = vpack.c.b16 %v963, %v961
      %v1056 = vpack.c.b16 %v966, %v964
      %v1057 = vpack.c.b16 %v967, %v965
      %v1058 = vpack.c.b16 %v970, %v968
      %v1059 = vpack.c.b16 %v971, %v969
      %v1060 = vpack.c.b16 %v974, %v972
      %v1061 = vpack.c.b16 %v975, %v973
      %v1062 = vpack.c.b16 %v978, %v976
      %v1063 = vpack.c.b16 %v979, %v977
      %v1064 = vpack.c.b16 %v982, %v980
      %v1065 = vpack.c.b16 %v983, %v981
      %v1066 = vpack.c.b16 %v986, %v984
      %v1067 = vpack.c.b16 %v987, %v985
      %v1068 = vpack.c.b16 %v990, %v988
      %v1069 = vpack.c.b16 %v991, %v989
      %v1070 = vpack.c.b16 %v994, %v992
      %v1071 = vpack.c.b16 %v995, %v993
      %v1072 = vpack.c.b16 %v998, %v996
      %v1073 = vpack.c.b16 %v999, %v997
      %v1074 = vpack.c.b16 %v1002, %v1000
      %v1075 = vpack.c.b16 %v1003, %v1001
      %v1076 = vpack.c.b16 %v1006, %v1004
      %v1077 = vpack.c.b16 %v1007, %v1005
      %v1078 = vpack.c.b16 %v1010, %v1008
      %v1079 = vpack.c.b16 %v1011, %v1009
      %v1080 = vpack.c.b16 %v1014, %v1012
      %v1081 = vpack.c.b16 %v1015, %v1013
      %1148 = vmatprep.subr.bf16.mxu0 %v1031
      %1149 = vmatpush1.bf16.msra.mxu0 %v1030
      %1150 = vmatprep.subr.bf16.mxu0 %v1029
      %1151 = vmatpush1.bf16.msra.mxu0 %v1028
      %1152 = vmatprep.subr.bf16.mxu0 %v1027
      %1153 = vmatpush1.bf16.msra.mxu0 %v1026
      %1154 = vmatprep.subr.bf16.mxu0 %v1025
      %1155 = vmatpush1.bf16.msra.mxu0 %v1024
      %1156 = vmatprep.subr.bf16.mxu0 %v1023
      %1157 = vmatpush1.bf16.msra.mxu0 %v1022
      %1158 = vmatprep.subr.bf16.mxu0 %v1021
      %1159 = vmatpush1.bf16.msra.mxu0 %v1020
      %1160 = vmatprep.subr.bf16.mxu0 %v1019
      %1161 = vmatpush1.bf16.msra.mxu0 %v1018
      %1162 = vmatprep.subr.bf16.mxu0 %v1017
      %1163 = vmatpush1.bf16.msra.mxu0 %v1016
      %1164 = vmatprep.subr.bf16.mxu0 %v1047
      %1165 = vmatpush2.bf16.msra.mxu0 %v1046
      %1166 = vmatprep.subr.bf16.mxu0 %v1045
      %1167 = vmatpush2.bf16.msra.mxu0 %v1044
      %1168 = vmatprep.subr.bf16.mxu0 %v1043
      %1169 = vmatpush2.bf16.msra.mxu0 %v1042
      %1170 = vmatprep.subr.bf16.mxu0 %v1041
      %1171 = vmatpush2.bf16.msra.mxu0 %v1040
      %1172 = vmatprep.subr.bf16.mxu0 %v1039
      %1173 = vmatpush2.bf16.msra.mxu0 %v1038
      %1174 = vmatprep.subr.bf16.mxu0 %v1037
      %1175 = vmatpush2.bf16.msra.mxu0 %v1036
      %1176 = vmatprep.subr.bf16.mxu0 %v1035
      %1177 = vmatpush2.bf16.msra.mxu0 %v1034
      %1178 = vmatprep.subr.bf16.mxu0 %v1033
      %1179 = vmatpush2.bf16.msra.mxu0 %v1032
      %1180 = vmatprep.mubr.bf16.mxu0 %v271
      %1181 = vmatmul.mubr.bf16.gmra.mxu0 %v263
      %v1182 = vpop.f32.mrf.mxu0
      %v1183 = vadd.f32 %v252, %v1182
      %v1184 = vpop.f32.mrf.mxu0
      %v1185 = vadd.f32 %v252, %v1184
      %v1186 = vpop.f32.mrf.mxu0
      %v1187 = vpop.f32.mrf.mxu0
      %1188 = vdwg.mxu0
      %1189 = vmatprep.subr.bf16.mxu0 %v1063
      %1190 = vmatpush1.bf16.msra.mxu0 %v1062
      %1191 = vmatprep.subr.bf16.mxu0 %v1061
      %1192 = vmatpush1.bf16.msra.mxu0 %v1060
      %1193 = vmatprep.subr.bf16.mxu0 %v1059
      %1194 = vmatpush1.bf16.msra.mxu0 %v1058
      %1195 = vmatprep.subr.bf16.mxu0 %v1057
      %1196 = vmatpush1.bf16.msra.mxu0 %v1056
      %1197 = vmatprep.subr.bf16.mxu0 %v1055
      %1198 = vmatpush1.bf16.msra.mxu0 %v1054
      %1199 = vmatprep.subr.bf16.mxu0 %v1053
      %1200 = vmatpush1.bf16.msra.mxu0 %v1052
      %1201 = vmatprep.subr.bf16.mxu0 %v1051
      %1202 = vmatpush1.bf16.msra.mxu0 %v1050
      %1203 = vmatprep.subr.bf16.mxu0 %v1049
      %1204 = vmatpush1.bf16.msra.mxu0 %v1048
      %1205 = vmatprep.subr.bf16.mxu0 %v1079
      %1206 = vmatpush2.bf16.msra.mxu0 %v1078
      %1207 = vmatprep.subr.bf16.mxu0 %v1077
      %1208 = vmatpush2.bf16.msra.mxu0 %v1076
      %1209 = vmatprep.subr.bf16.mxu0 %v1075
      %1210 = vmatpush2.bf16.msra.mxu0 %v1074
      %1211 = vmatprep.subr.bf16.mxu0 %v1073
      %1212 = vmatpush2.bf16.msra.mxu0 %v1072
      %1213 = vmatprep.subr.bf16.mxu0 %v1071
      %1214 = vmatpush2.bf16.msra.mxu0 %v1070
      %1215 = vmatprep.subr.bf16.mxu0 %v1069
      %1216 = vmatpush2.bf16.msra.mxu0 %v1068
      %1217 = vmatprep.subr.bf16.mxu0 %v1067
      %1218 = vmatpush2.bf16.msra.mxu0 %v1066
      %1219 = vmatprep.subr.bf16.mxu0 %v1065
      %1220 = vmatpush2.bf16.msra.mxu0 %v1064
      %1221 = vmatprep.mubr.bf16.mxu0 %v272
      %1222 = vmatmul.mubr.bf16.gmra.mxu0 %v270
      %v1223 = vpop.f32.mrf.mxu0
      %v1224 = vadd.f32 %v1183, %v1223
      %v1225 = vpop.f32.mrf.mxu0
      %v1226 = vadd.f32 %v1185, %v1225
      %v1227 = vpop.f32.mrf.mxu0
      %v1228 = vpop.f32.mrf.mxu0
      %1229 = vdwg.mxu0
      %1230 = vmatprep.subr.bf16.mxu0 0
      %1231 = vmatpush1.bf16.msra.mxu0 0
      %1232 = vmatprep.subr.bf16.mxu0 0
      %1233 = vmatpush1.bf16.msra.mxu0 0
      %1234 = vmatprep.subr.bf16.mxu0 0
      %1235 = vmatpush1.bf16.msra.mxu0 0
      %1236 = vmatprep.subr.bf16.mxu0 0
      %1237 = vmatpush1.bf16.msra.mxu0 0
      %1238 = vmatprep.subr.bf16.mxu0 0
      %1239 = vmatpush1.bf16.msra.mxu0 0
      %1240 = vmatprep.subr.bf16.mxu0 0
      %1241 = vmatpush1.bf16.msra.mxu0 0
      %1242 = vmatprep.subr.bf16.mxu0 0
      %1243 = vmatpush1.bf16.msra.mxu0 0
      %1244 = vmatprep.subr.bf16.mxu0 %v1081
      %1245 = vmatpush1.bf16.msra.mxu0 %v1080
      %1246 = vmatprep.subr.bf16.mxu0 0
      %1247 = vmatpush2.bf16.msra.mxu0 0
      %1248 = vmatprep.subr.bf16.mxu0 0
      %1249 = vmatpush2.bf16.msra.mxu0 0
      %1250 = vmatprep.subr.bf16.mxu0 0
      %1251 = vmatpush2.bf16.msra.mxu0 0
      %1252 = vmatprep.subr.bf16.mxu0 0
      %1253 = vmatpush2.bf16.msra.mxu0 0
      %1254 = vmatprep.subr.bf16.mxu0 0
      %1255 = vmatpush2.bf16.msra.mxu0 0
      %1256 = vmatprep.subr.bf16.mxu0 0
      %1257 = vmatpush2.bf16.msra.mxu0 0
      %1258 = vmatprep.subr.bf16.mxu0 0
      %1259 = vmatpush2.bf16.msra.mxu0 0
      %1260 = vmatprep.subr.bf16.mxu0 0
      %1261 = vmatpush2.bf16.msra.mxu0 0
      %1262 = vmatprep.mubr.bf16.mxu0 0
      %1263 = vmatmul.mubr.bf16.gmra.mxu0 %v616
      %v1264 = vpop.f32.mrf.mxu0
      %v1265 = vadd.f32 %v1224, %v1264
      %v1266 = vpop.f32.mrf.mxu0
      %v1267 = vadd.f32 %v1226, %v1266
      %v1268 = vpop.f32.mrf.mxu0
      %v1269 = vpop.f32.mrf.mxu0
      %1270 = vdwg.mxu0
      %v1271 = vmax.f32 %v1265, 0.0
      %v1272 = vmax.f32 %v1267, 0.0
      %v1275 = vcombine.low %v1271, %v1272
      %s1277 = scalar_lea.vmem %s177, 8
      %1278 = vst.msk [vmem:[%s1277] sm:$0xff] %vm749, %v1275
      %s1279 = smul.u32 2, %s14
      %p1280 = scmp.lt.s32.totalorder %s1279, 3
      %s1281 = scalar_select %p1280, %s1279, 3
      %s1282 = smul.addr %s1281, 2
      %s1283 = smul.addr %s1282, 4
      %s1284 = scalar_lea.vmem %s3, %s1283
      // Predicated region
      $region33: #{naive_fov_prediction_forward.2} parent=31 // pred_check
        %p1285 = pneg %p100
      $region34: #{naive_fov_prediction_forward.2} parent=31 // pred_check_branch
        %1287 = sbr.rel (%p1285) target = $region36
      $region35: #{naive_fov_prediction_forward.2} parent=31 // pred_region
        %s1288 = smul.u32 2, %s14
      $region36: #{naive_fov_prediction_forward.2} parent=31 // pred_fallthru
        _
    $region32: #{naive_fov_prediction_forward.2} parent=5 // pred_fallthru
      _
    %p1289 = scmp.le.s32.totalorder 2, %s9
    // Predicated region
    $region37: #{naive_fov_prediction_forward.2} parent=5 // pred_check
      %p1290 = pneg %p1289
    $region38: #{naive_fov_prediction_forward.2} parent=5 // pred_check_branch
      %1292 = sbr.rel (%p1290) target = $region40
    $region39: #{naive_fov_prediction_forward.2} parent=5 // pred_region
      %s1293 = ssub.s32 %s9, 2
      // Predicated region
      $region41: #{naive_fov_prediction_forward.2} parent=39 // pred_check
        %p1294 = pneg %p106
      $region42: #{naive_fov_prediction_forward.2} parent=39 // pred_check_branch
        %1296 = sbr.rel (%p1294) target = $region44
      $region43: #{naive_fov_prediction_forward.2} parent=39 // pred_region
        %s1297 = smul.u32 2, %s15
        %p1298 = scmp.lt.s32.totalorder %s1297, 3
        %s1299 = scalar_select %p1298, %s1297, 3
        %s1300 = smul.addr %s1299, 2
        %s1301 = smul.addr %s1300, 4
        %s1302 = scalar_lea.vmem %s3, %s1301
      $region44: #{naive_fov_prediction_forward.2} parent=39 // pred_fallthru
        _
    $region40: #{naive_fov_prediction_forward.2} parent=5 // pred_fallthru
      _
  $region6: #{naive_fov_prediction_forward.2} parent=0 // loop_footer
    %s13 = sadd.s32 1, %s9
  $region7: #{naive_fov_prediction_forward.2} parent=0 // loop_footer_branch
    %8 = sbr.rel target = $region3
  $region8: #{naive_fov_prediction_forward.2} parent=0 // loop_exit
    _

</llo_original>
